<compile_context>
chip_gen: v7x
topology: tpu7x:2x2x1
jax: 0.10.0
libtpu: 0.0.40
codegen_flags: <defaults>
</compile_context>

<pallas_src>
import jax
import jax.numpy as jnp
from jax.experimental import pallas as pl
from jax.experimental.pallas import tpu as pltpu


# ----------------------------- Pallas kernel --------------------------------
def sent_att_doc_kernel(
    emb_ref,       # [S, Bb, H]   bf16 sentence embeddings (time-major)
    wif_ref,       # [H, 3Hh]     bf16 fwd GRU input weights (r|z|n)
    bif_ref,       # [1, 3Hh]     f32
    wib_ref,       # [H, 3Hh]     bf16 bwd GRU input weights
    bib_ref,       # [1, 3Hh]     f32
    whf_ref,       # [Hh, 3Hh]    bf16 fwd GRU hidden weights
    bhf_ref,       # [1, 3Hh]     f32
    whb_ref,       # [Hh, 3Hh]    bf16 bwd GRU hidden weights
    bhb_ref,       # [1, 3Hh]     f32
    wattf_ref,     # [6, Hh, H]   bf16 per-head attention W^T, fwd-half rows
    wattb_ref,     # [6, Hh, H]   bf16 per-head attention W^T, bwd-half rows
    batt_ref,      # [6, 1, H]    f32
    v_ref,         # [6, 1, H]    f32 per-head score vectors (v0 | q1..q5)
    wdf_ref,       # [Hh, C]      bf16 document_fc weight, fwd-half rows
    wdb_ref,       # [Hh, C]      bf16 document_fc weight, bwd-half rows
    bd_ref,        # [1, C]       f32
    out_ref,       # [Bb, C]      f32
    gif_scratch,   # VMEM [S, Bb, 3Hh] f32  fwd GRU input projections
    gib_scratch,   # VMEM [S, Bb, 3Hh] f32  bwd GRU input projections
    ff_scratch,    # VMEM [S, Bb, Hh]  bf16 fwd GRU outputs
    fb_scratch,    # VMEM [S, Bb, Hh]  bf16 bwd GRU outputs
):
    S, B, H = emb_ref.shape
    Hh = whf_ref.shape[0]
    G3 = 3 * Hh

    def dotf(a, b):
        return jnp.dot(a, b, preferred_element_type=jnp.float32)

    # --- 1. All GRU input projections hoisted out of the recurrence ---------
    #        (one matmul per direction, results streamed to VMEM scratch).
    emb = emb_ref[...].reshape(S * B, H)                                 # bf16
    gif_scratch[...] = (dotf(emb, wif_ref[...]) + bif_ref[...]).reshape(S, B, G3)
    gib_scratch[...] = (dotf(emb, wib_ref[...]) + bib_ref[...]).reshape(S, B, G3)

    whf = whf_ref[...]
    whb = whb_ref[...]
    bhf = bhf_ref[...]
    bhb = bhb_ref[...]

    # --- 2. Interleaved fwd/bwd recurrence ----------------------------------
    # Two small independent per-direction hidden matmuls per step (overlap in
    # the MXU pipeline); carries stay f32, MXU operands bf16, no concat on the
    # critical path; per-step gi slices reloaded from VMEM scratch.
    # TODO(synk): for large S switch to lax.fori_loop(..., unroll=k) with
    # dynamic scratch indexing to bound live ranges; S is small here.
    h_f = jnp.zeros((B, Hh), jnp.float32)
    h_b = jnp.zeros((B, Hh), jnp.float32)
    for step in range(S):
        tf = step
        tb = S - 1 - step
        gh_f = dotf(h_f.astype(jnp.bfloat16), whf) + bhf                # [B, 3Hh]
        gh_b = dotf(h_b.astype(jnp.bfloat16), whb) + bhb
        gi_f = gif_scratch[tf]                                          # [B, 3Hh]
        gi_b = gib_scratch[tb]

        r_f = jax.nn.sigmoid(gi_f[:, 0:Hh] + gh_f[:, 0:Hh])
        z_f = jax.nn.sigmoid(gi_f[:, Hh:2 * Hh] + gh_f[:, Hh:2 * Hh])
        n_f = jnp.tanh(gi_f[:, 2 * Hh:G3] + r_f * gh_f[:, 2 * Hh:G3])
        h_f = (1.0 - z_f) * n_f + z_f * h_f

        r_b = jax.nn.sigmoid(gi_b[:, 0:Hh] + gh_b[:, 0:Hh])
        z_b = jax.nn.sigmoid(gi_b[:, Hh:2 * Hh] + gh_b[:, Hh:2 * Hh])
        n_b = jnp.tanh(gi_b[:, 2 * Hh:G3] + r_b * gh_b[:, 2 * Hh:G3])
        h_b = (1.0 - z_b) * n_b + z_b * h_b

        ff_scratch[tf] = h_f.astype(jnp.bfloat16)                       # full-width stores
        fb_scratch[tb] = h_b.astype(jnp.bfloat16)

    # --- 3. Attention, tiled per head ----------------------------------------
    # Per head: two matmuls (fwd/bwd row halves), tanh, VPU multiply with the
    # head's score vector, lane reduction, softmax over S. Live set is bounded
    # by one [S*B, H] tile; no sel matmul, no [S*B, 6H] intermediate.
    ff = ff_scratch[...].reshape(S * B, Hh)                             # bf16
    fb = fb_scratch[...].reshape(S * B, Hh)

    alpha_sum = jnp.zeros((S, B, 1), jnp.float32)
    for k in range(6):
        u = jnp.tanh(dotf(ff, wattf_ref[k]) + dotf(fb, wattb_ref[k]) + batt_ref[k])
        s_k = jnp.sum(u * v_ref[k], axis=-1, keepdims=True)             # [S*B, 1]
        s_k = s_k.reshape(S, B, 1)
        m = jnp.max(s_k, axis=0, keepdims=True)
        e = jnp.exp(s_k - m)
        denom = jnp.sum(e, axis=0, keepdims=True)
        alpha_sum = alpha_sum + e * pl.reciprocal(denom, approx=True)   # softmax over S
    alpha_mean = alpha_sum * (1.0 / 6.0)                                # [S, B, 1]

    # --- 4. Attention pooling + document FC (per-direction halves) -----------
    doc_f = jnp.sum(alpha_mean * ff_scratch[...].astype(jnp.float32), axis=0)  # [B, Hh]
    doc_b = jnp.sum(alpha_mean * fb_scratch[...].astype(jnp.float32), axis=0)
    logits = (dotf(doc_f.astype(jnp.bfloat16), wdf_ref[...])
              + dotf(doc_b.astype(jnp.bfloat16), wdb_ref[...])
              + bd_ref[...])                                            # [B, C]
    out_ref[...] = logits.astype(out_ref.dtype)


# --------------------- host-side fused-weight preparation --------------------
def prepare_fused_weights(params):
    """Pre-transpose / split weights into the fused kernel layout (bf16 for MXU
    operands, f32 biases). Pure layout plumbing; run ONCE at model init, hoisted
    out of the per-call forward path."""
    Hh = params["w_hh_f"].shape[1]
    H = 2 * Hh
    bf16, f32 = jnp.bfloat16, jnp.float32

    wi_f = jnp.concatenate([params["w_ih_f"][g].T for g in range(3)], axis=1)   # [H, 3Hh]
    wi_b = jnp.concatenate([params["w_ih_b"][g].T for g in range(3)], axis=1)
    wh_f = jnp.concatenate([params["w_hh_f"][g].T for g in range(3)], axis=1)   # [Hh, 3Hh]
    wh_b = jnp.concatenate([params["w_hh_b"][g].T for g in range(3)], axis=1)

    watt_t = [params["w_att"][k].T for k in range(6)]                           # [H, H] each
    watt_f = jnp.stack([w[0:Hh, :] for w in watt_t], axis=0)                    # [6, Hh, H]
    watt_b = jnp.stack([w[Hh:H, :] for w in watt_t], axis=0)

    wd_t = params["w_doc"].T                                                    # [H, C]

    return {
        "wi_f": wi_f.astype(bf16), "bi_f": params["b_ih_f"].reshape(1, 3 * Hh).astype(f32),
        "wi_b": wi_b.astype(bf16), "bi_b": params["b_ih_b"].reshape(1, 3 * Hh).astype(f32),
        "wh_f": wh_f.astype(bf16), "bh_f": params["b_hh_f"].reshape(1, 3 * Hh).astype(f32),
        "wh_b": wh_b.astype(bf16), "bh_b": params["b_hh_b"].reshape(1, 3 * Hh).astype(f32),
        "watt_f": watt_f.astype(bf16), "watt_b": watt_b.astype(bf16),
        "batt": params["b_att"].astype(f32),                                    # [6, 1, H]
        "wd_f": wd_t[0:Hh, :].astype(bf16), "wd_b": wd_t[Hh:H, :].astype(bf16),
        "bd": params["b_doc"].astype(f32),                                      # [1, C]
    }


def sent_att_doc(sent_emb_tm, query_emb, fused_w, v0, num_classes):
    """sent_emb_tm: [S, B, H] time-major sentence embeddings."""
    S, B, H = sent_emb_tm.shape
    Hh = H // 2
    f32 = jnp.float32

    # Per-call score vectors: head 0 = learned v0, heads 1..5 = query embeddings.
    v_stack = jnp.concatenate(
        [v0.reshape(1, H).astype(f32), query_emb.astype(f32)], axis=0
    ).reshape(6, 1, H)

    emb = sent_emb_tm.astype(jnp.bfloat16)

    # Batch-block grid axis: megacore-parallel on v7x (collapses to grid=(1,)
    # at the demo batch size). Blocks are kept sublane-aligned when possible.
    Bb = 8 if (B > 8 and B % 8 == 0) else B
    grid = (B // Bb,)

    def full(arr):
        shape = arr.shape
        return pl.BlockSpec(shape, lambda g, _s=len(shape): (0,) * _s)

    args = (emb,
            fused_w["wi_f"], fused_w["bi_f"], fused_w["wi_b"], fused_w["bi_b"],
            fused_w["wh_f"], fused_w["bh_f"], fused_w["wh_b"], fused_w["bh_b"],
            fused_w["watt_f"], fused_w["watt_b"], fused_w["batt"], v_stack,
            fused_w["wd_f"], fused_w["wd_b"], fused_w["bd"])

    in_specs = [pl.BlockSpec((S, Bb, H), lambda g: (0, g, 0))] + [full(a) for a in args[1:]]

    return pl.pallas_call(
        sent_att_doc_kernel,
        out_shape=jax.ShapeDtypeStruct((B, num_classes), jnp.float32),
        grid=grid,
        in_specs=in_specs,
        out_specs=pl.BlockSpec((Bb, num_classes), lambda g: (g, 0)),
        scratch_shapes=[
            pltpu.VMEM((S, Bb, 3 * Hh), jnp.float32),
            pltpu.VMEM((S, Bb, 3 * Hh), jnp.float32),
            pltpu.VMEM((S, Bb, Hh), jnp.bfloat16),
            pltpu.VMEM((S, Bb, Hh), jnp.bfloat16),
        ],
        compiler_params=pltpu.CompilerParams(
            dimension_semantics=("parallel",),
            vmem_limit_bytes=64 * 1024 * 1024,
        ),
    )(*args)


# ------------------------------ plain-JAX glue -------------------------------
def fake_bert_encode(tok_table, ids, mask):
    """Deterministic stand-in for the frozen pretrained BERT: embedding lookup
    followed by masked mean pooling over the token axis -> [CLS]-style vector."""
    e = tok_table[ids]                                  # [..., L, H]
    m = mask[..., None].astype(jnp.float32)
    return (e * m).sum(-2) / jnp.maximum(m.sum(-2), 1.0)


def init_params(key, H, Hh, C):
    ks = jax.random.split(key, 16)
    scale = 0.1
    return {
        "w_ih_f": scale * jax.random.normal(ks[0], (3, Hh, H), jnp.float32),
        "w_hh_f": scale * jax.random.normal(ks[1], (3, Hh, Hh), jnp.float32),
        "b_ih_f": scale * jax.random.normal(ks[2], (3, 1, Hh), jnp.float32),
        "b_hh_f": scale * jax.random.normal(ks[3], (3, 1, Hh), jnp.float32),
        "w_ih_b": scale * jax.random.normal(ks[4], (3, Hh, H), jnp.float32),
        "w_hh_b": scale * jax.random.normal(ks[5], (3, Hh, Hh), jnp.float32),
        "b_ih_b": scale * jax.random.normal(ks[6], (3, 1, Hh), jnp.float32),
        "b_hh_b": scale * jax.random.normal(ks[7], (3, 1, Hh), jnp.float32),
        "w_att": scale * jax.random.normal(ks[8], (6, H, H), jnp.float32),
        "b_att": scale * jax.random.normal(ks[9], (6, 1, H), jnp.float32),
        "v0":    scale * jax.random.normal(ks[10], (H, 1), jnp.float32),
        "w_doc": scale * jax.random.normal(ks[11], (C, H), jnp.float32),
        "b_doc": scale * jax.random.normal(ks[12], (1, C), jnp.float32),
    }


def model_forward(x, mask, query_ids, query_mask, tok_table, params, fused_w, num_classes):
    # BERT stage (plain JAX glue; see TODO(synk) at top of file). Sentences are
    # encoded time-major directly so the kernel input needs no extra
    # [B,S,H] -> [S,B,H] HBM transpose of the embedding tensor.
    x_tm = jnp.transpose(x, (1, 0, 2))                               # [S, B, L] (int ids)
    m_tm = jnp.transpose(mask, (1, 0, 2))
    sent_emb_tm = fake_bert_encode(tok_table, x_tm, m_tm)            # [S, B, H]
    query_emb = fake_bert_encode(tok_table, query_ids, query_mask)   # [5, H]
    # Hot path: GRU + attention + pooling + document_fc, all inside Pallas.
    return sent_att_doc(sent_emb_tm, query_emb, fused_w, params["v0"], num_classes)


# ------------------------- pure-JAX reference (check) -------------------------
def reference_forward(sent_emb, query_emb, params):
    B, S, H = sent_emb.shape
    Hh = H // 2

    def gru_dir(wi, wh, bi, bh, reverse):
        h = jnp.zeros((B, Hh), jnp.float32)
        outs = [None] * S
        ts = range(S - 1, -1, -1) if reverse else range(S)
        for t in ts:
            x = sent_emb[:, t, :]
            r = jax.nn.sigmoid(x @ wi[0].T + bi[0] + h @ wh[0].T + bh[0])
            z = jax.nn.sigmoid(x @ wi[1].T + bi[1] + h @ wh[1].T + bh[1])
            n = jnp.tanh(x @ wi[2].T + bi[2] + r * (h @ wh[2].T + bh[2]))
            h = (1.0 - z) * n + z * h
            outs[t] = h
        return jnp.stack(outs, axis=1)

    f_fwd = gru_dir(params["w_ih_f"], params["w_hh_f"],
                    params["b_ih_f"], params["b_hh_f"], False)
    f_bwd = gru_dir(params["w_ih_b"], params["w_hh_b"],
                    params["b_ih_b"], params["b_hh_b"], True)
    f = jnp.concatenate([f_fwd, f_bwd], axis=-1)                    # [B, S, H]

    u0 = jnp.tanh(f @ params["w_att"][0].T + params["b_att"][0])
    s0 = (u0 @ params["v0"])[..., 0]
    alpha_sum = jax.nn.softmax(s0, axis=1)
    for k in range(1, 6):
        uk = jnp.tanh(f @ params["w_att"][k].T + params["b_att"][k])
        sk = jnp.sum(uk * query_emb[k - 1], axis=-1)
        alpha_sum = alpha_sum + jax.nn.softmax(sk, axis=1)
    alpha_mean = alpha_sum / 6.0
    doc = jnp.sum(alpha_mean[:, :, None] * f, axis=1)
    return doc @ params["w_doc"].T + params["b_doc"]


# ---------------------------------- main -------------------------------------
if __name__ == "__main__":
    B, S, L, H, C = 2, 8, 16, 32, 4     # batch, sentences, tokens, hidden, classes
    Hh = H // 2                         # GRU hidden (bidirectional -> 2*Hh = H)
    V, Lq = 100, 6                      # vocab size, query length

    key = jax.random.PRNGKey(0)
    k_tok, k_x, k_q, k_p = jax.random.split(key, 4)

    tok_table = 0.1 * jax.random.normal(k_tok, (V, H), jnp.float32)
    x = jax.random.randint(k_x, (B, S, L), 0, V, jnp.int32)
    mask = jnp.ones((B, S, L), jnp.int32)
    query_ids = jax.random.randint(k_q, (5, Lq), 0, V, jnp.int32)
    query_mask = jnp.ones((5, Lq), jnp.int32)

    params = init_params(k_p, H, Hh, C)
    fused_w = prepare_fused_weights(params)     # hoisted: computed once at init

    out = model_forward(x, mask, query_ids, query_mask, tok_table, params, fused_w, C)
    out = jax.block_until_ready(out)
    assert out.shape == (B, C)
    assert bool(jnp.all(jnp.isfinite(out)))

    # Sanity check vs. pure-JAX f32 reference (tolerances account for bf16 MXU
    # operands and the approx reciprocal in the softmax).
    sent_emb = fake_bert_encode(tok_table, x, mask)                 # [B, S, H]
    query_emb = fake_bert_encode(tok_table, query_ids, query_mask)  # [5, H]
    ref = reference_forward(sent_emb, query_emb, params)
    assert bool(jnp.allclose(out, ref, rtol=3e-2, atol=5e-3))

    print("KERNEL_OK")
</pallas_src>

<mosaic_0001>
module attributes {stable_mosaic.version = 11 : i64} {
  func.func @sent_att_doc_kernel(%arg0: i32, %arg1: memref<8x2x32xbf16, #tpu.memory_space<vmem>>, %arg2: memref<32x48xbf16, #tpu.memory_space<vmem>>, %arg3: memref<1x48xf32, #tpu.memory_space<vmem>>, %arg4: memref<32x48xbf16, #tpu.memory_space<vmem>>, %arg5: memref<1x48xf32, #tpu.memory_space<vmem>>, %arg6: memref<16x48xbf16, #tpu.memory_space<vmem>>, %arg7: memref<1x48xf32, #tpu.memory_space<vmem>>, %arg8: memref<16x48xbf16, #tpu.memory_space<vmem>>, %arg9: memref<1x48xf32, #tpu.memory_space<vmem>>, %arg10: memref<6x16x32xbf16, #tpu.memory_space<vmem>>, %arg11: memref<6x16x32xbf16, #tpu.memory_space<vmem>>, %arg12: memref<6x1x32xf32, #tpu.memory_space<vmem>>, %arg13: memref<6x1x32xf32, #tpu.memory_space<vmem>>, %arg14: memref<16x4xbf16, #tpu.memory_space<vmem>>, %arg15: memref<16x4xbf16, #tpu.memory_space<vmem>>, %arg16: memref<1x4xf32, #tpu.memory_space<vmem>>, %arg17: memref<2x4xf32, #tpu.memory_space<vmem>>, %arg18: memref<8x2x48xf32, #tpu.memory_space<vmem>>, %arg19: memref<8x2x48xf32, #tpu.memory_space<vmem>>, %arg20: memref<8x2x16xbf16, #tpu.memory_space<vmem>>, %arg21: memref<8x2x16xbf16, #tpu.memory_space<vmem>>) attributes {dimension_semantics = [#tpu.dimension_semantics<parallel>], iteration_bounds = array<i64: 1>, scalar_prefetch = 0 : i64, scratch_operands = 4 : i64, tpu.core_type = #tpu.core_type<tc>, window_params = [{transform_indices = @transform_0, window_bounds = array<i64: 8, 2, 32>}, {pipeline_mode = #tpu.pipeline_mode<synchronous>, transform_indices = @transform_1, window_bounds = array<i64: 32, 48>}, {pipeline_mode = #tpu.pipeline_mode<synchronous>, transform_indices = @transform_2, window_bounds = array<i64: 1, 48>}, {pipeline_mode = #tpu.pipeline_mode<synchronous>, transform_indices = @transform_3, window_bounds = array<i64: 32, 48>}, {pipeline_mode = #tpu.pipeline_mode<synchronous>, transform_indices = @transform_4, window_bounds = array<i64: 1, 48>}, {pipeline_mode = #tpu.pipeline_mode<synchronous>, transform_indices = @transform_5, window_bounds = array<i64: 16, 48>}, {pipeline_mode = #tpu.pipeline_mode<synchronous>, transform_indices = @transform_6, window_bounds = array<i64: 1, 48>}, {pipeline_mode = #tpu.pipeline_mode<synchronous>, transform_indices = @transform_7, window_bounds = array<i64: 16, 48>}, {pipeline_mode = #tpu.pipeline_mode<synchronous>, transform_indices = @transform_8, window_bounds = array<i64: 1, 48>}, {pipeline_mode = #tpu.pipeline_mode<synchronous>, transform_indices = @transform_9, window_bounds = array<i64: 6, 16, 32>}, {pipeline_mode = #tpu.pipeline_mode<synchronous>, transform_indices = @transform_10, window_bounds = array<i64: 6, 16, 32>}, {pipeline_mode = #tpu.pipeline_mode<synchronous>, transform_indices = @transform_11, window_bounds = array<i64: 6, 1, 32>}, {pipeline_mode = #tpu.pipeline_mode<synchronous>, transform_indices = @transform_12, window_bounds = array<i64: 6, 1, 32>}, {pipeline_mode = #tpu.pipeline_mode<synchronous>, transform_indices = @transform_13, window_bounds = array<i64: 16, 4>}, {pipeline_mode = #tpu.pipeline_mode<synchronous>, transform_indices = @transform_14, window_bounds = array<i64: 16, 4>}, {pipeline_mode = #tpu.pipeline_mode<synchronous>, transform_indices = @transform_15, window_bounds = array<i64: 1, 4>}, {transform_indices = @transform_16, window_bounds = array<i64: 2, 4>}]} {
    %c0 = arith.constant 0 : index
    %c0_0 = arith.constant 0 : index
    %c0_1 = arith.constant 0 : index
    %0 = vector.load %arg1[%c0, %c0_0, %c0_1] : memref<8x2x32xbf16, #tpu.memory_space<vmem>>, vector<8x2x32xbf16>
    %1 = vector.shape_cast %0 : vector<8x2x32xbf16> to vector<16x32xbf16>
    %c0_2 = arith.constant 0 : index
    %c0_3 = arith.constant 0 : index
    %2 = vector.load %arg2[%c0_2, %c0_3] : memref<32x48xbf16, #tpu.memory_space<vmem>>, vector<32x48xbf16>
    %cst = arith.constant dense<0.000000e+00> : vector<16x48xf32>
    %3 = tpu.matmul %1, %2, %cst {dimension_numbers = #tpu.dot_dimension_numbers<[1], [0], [0], [1], [0, 0, 1, 1], [], []>} : vector<16x32xbf16>, vector<32x48xbf16>, vector<16x48xf32> -> vector<16x48xf32>
    %c0_4 = arith.constant 0 : index
    %c0_5 = arith.constant 0 : index
    %4 = vector.load %arg3[%c0_4, %c0_5] : memref<1x48xf32, #tpu.memory_space<vmem>>, vector<1x48xf32>
    %5 = vector.broadcast %4 : vector<1x48xf32> to vector<16x48xf32>
    %6 = arith.addf %3, %5 : vector<16x48xf32>
    %7 = vector.shape_cast %6 : vector<16x48xf32> to vector<8x2x48xf32>
    %c0_6 = arith.constant 0 : index
    %c0_7 = arith.constant 0 : index
    %c0_8 = arith.constant 0 : index
    %8 = vector.load %arg18[%c0_6, %c0_7, %c0_8] : memref<8x2x48xf32, #tpu.memory_space<vmem>>, vector<8x2x48xf32>
    tpu.vector_store %arg18[%c0_6, %c0_7, %c0_8], %7 {strides = array<i32>} : memref<8x2x48xf32, #tpu.memory_space<vmem>>, vector<8x2x48xf32>,
    %c0_9 = arith.constant 0 : index
    %c0_10 = arith.constant 0 : index
    %9 = vector.load %arg4[%c0_9, %c0_10] : memref<32x48xbf16, #tpu.memory_space<vmem>>, vector<32x48xbf16>
    %cst_11 = arith.constant dense<0.000000e+00> : vector<16x48xf32>
    %10 = tpu.matmul %1, %9, %cst_11 {dimension_numbers = #tpu.dot_dimension_numbers<[1], [0], [0], [1], [0, 0, 1, 1], [], []>} : vector<16x32xbf16>, vector<32x48xbf16>, vector<16x48xf32> -> vector<16x48xf32>
    %c0_12 = arith.constant 0 : index
    %c0_13 = arith.constant 0 : index
    %11 = vector.load %arg5[%c0_12, %c0_13] : memref<1x48xf32, #tpu.memory_space<vmem>>, vector<1x48xf32>
    %12 = vector.broadcast %11 : vector<1x48xf32> to vector<16x48xf32>
    %13 = arith.addf %10, %12 : vector<16x48xf32>
    %14 = vector.shape_cast %13 : vector<16x48xf32> to vector<8x2x48xf32>
    %c0_14 = arith.constant 0 : index
    %c0_15 = arith.constant 0 : index
    %c0_16 = arith.constant 0 : index
    %15 = vector.load %arg19[%c0_14, %c0_15, %c0_16] : memref<8x2x48xf32, #tpu.memory_space<vmem>>, vector<8x2x48xf32>
    tpu.vector_store %arg19[%c0_14, %c0_15, %c0_16], %14 {strides = array<i32>} : memref<8x2x48xf32, #tpu.memory_space<vmem>>, vector<8x2x48xf32>,
    %c0_17 = arith.constant 0 : index
    %c0_18 = arith.constant 0 : index
    %16 = vector.load %arg6[%c0_17, %c0_18] : memref<16x48xbf16, #tpu.memory_space<vmem>>, vector<16x48xbf16>
    %c0_19 = arith.constant 0 : index
    %c0_20 = arith.constant 0 : index
    %17 = vector.load %arg8[%c0_19, %c0_20] : memref<16x48xbf16, #tpu.memory_space<vmem>>, vector<16x48xbf16>
    %c0_21 = arith.constant 0 : index
    %c0_22 = arith.constant 0 : index
    %18 = vector.load %arg7[%c0_21, %c0_22] : memref<1x48xf32, #tpu.memory_space<vmem>>, vector<1x48xf32>
    %c0_23 = arith.constant 0 : index
    %c0_24 = arith.constant 0 : index
    %19 = vector.load %arg9[%c0_23, %c0_24] : memref<1x48xf32, #tpu.memory_space<vmem>>, vector<1x48xf32>
    %cst_25 = arith.constant 0.000000e+00 : f32
    %20 = vector.broadcast %cst_25 : f32 to vector<2x16xf32>
    %cst_26 = arith.constant 0.000000e+00 : f32
    %21 = vector.broadcast %cst_26 : f32 to vector<2x16xf32>
    %22 = arith.truncf %20 : vector<2x16xf32> to vector<2x16xbf16>
    %cst_27 = arith.constant dense<0.000000e+00> : vector<2x48xf32>
    %23 = tpu.matmul %22, %16, %cst_27 {dimension_numbers = #tpu.dot_dimension_numbers<[1], [0], [0], [1], [0, 0, 1, 1], [], []>} : vector<2x16xbf16>, vector<16x48xbf16>, vector<2x48xf32> -> vector<2x48xf32>
    %24 = vector.broadcast %18 : vector<1x48xf32> to vector<2x48xf32>
    %25 = arith.addf %23, %24 : vector<2x48xf32>
    %26 = arith.truncf %21 : vector<2x16xf32> to vector<2x16xbf16>
    %cst_28 = arith.constant dense<0.000000e+00> : vector<2x48xf32>
    %27 = tpu.matmul %26, %17, %cst_28 {dimension_numbers = #tpu.dot_dimension_numbers<[1], [0], [0], [1], [0, 0, 1, 1], [], []>} : vector<2x16xbf16>, vector<16x48xbf16>, vector<2x48xf32> -> vector<2x48xf32>
    %28 = vector.broadcast %19 : vector<1x48xf32> to vector<2x48xf32>
    %29 = arith.addf %27, %28 : vector<2x48xf32>
    %c0_29 = arith.constant 0 : index
    %c0_30 = arith.constant 0 : index
    %c0_31 = arith.constant 0 : index
    %30 = vector.load %arg18[%c0_29, %c0_30, %c0_31] : memref<8x2x48xf32, #tpu.memory_space<vmem>>, vector<1x2x48xf32>
    %31 = vector.shape_cast %30 : vector<1x2x48xf32> to vector<2x48xf32>
    %c7 = arith.constant 7 : index
    %c0_32 = arith.constant 0 : index
    %c0_33 = arith.constant 0 : index
    %32 = vector.load %arg19[%c7, %c0_32, %c0_33] : memref<8x2x48xf32, #tpu.memory_space<vmem>>, vector<1x2x48xf32>
    %33 = vector.shape_cast %32 : vector<1x2x48xf32> to vector<2x48xf32>
    %34 = vector.extract_strided_slice %31 {offsets = [0, 0], sizes = [2, 16], strides = [1, 1]} : vector<2x48xf32> to vector<2x16xf32>
    %35 = vector.extract_strided_slice %25 {offsets = [0, 0], sizes = [2, 16], strides = [1, 1]} : vector<2x48xf32> to vector<2x16xf32>
    %36 = arith.addf %34, %35 : vector<2x16xf32>
    %37 = arith.negf %36 : vector<2x16xf32>
    %38 = math.exp %37 : vector<2x16xf32>
    %cst_34 = arith.constant 1.000000e+00 : f32
    %39 = vector.broadcast %cst_34 : f32 to vector<2x16xf32>
    %40 = arith.addf %39, %38 : vector<2x16xf32>
    %41 = arith.divf %39, %40 : vector<2x16xf32>
    %42 = vector.extract_strided_slice %31 {offsets = [0, 16], sizes = [2, 16], strides = [1, 1]} : vector<2x48xf32> to vector<2x16xf32>
    %43 = vector.extract_strided_slice %25 {offsets = [0, 16], sizes = [2, 16], strides = [1, 1]} : vector<2x48xf32> to vector<2x16xf32>
    %44 = arith.addf %42, %43 : vector<2x16xf32>
    %45 = arith.negf %44 : vector<2x16xf32>
    %46 = math.exp %45 : vector<2x16xf32>
    %cst_35 = arith.constant 1.000000e+00 : f32
    %47 = vector.broadcast %cst_35 : f32 to vector<2x16xf32>
    %48 = arith.addf %47, %46 : vector<2x16xf32>
    %49 = arith.divf %47, %48 : vector<2x16xf32>
    %50 = vector.extract_strided_slice %31 {offsets = [0, 32], sizes = [2, 16], strides = [1, 1]} : vector<2x48xf32> to vector<2x16xf32>
    %51 = vector.extract_strided_slice %25 {offsets = [0, 32], sizes = [2, 16], strides = [1, 1]} : vector<2x48xf32> to vector<2x16xf32>
    %52 = arith.mulf %41, %51 : vector<2x16xf32>
    %53 = arith.addf %50, %52 : vector<2x16xf32>
    %54 = math.tanh %53 : vector<2x16xf32>
    %cst_36 = arith.constant 1.000000e+00 : f32
    %55 = vector.broadcast %cst_36 : f32 to vector<2x16xf32>
    %56 = arith.subf %55, %49 : vector<2x16xf32>
    %57 = arith.mulf %56, %54 : vector<2x16xf32>
    %58 = arith.mulf %49, %20 : vector<2x16xf32>
    %59 = arith.addf %57, %58 : vector<2x16xf32>
    %60 = vector.extract_strided_slice %33 {offsets = [0, 0], sizes = [2, 16], strides = [1, 1]} : vector<2x48xf32> to vector<2x16xf32>
    %61 = vector.extract_strided_slice %29 {offsets = [0, 0], sizes = [2, 16], strides = [1, 1]} : vector<2x48xf32> to vector<2x16xf32>
    %62 = arith.addf %60, %61 : vector<2x16xf32>
    %63 = arith.negf %62 : vector<2x16xf32>
    %64 = math.exp %63 : vector<2x16xf32>
    %cst_37 = arith.constant 1.000000e+00 : f32
    %65 = vector.broadcast %cst_37 : f32 to vector<2x16xf32>
    %66 = arith.addf %65, %64 : vector<2x16xf32>
    %67 = arith.divf %65, %66 : vector<2x16xf32>
    %68 = vector.extract_strided_slice %33 {offsets = [0, 16], sizes = [2, 16], strides = [1, 1]} : vector<2x48xf32> to vector<2x16xf32>
    %69 = vector.extract_strided_slice %29 {offsets = [0, 16], sizes = [2, 16], strides = [1, 1]} : vector<2x48xf32> to vector<2x16xf32>
    %70 = arith.addf %68, %69 : vector<2x16xf32>
    %71 = arith.negf %70 : vector<2x16xf32>
    %72 = math.exp %71 : vector<2x16xf32>
    %cst_38 = arith.constant 1.000000e+00 : f32
    %73 = vector.broadcast %cst_38 : f32 to vector<2x16xf32>
    %74 = arith.addf %73, %72 : vector<2x16xf32>
    %75 = arith.divf %73, %74 : vector<2x16xf32>
    %76 = vector.extract_strided_slice %33 {offsets = [0, 32], sizes = [2, 16], strides = [1, 1]} : vector<2x48xf32> to vector<2x16xf32>
    %77 = vector.extract_strided_slice %29 {offsets = [0, 32], sizes = [2, 16], strides = [1, 1]} : vector<2x48xf32> to vector<2x16xf32>
    %78 = arith.mulf %67, %77 : vector<2x16xf32>
    %79 = arith.addf %76, %78 : vector<2x16xf32>
    %80 = math.tanh %79 : vector<2x16xf32>
    %cst_39 = arith.constant 1.000000e+00 : f32
    %81 = vector.broadcast %cst_39 : f32 to vector<2x16xf32>
    %82 = arith.subf %81, %75 : vector<2x16xf32>
    %83 = arith.mulf %82, %80 : vector<2x16xf32>
    %84 = arith.mulf %75, %21 : vector<2x16xf32>
    %85 = arith.addf %83, %84 : vector<2x16xf32>
    %86 = arith.truncf %59 : vector<2x16xf32> to vector<2x16xbf16>
    %c0_40 = arith.constant 0 : index
    %c0_41 = arith.constant 0 : index
    %c0_42 = arith.constant 0 : index
    %87 = vector.load %arg20[%c0_40, %c0_41, %c0_42] : memref<8x2x16xbf16, #tpu.memory_space<vmem>>, vector<1x2x16xbf16>
    %88 = vector.shape_cast %87 : vector<1x2x16xbf16> to vector<2x16xbf16>
    %89 = vector.shape_cast %86 : vector<2x16xbf16> to vector<1x2x16xbf16>
    tpu.vector_store %arg20[%c0_40, %c0_41, %c0_42], %89 {strides = array<i32>} : memref<8x2x16xbf16, #tpu.memory_space<vmem>>, vector<1x2x16xbf16>,
    %90 = arith.truncf %85 : vector<2x16xf32> to vector<2x16xbf16>
    %c7_43 = arith.constant 7 : index
    %c0_44 = arith.constant 0 : index
    %c0_45 = arith.constant 0 : index
    %91 = vector.load %arg21[%c7_43, %c0_44, %c0_45] : memref<8x2x16xbf16, #tpu.memory_space<vmem>>, vector<1x2x16xbf16>
    %92 = vector.shape_cast %91 : vector<1x2x16xbf16> to vector<2x16xbf16>
    %93 = vector.shape_cast %90 : vector<2x16xbf16> to vector<1x2x16xbf16>
    tpu.vector_store %arg21[%c7_43, %c0_44, %c0_45], %93 {strides = array<i32>} : memref<8x2x16xbf16, #tpu.memory_space<vmem>>, vector<1x2x16xbf16>,
    %94 = arith.truncf %59 : vector<2x16xf32> to vector<2x16xbf16>
    %cst_46 = arith.constant dense<0.000000e+00> : vector<2x48xf32>
    %95 = tpu.matmul %94, %16, %cst_46 {dimension_numbers = #tpu.dot_dimension_numbers<[1], [0], [0], [1], [0, 0, 1, 1], [], []>} : vector<2x16xbf16>, vector<16x48xbf16>, vector<2x48xf32> -> vector<2x48xf32>
    %96 = vector.broadcast %18 : vector<1x48xf32> to vector<2x48xf32>
    %97 = arith.addf %95, %96 : vector<2x48xf32>
    %98 = arith.truncf %85 : vector<2x16xf32> to vector<2x16xbf16>
    %cst_47 = arith.constant dense<0.000000e+00> : vector<2x48xf32>
    %99 = tpu.matmul %98, %17, %cst_47 {dimension_numbers = #tpu.dot_dimension_numbers<[1], [0], [0], [1], [0, 0, 1, 1], [], []>} : vector<2x16xbf16>, vector<16x48xbf16>, vector<2x48xf32> -> vector<2x48xf32>
    %100 = vector.broadcast %19 : vector<1x48xf32> to vector<2x48xf32>
    %101 = arith.addf %99, %100 : vector<2x48xf32>
    %c1 = arith.constant 1 : index
    %c0_48 = arith.constant 0 : index
    %c0_49 = arith.constant 0 : index
    %102 = vector.load %arg18[%c1, %c0_48, %c0_49] : memref<8x2x48xf32, #tpu.memory_space<vmem>>, vector<1x2x48xf32>
    %103 = vector.shape_cast %102 : vector<1x2x48xf32> to vector<2x48xf32>
    %c6 = arith.constant 6 : index
    %c0_50 = arith.constant 0 : index
    %c0_51 = arith.constant 0 : index
    %104 = vector.load %arg19[%c6, %c0_50, %c0_51] : memref<8x2x48xf32, #tpu.memory_space<vmem>>, vector<1x2x48xf32>
    %105 = vector.shape_cast %104 : vector<1x2x48xf32> to vector<2x48xf32>
    %106 = vector.extract_strided_slice %103 {offsets = [0, 0], sizes = [2, 16], strides = [1, 1]} : vector<2x48xf32> to vector<2x16xf32>
    %107 = vector.extract_strided_slice %97 {offsets = [0, 0], sizes = [2, 16], strides = [1, 1]} : vector<2x48xf32> to vector<2x16xf32>
    %108 = arith.addf %106, %107 : vector<2x16xf32>
    %109 = arith.negf %108 : vector<2x16xf32>
    %110 = math.exp %109 : vector<2x16xf32>
    %cst_52 = arith.constant 1.000000e+00 : f32
    %111 = vector.broadcast %cst_52 : f32 to vector<2x16xf32>
    %112 = arith.addf %111, %110 : vector<2x16xf32>
    %113 = arith.divf %111, %112 : vector<2x16xf32>
    %114 = vector.extract_strided_slice %103 {offsets = [0, 16], sizes = [2, 16], strides = [1, 1]} : vector<2x48xf32> to vector<2x16xf32>
    %115 = vector.extract_strided_slice %97 {offsets = [0, 16], sizes = [2, 16], strides = [1, 1]} : vector<2x48xf32> to vector<2x16xf32>
    %116 = arith.addf %114, %115 : vector<2x16xf32>
    %117 = arith.negf %116 : vector<2x16xf32>
    %118 = math.exp %117 : vector<2x16xf32>
    %cst_53 = arith.constant 1.000000e+00 : f32
    %119 = vector.broadcast %cst_53 : f32 to vector<2x16xf32>
    %120 = arith.addf %119, %118 : vector<2x16xf32>
    %121 = arith.divf %119, %120 : vector<2x16xf32>
    %122 = vector.extract_strided_slice %103 {offsets = [0, 32], sizes = [2, 16], strides = [1, 1]} : vector<2x48xf32> to vector<2x16xf32>
    %123 = vector.extract_strided_slice %97 {offsets = [0, 32], sizes = [2, 16], strides = [1, 1]} : vector<2x48xf32> to vector<2x16xf32>
    %124 = arith.mulf %113, %123 : vector<2x16xf32>
    %125 = arith.addf %122, %124 : vector<2x16xf32>
    %126 = math.tanh %125 : vector<2x16xf32>
    %cst_54 = arith.constant 1.000000e+00 : f32
    %127 = vector.broadcast %cst_54 : f32 to vector<2x16xf32>
    %128 = arith.subf %127, %121 : vector<2x16xf32>
    %129 = arith.mulf %128, %126 : vector<2x16xf32>
    %130 = arith.mulf %121, %59 : vector<2x16xf32>
    %131 = arith.addf %129, %130 : vector<2x16xf32>
    %132 = vector.extract_strided_slice %105 {offsets = [0, 0], sizes = [2, 16], strides = [1, 1]} : vector<2x48xf32> to vector<2x16xf32>
    %133 = vector.extract_strided_slice %101 {offsets = [0, 0], sizes = [2, 16], strides = [1, 1]} : vector<2x48xf32> to vector<2x16xf32>
    %134 = arith.addf %132, %133 : vector<2x16xf32>
    %135 = arith.negf %134 : vector<2x16xf32>
    %136 = math.exp %135 : vector<2x16xf32>
    %cst_55 = arith.constant 1.000000e+00 : f32
    %137 = vector.broadcast %cst_55 : f32 to vector<2x16xf32>
    %138 = arith.addf %137, %136 : vector<2x16xf32>
    %139 = arith.divf %137, %138 : vector<2x16xf32>
    %140 = vector.extract_strided_slice %105 {offsets = [0, 16], sizes = [2, 16], strides = [1, 1]} : vector<2x48xf32> to vector<2x16xf32>
    %141 = vector.extract_strided_slice %101 {offsets = [0, 16], sizes = [2, 16], strides = [1, 1]} : vector<2x48xf32> to vector<2x16xf32>
    %142 = arith.addf %140, %141 : vector<2x16xf32>
    %143 = arith.negf %142 : vector<2x16xf32>
    %144 = math.exp %143 : vector<2x16xf32>
    %cst_56 = arith.constant 1.000000e+00 : f32
    %145 = vector.broadcast %cst_56 : f32 to vector<2x16xf32>
    %146 = arith.addf %145, %144 : vector<2x16xf32>
    %147 = arith.divf %145, %146 : vector<2x16xf32>
    %148 = vector.extract_strided_slice %105 {offsets = [0, 32], sizes = [2, 16], strides = [1, 1]} : vector<2x48xf32> to vector<2x16xf32>
    %149 = vector.extract_strided_slice %101 {offsets = [0, 32], sizes = [2, 16], strides = [1, 1]} : vector<2x48xf32> to vector<2x16xf32>
    %150 = arith.mulf %139, %149 : vector<2x16xf32>
    %151 = arith.addf %148, %150 : vector<2x16xf32>
    %152 = math.tanh %151 : vector<2x16xf32>
    %cst_57 = arith.constant 1.000000e+00 : f32
    %153 = vector.broadcast %cst_57 : f32 to vector<2x16xf32>
    %154 = arith.subf %153, %147 : vector<2x16xf32>
    %155 = arith.mulf %154, %152 : vector<2x16xf32>
    %156 = arith.mulf %147, %85 : vector<2x16xf32>
    %157 = arith.addf %155, %156 : vector<2x16xf32>
    %158 = arith.truncf %131 : vector<2x16xf32> to vector<2x16xbf16>
    %c1_58 = arith.constant 1 : index
    %c0_59 = arith.constant 0 : index
    %c0_60 = arith.constant 0 : index
    %159 = vector.load %arg20[%c1_58, %c0_59, %c0_60] : memref<8x2x16xbf16, #tpu.memory_space<vmem>>, vector<1x2x16xbf16>
    %160 = vector.shape_cast %159 : vector<1x2x16xbf16> to vector<2x16xbf16>
    %161 = vector.shape_cast %158 : vector<2x16xbf16> to vector<1x2x16xbf16>
    tpu.vector_store %arg20[%c1_58, %c0_59, %c0_60], %161 {strides = array<i32>} : memref<8x2x16xbf16, #tpu.memory_space<vmem>>, vector<1x2x16xbf16>,
    %162 = arith.truncf %157 : vector<2x16xf32> to vector<2x16xbf16>
    %c6_61 = arith.constant 6 : index
    %c0_62 = arith.constant 0 : index
    %c0_63 = arith.constant 0 : index
    %163 = vector.load %arg21[%c6_61, %c0_62, %c0_63] : memref<8x2x16xbf16, #tpu.memory_space<vmem>>, vector<1x2x16xbf16>
    %164 = vector.shape_cast %163 : vector<1x2x16xbf16> to vector<2x16xbf16>
    %165 = vector.shape_cast %162 : vector<2x16xbf16> to vector<1x2x16xbf16>
    tpu.vector_store %arg21[%c6_61, %c0_62, %c0_63], %165 {strides = array<i32>} : memref<8x2x16xbf16, #tpu.memory_space<vmem>>, vector<1x2x16xbf16>,
    %166 = arith.truncf %131 : vector<2x16xf32> to vector<2x16xbf16>
    %cst_64 = arith.constant dense<0.000000e+00> : vector<2x48xf32>
    %167 = tpu.matmul %166, %16, %cst_64 {dimension_numbers = #tpu.dot_dimension_numbers<[1], [0], [0], [1], [0, 0, 1, 1], [], []>} : vector<2x16xbf16>, vector<16x48xbf16>, vector<2x48xf32> -> vector<2x48xf32>
    %168 = vector.broadcast %18 : vector<1x48xf32> to vector<2x48xf32>
    %169 = arith.addf %167, %168 : vector<2x48xf32>
    %170 = arith.truncf %157 : vector<2x16xf32> to vector<2x16xbf16>
    %cst_65 = arith.constant dense<0.000000e+00> : vector<2x48xf32>
    %171 = tpu.matmul %170, %17, %cst_65 {dimension_numbers = #tpu.dot_dimension_numbers<[1], [0], [0], [1], [0, 0, 1, 1], [], []>} : vector<2x16xbf16>, vector<16x48xbf16>, vector<2x48xf32> -> vector<2x48xf32>
    %172 = vector.broadcast %19 : vector<1x48xf32> to vector<2x48xf32>
    %173 = arith.addf %171, %172 : vector<2x48xf32>
    %c2 = arith.constant 2 : index
    %c0_66 = arith.constant 0 : index
    %c0_67 = arith.constant 0 : index
    %174 = vector.load %arg18[%c2, %c0_66, %c0_67] : memref<8x2x48xf32, #tpu.memory_space<vmem>>, vector<1x2x48xf32>
    %175 = vector.shape_cast %174 : vector<1x2x48xf32> to vector<2x48xf32>
    %c5 = arith.constant 5 : index
    %c0_68 = arith.constant 0 : index
    %c0_69 = arith.constant 0 : index
    %176 = vector.load %arg19[%c5, %c0_68, %c0_69] : memref<8x2x48xf32, #tpu.memory_space<vmem>>, vector<1x2x48xf32>
    %177 = vector.shape_cast %176 : vector<1x2x48xf32> to vector<2x48xf32>
    %178 = vector.extract_strided_slice %175 {offsets = [0, 0], sizes = [2, 16], strides = [1, 1]} : vector<2x48xf32> to vector<2x16xf32>
    %179 = vector.extract_strided_slice %169 {offsets = [0, 0], sizes = [2, 16], strides = [1, 1]} : vector<2x48xf32> to vector<2x16xf32>
    %180 = arith.addf %178, %179 : vector<2x16xf32>
    %181 = arith.negf %180 : vector<2x16xf32>
    %182 = math.exp %181 : vector<2x16xf32>
    %cst_70 = arith.constant 1.000000e+00 : f32
    %183 = vector.broadcast %cst_70 : f32 to vector<2x16xf32>
    %184 = arith.addf %183, %182 : vector<2x16xf32>
    %185 = arith.divf %183, %184 : vector<2x16xf32>
    %186 = vector.extract_strided_slice %175 {offsets = [0, 16], sizes = [2, 16], strides = [1, 1]} : vector<2x48xf32> to vector<2x16xf32>
    %187 = vector.extract_strided_slice %169 {offsets = [0, 16], sizes = [2, 16], strides = [1, 1]} : vector<2x48xf32> to vector<2x16xf32>
    %188 = arith.addf %186, %187 : vector<2x16xf32>
    %189 = arith.negf %188 : vector<2x16xf32>
    %190 = math.exp %189 : vector<2x16xf32>
    %cst_71 = arith.constant 1.000000e+00 : f32
    %191 = vector.broadcast %cst_71 : f32 to vector<2x16xf32>
    %192 = arith.addf %191, %190 : vector<2x16xf32>
    %193 = arith.divf %191, %192 : vector<2x16xf32>
    %194 = vector.extract_strided_slice %175 {offsets = [0, 32], sizes = [2, 16], strides = [1, 1]} : vector<2x48xf32> to vector<2x16xf32>
    %195 = vector.extract_strided_slice %169 {offsets = [0, 32], sizes = [2, 16], strides = [1, 1]} : vector<2x48xf32> to vector<2x16xf32>
    %196 = arith.mulf %185, %195 : vector<2x16xf32>
    %197 = arith.addf %194, %196 : vector<2x16xf32>
    %198 = math.tanh %197 : vector<2x16xf32>
    %cst_72 = arith.constant 1.000000e+00 : f32
    %199 = vector.broadcast %cst_72 : f32 to vector<2x16xf32>
    %200 = arith.subf %199, %193 : vector<2x16xf32>
    %201 = arith.mulf %200, %198 : vector<2x16xf32>
    %202 = arith.mulf %193, %131 : vector<2x16xf32>
    %203 = arith.addf %201, %202 : vector<2x16xf32>
    %204 = vector.extract_strided_slice %177 {offsets = [0, 0], sizes = [2, 16], strides = [1, 1]} : vector<2x48xf32> to vector<2x16xf32>
    %205 = vector.extract_strided_slice %173 {offsets = [0, 0], sizes = [2, 16], strides = [1, 1]} : vector<2x48xf32> to vector<2x16xf32>
    %206 = arith.addf %204, %205 : vector<2x16xf32>
    %207 = arith.negf %206 : vector<2x16xf32>
    %208 = math.exp %207 : vector<2x16xf32>
    %cst_73 = arith.constant 1.000000e+00 : f32
    %209 = vector.broadcast %cst_73 : f32 to vector<2x16xf32>
    %210 = arith.addf %209, %208 : vector<2x16xf32>
    %211 = arith.divf %209, %210 : vector<2x16xf32>
    %212 = vector.extract_strided_slice %177 {offsets = [0, 16], sizes = [2, 16], strides = [1, 1]} : vector<2x48xf32> to vector<2x16xf32>
    %213 = vector.extract_strided_slice %173 {offsets = [0, 16], sizes = [2, 16], strides = [1, 1]} : vector<2x48xf32> to vector<2x16xf32>
    %214 = arith.addf %212, %213 : vector<2x16xf32>
    %215 = arith.negf %214 : vector<2x16xf32>
    %216 = math.exp %215 : vector<2x16xf32>
    %cst_74 = arith.constant 1.000000e+00 : f32
    %217 = vector.broadcast %cst_74 : f32 to vector<2x16xf32>
    %218 = arith.addf %217, %216 : vector<2x16xf32>
    %219 = arith.divf %217, %218 : vector<2x16xf32>
    %220 = vector.extract_strided_slice %177 {offsets = [0, 32], sizes = [2, 16], strides = [1, 1]} : vector<2x48xf32> to vector<2x16xf32>
    %221 = vector.extract_strided_slice %173 {offsets = [0, 32], sizes = [2, 16], strides = [1, 1]} : vector<2x48xf32> to vector<2x16xf32>
    %222 = arith.mulf %211, %221 : vector<2x16xf32>
    %223 = arith.addf %220, %222 : vector<2x16xf32>
    %224 = math.tanh %223 : vector<2x16xf32>
    %cst_75 = arith.constant 1.000000e+00 : f32
    %225 = vector.broadcast %cst_75 : f32 to vector<2x16xf32>
    %226 = arith.subf %225, %219 : vector<2x16xf32>
    %227 = arith.mulf %226, %224 : vector<2x16xf32>
    %228 = arith.mulf %219, %157 : vector<2x16xf32>
    %229 = arith.addf %227, %228 : vector<2x16xf32>
    %230 = arith.truncf %203 : vector<2x16xf32> to vector<2x16xbf16>
    %c2_76 = arith.constant 2 : index
    %c0_77 = arith.constant 0 : index
    %c0_78 = arith.constant 0 : index
    %231 = vector.load %arg20[%c2_76, %c0_77, %c0_78] : memref<8x2x16xbf16, #tpu.memory_space<vmem>>, vector<1x2x16xbf16>
    %232 = vector.shape_cast %231 : vector<1x2x16xbf16> to vector<2x16xbf16>
    %233 = vector.shape_cast %230 : vector<2x16xbf16> to vector<1x2x16xbf16>
    tpu.vector_store %arg20[%c2_76, %c0_77, %c0_78], %233 {strides = array<i32>} : memref<8x2x16xbf16, #tpu.memory_space<vmem>>, vector<1x2x16xbf16>,
    %234 = arith.truncf %229 : vector<2x16xf32> to vector<2x16xbf16>
    %c5_79 = arith.constant 5 : index
    %c0_80 = arith.constant 0 : index
    %c0_81 = arith.constant 0 : index
    %235 = vector.load %arg21[%c5_79, %c0_80, %c0_81] : memref<8x2x16xbf16, #tpu.memory_space<vmem>>, vector<1x2x16xbf16>
    %236 = vector.shape_cast %235 : vector<1x2x16xbf16> to vector<2x16xbf16>
    %237 = vector.shape_cast %234 : vector<2x16xbf16> to vector<1x2x16xbf16>
    tpu.vector_store %arg21[%c5_79, %c0_80, %c0_81], %237 {strides = array<i32>} : memref<8x2x16xbf16, #tpu.memory_space<vmem>>, vector<1x2x16xbf16>,
    %238 = arith.truncf %203 : vector<2x16xf32> to vector<2x16xbf16>
    %cst_82 = arith.constant dense<0.000000e+00> : vector<2x48xf32>
    %239 = tpu.matmul %238, %16, %cst_82 {dimension_numbers = #tpu.dot_dimension_numbers<[1], [0], [0], [1], [0, 0, 1, 1], [], []>} : vector<2x16xbf16>, vector<16x48xbf16>, vector<2x48xf32> -> vector<2x48xf32>
    %240 = vector.broadcast %18 : vector<1x48xf32> to vector<2x48xf32>
    %241 = arith.addf %239, %240 : vector<2x48xf32>
    %242 = arith.truncf %229 : vector<2x16xf32> to vector<2x16xbf16>
    %cst_83 = arith.constant dense<0.000000e+00> : vector<2x48xf32>
    %243 = tpu.matmul %242, %17, %cst_83 {dimension_numbers = #tpu.dot_dimension_numbers<[1], [0], [0], [1], [0, 0, 1, 1], [], []>} : vector<2x16xbf16>, vector<16x48xbf16>, vector<2x48xf32> -> vector<2x48xf32>
    %244 = vector.broadcast %19 : vector<1x48xf32> to vector<2x48xf32>
    %245 = arith.addf %243, %244 : vector<2x48xf32>
    %c3 = arith.constant 3 : index
    %c0_84 = arith.constant 0 : index
    %c0_85 = arith.constant 0 : index
    %246 = vector.load %arg18[%c3, %c0_84, %c0_85] : memref<8x2x48xf32, #tpu.memory_space<vmem>>, vector<1x2x48xf32>
    %247 = vector.shape_cast %246 : vector<1x2x48xf32> to vector<2x48xf32>
    %c4 = arith.constant 4 : index
    %c0_86 = arith.constant 0 : index
    %c0_87 = arith.constant 0 : index
    %248 = vector.load %arg19[%c4, %c0_86, %c0_87] : memref<8x2x48xf32, #tpu.memory_space<vmem>>, vector<1x2x48xf32>
    %249 = vector.shape_cast %248 : vector<1x2x48xf32> to vector<2x48xf32>
    %250 = vector.extract_strided_slice %247 {offsets = [0, 0], sizes = [2, 16], strides = [1, 1]} : vector<2x48xf32> to vector<2x16xf32>
    %251 = vector.extract_strided_slice %241 {offsets = [0, 0], sizes = [2, 16], strides = [1, 1]} : vector<2x48xf32> to vector<2x16xf32>
    %252 = arith.addf %250, %251 : vector<2x16xf32>
    %253 = arith.negf %252 : vector<2x16xf32>
    %254 = math.exp %253 : vector<2x16xf32>
    %cst_88 = arith.constant 1.000000e+00 : f32
    %255 = vector.broadcast %cst_88 : f32 to vector<2x16xf32>
    %256 = arith.addf %255, %254 : vector<2x16xf32>
    %257 = arith.divf %255, %256 : vector<2x16xf32>
    %258 = vector.extract_strided_slice %247 {offsets = [0, 16], sizes = [2, 16], strides = [1, 1]} : vector<2x48xf32> to vector<2x16xf32>
    %259 = vector.extract_strided_slice %241 {offsets = [0, 16], sizes = [2, 16], strides = [1, 1]} : vector<2x48xf32> to vector<2x16xf32>
    %260 = arith.addf %258, %259 : vector<2x16xf32>
    %261 = arith.negf %260 : vector<2x16xf32>
    %262 = math.exp %261 : vector<2x16xf32>
    %cst_89 = arith.constant 1.000000e+00 : f32
    %263 = vector.broadcast %cst_89 : f32 to vector<2x16xf32>
    %264 = arith.addf %263, %262 : vector<2x16xf32>
    %265 = arith.divf %263, %264 : vector<2x16xf32>
    %266 = vector.extract_strided_slice %247 {offsets = [0, 32], sizes = [2, 16], strides = [1, 1]} : vector<2x48xf32> to vector<2x16xf32>
    %267 = vector.extract_strided_slice %241 {offsets = [0, 32], sizes = [2, 16], strides = [1, 1]} : vector<2x48xf32> to vector<2x16xf32>
    %268 = arith.mulf %257, %267 : vector<2x16xf32>
    %269 = arith.addf %266, %268 : vector<2x16xf32>
    %270 = math.tanh %269 : vector<2x16xf32>
    %cst_90 = arith.constant 1.000000e+00 : f32
    %271 = vector.broadcast %cst_90 : f32 to vector<2x16xf32>
    %272 = arith.subf %271, %265 : vector<2x16xf32>
    %273 = arith.mulf %272, %270 : vector<2x16xf32>
    %274 = arith.mulf %265, %203 : vector<2x16xf32>
    %275 = arith.addf %273, %274 : vector<2x16xf32>
    %276 = vector.extract_strided_slice %249 {offsets = [0, 0], sizes = [2, 16], strides = [1, 1]} : vector<2x48xf32> to vector<2x16xf32>
    %277 = vector.extract_strided_slice %245 {offsets = [0, 0], sizes = [2, 16], strides = [1, 1]} : vector<2x48xf32> to vector<2x16xf32>
    %278 = arith.addf %276, %277 : vector<2x16xf32>
    %279 = arith.negf %278 : vector<2x16xf32>
    %280 = math.exp %279 : vector<2x16xf32>
    %cst_91 = arith.constant 1.000000e+00 : f32
    %281 = vector.broadcast %cst_91 : f32 to vector<2x16xf32>
    %282 = arith.addf %281, %280 : vector<2x16xf32>
    %283 = arith.divf %281, %282 : vector<2x16xf32>
    %284 = vector.extract_strided_slice %249 {offsets = [0, 16], sizes = [2, 16], strides = [1, 1]} : vector<2x48xf32> to vector<2x16xf32>
    %285 = vector.extract_strided_slice %245 {offsets = [0, 16], sizes = [2, 16], strides = [1, 1]} : vector<2x48xf32> to vector<2x16xf32>
    %286 = arith.addf %284, %285 : vector<2x16xf32>
    %287 = arith.negf %286 : vector<2x16xf32>
    %288 = math.exp %287 : vector<2x16xf32>
    %cst_92 = arith.constant 1.000000e+00 : f32
    %289 = vector.broadcast %cst_92 : f32 to vector<2x16xf32>
    %290 = arith.addf %289, %288 : vector<2x16xf32>
    %291 = arith.divf %289, %290 : vector<2x16xf32>
    %292 = vector.extract_strided_slice %249 {offsets = [0, 32], sizes = [2, 16], strides = [1, 1]} : vector<2x48xf32> to vector<2x16xf32>
    %293 = vector.extract_strided_slice %245 {offsets = [0, 32], sizes = [2, 16], strides = [1, 1]} : vector<2x48xf32> to vector<2x16xf32>
    %294 = arith.mulf %283, %293 : vector<2x16xf32>
    %295 = arith.addf %292, %294 : vector<2x16xf32>
    %296 = math.tanh %295 : vector<2x16xf32>
    %cst_93 = arith.constant 1.000000e+00 : f32
    %297 = vector.broadcast %cst_93 : f32 to vector<2x16xf32>
    %298 = arith.subf %297, %291 : vector<2x16xf32>
    %299 = arith.mulf %298, %296 : vector<2x16xf32>
    %300 = arith.mulf %291, %229 : vector<2x16xf32>
    %301 = arith.addf %299, %300 : vector<2x16xf32>
    %302 = arith.truncf %275 : vector<2x16xf32> to vector<2x16xbf16>
    %c3_94 = arith.constant 3 : index
    %c0_95 = arith.constant 0 : index
    %c0_96 = arith.constant 0 : index
    %303 = vector.load %arg20[%c3_94, %c0_95, %c0_96] : memref<8x2x16xbf16, #tpu.memory_space<vmem>>, vector<1x2x16xbf16>
    %304 = vector.shape_cast %303 : vector<1x2x16xbf16> to vector<2x16xbf16>
    %305 = vector.shape_cast %302 : vector<2x16xbf16> to vector<1x2x16xbf16>
    tpu.vector_store %arg20[%c3_94, %c0_95, %c0_96], %305 {strides = array<i32>} : memref<8x2x16xbf16, #tpu.memory_space<vmem>>, vector<1x2x16xbf16>,
    %306 = arith.truncf %301 : vector<2x16xf32> to vector<2x16xbf16>
    %c4_97 = arith.constant 4 : index
    %c0_98 = arith.constant 0 : index
    %c0_99 = arith.constant 0 : index
    %307 = vector.load %arg21[%c4_97, %c0_98, %c0_99] : memref<8x2x16xbf16, #tpu.memory_space<vmem>>, vector<1x2x16xbf16>
    %308 = vector.shape_cast %307 : vector<1x2x16xbf16> to vector<2x16xbf16>
    %309 = vector.shape_cast %306 : vector<2x16xbf16> to vector<1x2x16xbf16>
    tpu.vector_store %arg21[%c4_97, %c0_98, %c0_99], %309 {strides = array<i32>} : memref<8x2x16xbf16, #tpu.memory_space<vmem>>, vector<1x2x16xbf16>,
    %310 = arith.truncf %275 : vector<2x16xf32> to vector<2x16xbf16>
    %cst_100 = arith.constant dense<0.000000e+00> : vector<2x48xf32>
    %311 = tpu.matmul %310, %16, %cst_100 {dimension_numbers = #tpu.dot_dimension_numbers<[1], [0], [0], [1], [0, 0, 1, 1], [], []>} : vector<2x16xbf16>, vector<16x48xbf16>, vector<2x48xf32> -> vector<2x48xf32>
    %312 = vector.broadcast %18 : vector<1x48xf32> to vector<2x48xf32>
    %313 = arith.addf %311, %312 : vector<2x48xf32>
    %314 = arith.truncf %301 : vector<2x16xf32> to vector<2x16xbf16>
    %cst_101 = arith.constant dense<0.000000e+00> : vector<2x48xf32>
    %315 = tpu.matmul %314, %17, %cst_101 {dimension_numbers = #tpu.dot_dimension_numbers<[1], [0], [0], [1], [0, 0, 1, 1], [], []>} : vector<2x16xbf16>, vector<16x48xbf16>, vector<2x48xf32> -> vector<2x48xf32>
    %316 = vector.broadcast %19 : vector<1x48xf32> to vector<2x48xf32>
    %317 = arith.addf %315, %316 : vector<2x48xf32>
    %c4_102 = arith.constant 4 : index
    %c0_103 = arith.constant 0 : index
    %c0_104 = arith.constant 0 : index
    %318 = vector.load %arg18[%c4_102, %c0_103, %c0_104] : memref<8x2x48xf32, #tpu.memory_space<vmem>>, vector<1x2x48xf32>
    %319 = vector.shape_cast %318 : vector<1x2x48xf32> to vector<2x48xf32>
    %c3_105 = arith.constant 3 : index
    %c0_106 = arith.constant 0 : index
    %c0_107 = arith.constant 0 : index
    %320 = vector.load %arg19[%c3_105, %c0_106, %c0_107] : memref<8x2x48xf32, #tpu.memory_space<vmem>>, vector<1x2x48xf32>
    %321 = vector.shape_cast %320 : vector<1x2x48xf32> to vector<2x48xf32>
    %322 = vector.extract_strided_slice %319 {offsets = [0, 0], sizes = [2, 16], strides = [1, 1]} : vector<2x48xf32> to vector<2x16xf32>
    %323 = vector.extract_strided_slice %313 {offsets = [0, 0], sizes = [2, 16], strides = [1, 1]} : vector<2x48xf32> to vector<2x16xf32>
    %324 = arith.addf %322, %323 : vector<2x16xf32>
    %325 = arith.negf %324 : vector<2x16xf32>
    %326 = math.exp %325 : vector<2x16xf32>
    %cst_108 = arith.constant 1.000000e+00 : f32
    %327 = vector.broadcast %cst_108 : f32 to vector<2x16xf32>
    %328 = arith.addf %327, %326 : vector<2x16xf32>
    %329 = arith.divf %327, %328 : vector<2x16xf32>
    %330 = vector.extract_strided_slice %319 {offsets = [0, 16], sizes = [2, 16], strides = [1, 1]} : vector<2x48xf32> to vector<2x16xf32>
    %331 = vector.extract_strided_slice %313 {offsets = [0, 16], sizes = [2, 16], strides = [1, 1]} : vector<2x48xf32> to vector<2x16xf32>
    %332 = arith.addf %330, %331 : vector<2x16xf32>
    %333 = arith.negf %332 : vector<2x16xf32>
    %334 = math.exp %333 : vector<2x16xf32>
    %cst_109 = arith.constant 1.000000e+00 : f32
    %335 = vector.broadcast %cst_109 : f32 to vector<2x16xf32>
    %336 = arith.addf %335, %334 : vector<2x16xf32>
    %337 = arith.divf %335, %336 : vector<2x16xf32>
    %338 = vector.extract_strided_slice %319 {offsets = [0, 32], sizes = [2, 16], strides = [1, 1]} : vector<2x48xf32> to vector<2x16xf32>
    %339 = vector.extract_strided_slice %313 {offsets = [0, 32], sizes = [2, 16], strides = [1, 1]} : vector<2x48xf32> to vector<2x16xf32>
    %340 = arith.mulf %329, %339 : vector<2x16xf32>
    %341 = arith.addf %338, %340 : vector<2x16xf32>
    %342 = math.tanh %341 : vector<2x16xf32>
    %cst_110 = arith.constant 1.000000e+00 : f32
    %343 = vector.broadcast %cst_110 : f32 to vector<2x16xf32>
    %344 = arith.subf %343, %337 : vector<2x16xf32>
    %345 = arith.mulf %344, %342 : vector<2x16xf32>
    %346 = arith.mulf %337, %275 : vector<2x16xf32>
    %347 = arith.addf %345, %346 : vector<2x16xf32>
    %348 = vector.extract_strided_slice %321 {offsets = [0, 0], sizes = [2, 16], strides = [1, 1]} : vector<2x48xf32> to vector<2x16xf32>
    %349 = vector.extract_strided_slice %317 {offsets = [0, 0], sizes = [2, 16], strides = [1, 1]} : vector<2x48xf32> to vector<2x16xf32>
    %350 = arith.addf %348, %349 : vector<2x16xf32>
    %351 = arith.negf %350 : vector<2x16xf32>
    %352 = math.exp %351 : vector<2x16xf32>
    %cst_111 = arith.constant 1.000000e+00 : f32
    %353 = vector.broadcast %cst_111 : f32 to vector<2x16xf32>
    %354 = arith.addf %353, %352 : vector<2x16xf32>
    %355 = arith.divf %353, %354 : vector<2x16xf32>
    %356 = vector.extract_strided_slice %321 {offsets = [0, 16], sizes = [2, 16], strides = [1, 1]} : vector<2x48xf32> to vector<2x16xf32>
    %357 = vector.extract_strided_slice %317 {offsets = [0, 16], sizes = [2, 16], strides = [1, 1]} : vector<2x48xf32> to vector<2x16xf32>
    %358 = arith.addf %356, %357 : vector<2x16xf32>
    %359 = arith.negf %358 : vector<2x16xf32>
    %360 = math.exp %359 : vector<2x16xf32>
    %cst_112 = arith.constant 1.000000e+00 : f32
    %361 = vector.broadcast %cst_112 : f32 to vector<2x16xf32>
    %362 = arith.addf %361, %360 : vector<2x16xf32>
    %363 = arith.divf %361, %362 : vector<2x16xf32>
    %364 = vector.extract_strided_slice %321 {offsets = [0, 32], sizes = [2, 16], strides = [1, 1]} : vector<2x48xf32> to vector<2x16xf32>
    %365 = vector.extract_strided_slice %317 {offsets = [0, 32], sizes = [2, 16], strides = [1, 1]} : vector<2x48xf32> to vector<2x16xf32>
    %366 = arith.mulf %355, %365 : vector<2x16xf32>
    %367 = arith.addf %364, %366 : vector<2x16xf32>
    %368 = math.tanh %367 : vector<2x16xf32>
    %cst_113 = arith.constant 1.000000e+00 : f32
    %369 = vector.broadcast %cst_113 : f32 to vector<2x16xf32>
    %370 = arith.subf %369, %363 : vector<2x16xf32>
    %371 = arith.mulf %370, %368 : vector<2x16xf32>
    %372 = arith.mulf %363, %301 : vector<2x16xf32>
    %373 = arith.addf %371, %372 : vector<2x16xf32>
    %374 = arith.truncf %347 : vector<2x16xf32> to vector<2x16xbf16>
    %c4_114 = arith.constant 4 : index
    %c0_115 = arith.constant 0 : index
    %c0_116 = arith.constant 0 : index
    %375 = vector.load %arg20[%c4_114, %c0_115, %c0_116] : memref<8x2x16xbf16, #tpu.memory_space<vmem>>, vector<1x2x16xbf16>
    %376 = vector.shape_cast %375 : vector<1x2x16xbf16> to vector<2x16xbf16>
    %377 = vector.shape_cast %374 : vector<2x16xbf16> to vector<1x2x16xbf16>
    tpu.vector_store %arg20[%c4_114, %c0_115, %c0_116], %377 {strides = array<i32>} : memref<8x2x16xbf16, #tpu.memory_space<vmem>>, vector<1x2x16xbf16>,
    %378 = arith.truncf %373 : vector<2x16xf32> to vector<2x16xbf16>
    %c3_117 = arith.constant 3 : index
    %c0_118 = arith.constant 0 : index
    %c0_119 = arith.constant 0 : index
    %379 = vector.load %arg21[%c3_117, %c0_118, %c0_119] : memref<8x2x16xbf16, #tpu.memory_space<vmem>>, vector<1x2x16xbf16>
    %380 = vector.shape_cast %379 : vector<1x2x16xbf16> to vector<2x16xbf16>
    %381 = vector.shape_cast %378 : vector<2x16xbf16> to vector<1x2x16xbf16>
    tpu.vector_store %arg21[%c3_117, %c0_118, %c0_119], %381 {strides = array<i32>} : memref<8x2x16xbf16, #tpu.memory_space<vmem>>, vector<1x2x16xbf16>,
    %382 = arith.truncf %347 : vector<2x16xf32> to vector<2x16xbf16>
    %cst_120 = arith.constant dense<0.000000e+00> : vector<2x48xf32>
    %383 = tpu.matmul %382, %16, %cst_120 {dimension_numbers = #tpu.dot_dimension_numbers<[1], [0], [0], [1], [0, 0, 1, 1], [], []>} : vector<2x16xbf16>, vector<16x48xbf16>, vector<2x48xf32> -> vector<2x48xf32>
    %384 = vector.broadcast %18 : vector<1x48xf32> to vector<2x48xf32>
    %385 = arith.addf %383, %384 : vector<2x48xf32>
    %386 = arith.truncf %373 : vector<2x16xf32> to vector<2x16xbf16>
    %cst_121 = arith.constant dense<0.000000e+00> : vector<2x48xf32>
    %387 = tpu.matmul %386, %17, %cst_121 {dimension_numbers = #tpu.dot_dimension_numbers<[1], [0], [0], [1], [0, 0, 1, 1], [], []>} : vector<2x16xbf16>, vector<16x48xbf16>, vector<2x48xf32> -> vector<2x48xf32>
    %388 = vector.broadcast %19 : vector<1x48xf32> to vector<2x48xf32>
    %389 = arith.addf %387, %388 : vector<2x48xf32>
    %c5_122 = arith.constant 5 : index
    %c0_123 = arith.constant 0 : index
    %c0_124 = arith.constant 0 : index
    %390 = vector.load %arg18[%c5_122, %c0_123, %c0_124] : memref<8x2x48xf32, #tpu.memory_space<vmem>>, vector<1x2x48xf32>
    %391 = vector.shape_cast %390 : vector<1x2x48xf32> to vector<2x48xf32>
    %c2_125 = arith.constant 2 : index
    %c0_126 = arith.constant 0 : index
    %c0_127 = arith.constant 0 : index
    %392 = vector.load %arg19[%c2_125, %c0_126, %c0_127] : memref<8x2x48xf32, #tpu.memory_space<vmem>>, vector<1x2x48xf32>
    %393 = vector.shape_cast %392 : vector<1x2x48xf32> to vector<2x48xf32>
    %394 = vector.extract_strided_slice %391 {offsets = [0, 0], sizes = [2, 16], strides = [1, 1]} : vector<2x48xf32> to vector<2x16xf32>
    %395 = vector.extract_strided_slice %385 {offsets = [0, 0], sizes = [2, 16], strides = [1, 1]} : vector<2x48xf32> to vector<2x16xf32>
    %396 = arith.addf %394, %395 : vector<2x16xf32>
    %397 = arith.negf %396 : vector<2x16xf32>
    %398 = math.exp %397 : vector<2x16xf32>
    %cst_128 = arith.constant 1.000000e+00 : f32
    %399 = vector.broadcast %cst_128 : f32 to vector<2x16xf32>
    %400 = arith.addf %399, %398 : vector<2x16xf32>
    %401 = arith.divf %399, %400 : vector<2x16xf32>
    %402 = vector.extract_strided_slice %391 {offsets = [0, 16], sizes = [2, 16], strides = [1, 1]} : vector<2x48xf32> to vector<2x16xf32>
    %403 = vector.extract_strided_slice %385 {offsets = [0, 16], sizes = [2, 16], strides = [1, 1]} : vector<2x48xf32> to vector<2x16xf32>
    %404 = arith.addf %402, %403 : vector<2x16xf32>
    %405 = arith.negf %404 : vector<2x16xf32>
    %406 = math.exp %405 : vector<2x16xf32>
    %cst_129 = arith.constant 1.000000e+00 : f32
    %407 = vector.broadcast %cst_129 : f32 to vector<2x16xf32>
    %408 = arith.addf %407, %406 : vector<2x16xf32>
    %409 = arith.divf %407, %408 : vector<2x16xf32>
    %410 = vector.extract_strided_slice %391 {offsets = [0, 32], sizes = [2, 16], strides = [1, 1]} : vector<2x48xf32> to vector<2x16xf32>
    %411 = vector.extract_strided_slice %385 {offsets = [0, 32], sizes = [2, 16], strides = [1, 1]} : vector<2x48xf32> to vector<2x16xf32>
    %412 = arith.mulf %401, %411 : vector<2x16xf32>
    %413 = arith.addf %410, %412 : vector<2x16xf32>
    %414 = math.tanh %413 : vector<2x16xf32>
    %cst_130 = arith.constant 1.000000e+00 : f32
    %415 = vector.broadcast %cst_130 : f32 to vector<2x16xf32>
    %416 = arith.subf %415, %409 : vector<2x16xf32>
    %417 = arith.mulf %416, %414 : vector<2x16xf32>
    %418 = arith.mulf %409, %347 : vector<2x16xf32>
    %419 = arith.addf %417, %418 : vector<2x16xf32>
    %420 = vector.extract_strided_slice %393 {offsets = [0, 0], sizes = [2, 16], strides = [1, 1]} : vector<2x48xf32> to vector<2x16xf32>
    %421 = vector.extract_strided_slice %389 {offsets = [0, 0], sizes = [2, 16], strides = [1, 1]} : vector<2x48xf32> to vector<2x16xf32>
    %422 = arith.addf %420, %421 : vector<2x16xf32>
    %423 = arith.negf %422 : vector<2x16xf32>
    %424 = math.exp %423 : vector<2x16xf32>
    %cst_131 = arith.constant 1.000000e+00 : f32
    %425 = vector.broadcast %cst_131 : f32 to vector<2x16xf32>
    %426 = arith.addf %425, %424 : vector<2x16xf32>
    %427 = arith.divf %425, %426 : vector<2x16xf32>
    %428 = vector.extract_strided_slice %393 {offsets = [0, 16], sizes = [2, 16], strides = [1, 1]} : vector<2x48xf32> to vector<2x16xf32>
    %429 = vector.extract_strided_slice %389 {offsets = [0, 16], sizes = [2, 16], strides = [1, 1]} : vector<2x48xf32> to vector<2x16xf32>
    %430 = arith.addf %428, %429 : vector<2x16xf32>
    %431 = arith.negf %430 : vector<2x16xf32>
    %432 = math.exp %431 : vector<2x16xf32>
    %cst_132 = arith.constant 1.000000e+00 : f32
    %433 = vector.broadcast %cst_132 : f32 to vector<2x16xf32>
    %434 = arith.addf %433, %432 : vector<2x16xf32>
    %435 = arith.divf %433, %434 : vector<2x16xf32>
    %436 = vector.extract_strided_slice %393 {offsets = [0, 32], sizes = [2, 16], strides = [1, 1]} : vector<2x48xf32> to vector<2x16xf32>
    %437 = vector.extract_strided_slice %389 {offsets = [0, 32], sizes = [2, 16], strides = [1, 1]} : vector<2x48xf32> to vector<2x16xf32>
    %438 = arith.mulf %427, %437 : vector<2x16xf32>
    %439 = arith.addf %436, %438 : vector<2x16xf32>
    %440 = math.tanh %439 : vector<2x16xf32>
    %cst_133 = arith.constant 1.000000e+00 : f32
    %441 = vector.broadcast %cst_133 : f32 to vector<2x16xf32>
    %442 = arith.subf %441, %435 : vector<2x16xf32>
    %443 = arith.mulf %442, %440 : vector<2x16xf32>
    %444 = arith.mulf %435, %373 : vector<2x16xf32>
    %445 = arith.addf %443, %444 : vector<2x16xf32>
    %446 = arith.truncf %419 : vector<2x16xf32> to vector<2x16xbf16>
    %c5_134 = arith.constant 5 : index
    %c0_135 = arith.constant 0 : index
    %c0_136 = arith.constant 0 : index
    %447 = vector.load %arg20[%c5_134, %c0_135, %c0_136] : memref<8x2x16xbf16, #tpu.memory_space<vmem>>, vector<1x2x16xbf16>
    %448 = vector.shape_cast %447 : vector<1x2x16xbf16> to vector<2x16xbf16>
    %449 = vector.shape_cast %446 : vector<2x16xbf16> to vector<1x2x16xbf16>
    tpu.vector_store %arg20[%c5_134, %c0_135, %c0_136], %449 {strides = array<i32>} : memref<8x2x16xbf16, #tpu.memory_space<vmem>>, vector<1x2x16xbf16>,
    %450 = arith.truncf %445 : vector<2x16xf32> to vector<2x16xbf16>
    %c2_137 = arith.constant 2 : index
    %c0_138 = arith.constant 0 : index
    %c0_139 = arith.constant 0 : index
    %451 = vector.load %arg21[%c2_137, %c0_138, %c0_139] : memref<8x2x16xbf16, #tpu.memory_space<vmem>>, vector<1x2x16xbf16>
    %452 = vector.shape_cast %451 : vector<1x2x16xbf16> to vector<2x16xbf16>
    %453 = vector.shape_cast %450 : vector<2x16xbf16> to vector<1x2x16xbf16>
    tpu.vector_store %arg21[%c2_137, %c0_138, %c0_139], %453 {strides = array<i32>} : memref<8x2x16xbf16, #tpu.memory_space<vmem>>, vector<1x2x16xbf16>,
    %454 = arith.truncf %419 : vector<2x16xf32> to vector<2x16xbf16>
    %cst_140 = arith.constant dense<0.000000e+00> : vector<2x48xf32>
    %455 = tpu.matmul %454, %16, %cst_140 {dimension_numbers = #tpu.dot_dimension_numbers<[1], [0], [0], [1], [0, 0, 1, 1], [], []>} : vector<2x16xbf16>, vector<16x48xbf16>, vector<2x48xf32> -> vector<2x48xf32>
    %456 = vector.broadcast %18 : vector<1x48xf32> to vector<2x48xf32>
    %457 = arith.addf %455, %456 : vector<2x48xf32>
    %458 = arith.truncf %445 : vector<2x16xf32> to vector<2x16xbf16>
    %cst_141 = arith.constant dense<0.000000e+00> : vector<2x48xf32>
    %459 = tpu.matmul %458, %17, %cst_141 {dimension_numbers = #tpu.dot_dimension_numbers<[1], [0], [0], [1], [0, 0, 1, 1], [], []>} : vector<2x16xbf16>, vector<16x48xbf16>, vector<2x48xf32> -> vector<2x48xf32>
    %460 = vector.broadcast %19 : vector<1x48xf32> to vector<2x48xf32>
    %461 = arith.addf %459, %460 : vector<2x48xf32>
    %c6_142 = arith.constant 6 : index
    %c0_143 = arith.constant 0 : index
    %c0_144 = arith.constant 0 : index
    %462 = vector.load %arg18[%c6_142, %c0_143, %c0_144] : memref<8x2x48xf32, #tpu.memory_space<vmem>>, vector<1x2x48xf32>
    %463 = vector.shape_cast %462 : vector<1x2x48xf32> to vector<2x48xf32>
    %c1_145 = arith.constant 1 : index
    %c0_146 = arith.constant 0 : index
    %c0_147 = arith.constant 0 : index
    %464 = vector.load %arg19[%c1_145, %c0_146, %c0_147] : memref<8x2x48xf32, #tpu.memory_space<vmem>>, vector<1x2x48xf32>
    %465 = vector.shape_cast %464 : vector<1x2x48xf32> to vector<2x48xf32>
    %466 = vector.extract_strided_slice %463 {offsets = [0, 0], sizes = [2, 16], strides = [1, 1]} : vector<2x48xf32> to vector<2x16xf32>
    %467 = vector.extract_strided_slice %457 {offsets = [0, 0], sizes = [2, 16], strides = [1, 1]} : vector<2x48xf32> to vector<2x16xf32>
    %468 = arith.addf %466, %467 : vector<2x16xf32>
    %469 = arith.negf %468 : vector<2x16xf32>
    %470 = math.exp %469 : vector<2x16xf32>
    %cst_148 = arith.constant 1.000000e+00 : f32
    %471 = vector.broadcast %cst_148 : f32 to vector<2x16xf32>
    %472 = arith.addf %471, %470 : vector<2x16xf32>
    %473 = arith.divf %471, %472 : vector<2x16xf32>
    %474 = vector.extract_strided_slice %463 {offsets = [0, 16], sizes = [2, 16], strides = [1, 1]} : vector<2x48xf32> to vector<2x16xf32>
    %475 = vector.extract_strided_slice %457 {offsets = [0, 16], sizes = [2, 16], strides = [1, 1]} : vector<2x48xf32> to vector<2x16xf32>
    %476 = arith.addf %474, %475 : vector<2x16xf32>
    %477 = arith.negf %476 : vector<2x16xf32>
    %478 = math.exp %477 : vector<2x16xf32>
    %cst_149 = arith.constant 1.000000e+00 : f32
    %479 = vector.broadcast %cst_149 : f32 to vector<2x16xf32>
    %480 = arith.addf %479, %478 : vector<2x16xf32>
    %481 = arith.divf %479, %480 : vector<2x16xf32>
    %482 = vector.extract_strided_slice %463 {offsets = [0, 32], sizes = [2, 16], strides = [1, 1]} : vector<2x48xf32> to vector<2x16xf32>
    %483 = vector.extract_strided_slice %457 {offsets = [0, 32], sizes = [2, 16], strides = [1, 1]} : vector<2x48xf32> to vector<2x16xf32>
    %484 = arith.mulf %473, %483 : vector<2x16xf32>
    %485 = arith.addf %482, %484 : vector<2x16xf32>
    %486 = math.tanh %485 : vector<2x16xf32>
    %cst_150 = arith.constant 1.000000e+00 : f32
    %487 = vector.broadcast %cst_150 : f32 to vector<2x16xf32>
    %488 = arith.subf %487, %481 : vector<2x16xf32>
    %489 = arith.mulf %488, %486 : vector<2x16xf32>
    %490 = arith.mulf %481, %419 : vector<2x16xf32>
    %491 = arith.addf %489, %490 : vector<2x16xf32>
    %492 = vector.extract_strided_slice %465 {offsets = [0, 0], sizes = [2, 16], strides = [1, 1]} : vector<2x48xf32> to vector<2x16xf32>
    %493 = vector.extract_strided_slice %461 {offsets = [0, 0], sizes = [2, 16], strides = [1, 1]} : vector<2x48xf32> to vector<2x16xf32>
    %494 = arith.addf %492, %493 : vector<2x16xf32>
    %495 = arith.negf %494 : vector<2x16xf32>
    %496 = math.exp %495 : vector<2x16xf32>
    %cst_151 = arith.constant 1.000000e+00 : f32
    %497 = vector.broadcast %cst_151 : f32 to vector<2x16xf32>
    %498 = arith.addf %497, %496 : vector<2x16xf32>
    %499 = arith.divf %497, %498 : vector<2x16xf32>
    %500 = vector.extract_strided_slice %465 {offsets = [0, 16], sizes = [2, 16], strides = [1, 1]} : vector<2x48xf32> to vector<2x16xf32>
    %501 = vector.extract_strided_slice %461 {offsets = [0, 16], sizes = [2, 16], strides = [1, 1]} : vector<2x48xf32> to vector<2x16xf32>
    %502 = arith.addf %500, %501 : vector<2x16xf32>
    %503 = arith.negf %502 : vector<2x16xf32>
    %504 = math.exp %503 : vector<2x16xf32>
    %cst_152 = arith.constant 1.000000e+00 : f32
    %505 = vector.broadcast %cst_152 : f32 to vector<2x16xf32>
    %506 = arith.addf %505, %504 : vector<2x16xf32>
    %507 = arith.divf %505, %506 : vector<2x16xf32>
    %508 = vector.extract_strided_slice %465 {offsets = [0, 32], sizes = [2, 16], strides = [1, 1]} : vector<2x48xf32> to vector<2x16xf32>
    %509 = vector.extract_strided_slice %461 {offsets = [0, 32], sizes = [2, 16], strides = [1, 1]} : vector<2x48xf32> to vector<2x16xf32>
    %510 = arith.mulf %499, %509 : vector<2x16xf32>
    %511 = arith.addf %508, %510 : vector<2x16xf32>
    %512 = math.tanh %511 : vector<2x16xf32>
    %cst_153 = arith.constant 1.000000e+00 : f32
    %513 = vector.broadcast %cst_153 : f32 to vector<2x16xf32>
    %514 = arith.subf %513, %507 : vector<2x16xf32>
    %515 = arith.mulf %514, %512 : vector<2x16xf32>
    %516 = arith.mulf %507, %445 : vector<2x16xf32>
    %517 = arith.addf %515, %516 : vector<2x16xf32>
    %518 = arith.truncf %491 : vector<2x16xf32> to vector<2x16xbf16>
    %c6_154 = arith.constant 6 : index
    %c0_155 = arith.constant 0 : index
    %c0_156 = arith.constant 0 : index
    %519 = vector.load %arg20[%c6_154, %c0_155, %c0_156] : memref<8x2x16xbf16, #tpu.memory_space<vmem>>, vector<1x2x16xbf16>
    %520 = vector.shape_cast %519 : vector<1x2x16xbf16> to vector<2x16xbf16>
    %521 = vector.shape_cast %518 : vector<2x16xbf16> to vector<1x2x16xbf16>
    tpu.vector_store %arg20[%c6_154, %c0_155, %c0_156], %521 {strides = array<i32>} : memref<8x2x16xbf16, #tpu.memory_space<vmem>>, vector<1x2x16xbf16>,
    %522 = arith.truncf %517 : vector<2x16xf32> to vector<2x16xbf16>
    %c1_157 = arith.constant 1 : index
    %c0_158 = arith.constant 0 : index
    %c0_159 = arith.constant 0 : index
    %523 = vector.load %arg21[%c1_157, %c0_158, %c0_159] : memref<8x2x16xbf16, #tpu.memory_space<vmem>>, vector<1x2x16xbf16>
    %524 = vector.shape_cast %523 : vector<1x2x16xbf16> to vector<2x16xbf16>
    %525 = vector.shape_cast %522 : vector<2x16xbf16> to vector<1x2x16xbf16>
    tpu.vector_store %arg21[%c1_157, %c0_158, %c0_159], %525 {strides = array<i32>} : memref<8x2x16xbf16, #tpu.memory_space<vmem>>, vector<1x2x16xbf16>,
    %526 = arith.truncf %491 : vector<2x16xf32> to vector<2x16xbf16>
    %cst_160 = arith.constant dense<0.000000e+00> : vector<2x48xf32>
    %527 = tpu.matmul %526, %16, %cst_160 {dimension_numbers = #tpu.dot_dimension_numbers<[1], [0], [0], [1], [0, 0, 1, 1], [], []>} : vector<2x16xbf16>, vector<16x48xbf16>, vector<2x48xf32> -> vector<2x48xf32>
    %528 = vector.broadcast %18 : vector<1x48xf32> to vector<2x48xf32>
    %529 = arith.addf %527, %528 : vector<2x48xf32>
    %530 = arith.truncf %517 : vector<2x16xf32> to vector<2x16xbf16>
    %cst_161 = arith.constant dense<0.000000e+00> : vector<2x48xf32>
    %531 = tpu.matmul %530, %17, %cst_161 {dimension_numbers = #tpu.dot_dimension_numbers<[1], [0], [0], [1], [0, 0, 1, 1], [], []>} : vector<2x16xbf16>, vector<16x48xbf16>, vector<2x48xf32> -> vector<2x48xf32>
    %532 = vector.broadcast %19 : vector<1x48xf32> to vector<2x48xf32>
    %533 = arith.addf %531, %532 : vector<2x48xf32>
    %c7_162 = arith.constant 7 : index
    %c0_163 = arith.constant 0 : index
    %c0_164 = arith.constant 0 : index
    %534 = vector.load %arg18[%c7_162, %c0_163, %c0_164] : memref<8x2x48xf32, #tpu.memory_space<vmem>>, vector<1x2x48xf32>
    %535 = vector.shape_cast %534 : vector<1x2x48xf32> to vector<2x48xf32>
    %c0_165 = arith.constant 0 : index
    %c0_166 = arith.constant 0 : index
    %c0_167 = arith.constant 0 : index
    %536 = vector.load %arg19[%c0_165, %c0_166, %c0_167] : memref<8x2x48xf32, #tpu.memory_space<vmem>>, vector<1x2x48xf32>
    %537 = vector.shape_cast %536 : vector<1x2x48xf32> to vector<2x48xf32>
    %538 = vector.extract_strided_slice %535 {offsets = [0, 0], sizes = [2, 16], strides = [1, 1]} : vector<2x48xf32> to vector<2x16xf32>
    %539 = vector.extract_strided_slice %529 {offsets = [0, 0], sizes = [2, 16], strides = [1, 1]} : vector<2x48xf32> to vector<2x16xf32>
    %540 = arith.addf %538, %539 : vector<2x16xf32>
    %541 = arith.negf %540 : vector<2x16xf32>
    %542 = math.exp %541 : vector<2x16xf32>
    %cst_168 = arith.constant 1.000000e+00 : f32
    %543 = vector.broadcast %cst_168 : f32 to vector<2x16xf32>
    %544 = arith.addf %543, %542 : vector<2x16xf32>
    %545 = arith.divf %543, %544 : vector<2x16xf32>
    %546 = vector.extract_strided_slice %535 {offsets = [0, 16], sizes = [2, 16], strides = [1, 1]} : vector<2x48xf32> to vector<2x16xf32>
    %547 = vector.extract_strided_slice %529 {offsets = [0, 16], sizes = [2, 16], strides = [1, 1]} : vector<2x48xf32> to vector<2x16xf32>
    %548 = arith.addf %546, %547 : vector<2x16xf32>
    %549 = arith.negf %548 : vector<2x16xf32>
    %550 = math.exp %549 : vector<2x16xf32>
    %cst_169 = arith.constant 1.000000e+00 : f32
    %551 = vector.broadcast %cst_169 : f32 to vector<2x16xf32>
    %552 = arith.addf %551, %550 : vector<2x16xf32>
    %553 = arith.divf %551, %552 : vector<2x16xf32>
    %554 = vector.extract_strided_slice %535 {offsets = [0, 32], sizes = [2, 16], strides = [1, 1]} : vector<2x48xf32> to vector<2x16xf32>
    %555 = vector.extract_strided_slice %529 {offsets = [0, 32], sizes = [2, 16], strides = [1, 1]} : vector<2x48xf32> to vector<2x16xf32>
    %556 = arith.mulf %545, %555 : vector<2x16xf32>
    %557 = arith.addf %554, %556 : vector<2x16xf32>
    %558 = math.tanh %557 : vector<2x16xf32>
    %cst_170 = arith.constant 1.000000e+00 : f32
    %559 = vector.broadcast %cst_170 : f32 to vector<2x16xf32>
    %560 = arith.subf %559, %553 : vector<2x16xf32>
    %561 = arith.mulf %560, %558 : vector<2x16xf32>
    %562 = arith.mulf %553, %491 : vector<2x16xf32>
    %563 = arith.addf %561, %562 : vector<2x16xf32>
    %564 = vector.extract_strided_slice %537 {offsets = [0, 0], sizes = [2, 16], strides = [1, 1]} : vector<2x48xf32> to vector<2x16xf32>
    %565 = vector.extract_strided_slice %533 {offsets = [0, 0], sizes = [2, 16], strides = [1, 1]} : vector<2x48xf32> to vector<2x16xf32>
    %566 = arith.addf %564, %565 : vector<2x16xf32>
    %567 = arith.negf %566 : vector<2x16xf32>
    %568 = math.exp %567 : vector<2x16xf32>
    %cst_171 = arith.constant 1.000000e+00 : f32
    %569 = vector.broadcast %cst_171 : f32 to vector<2x16xf32>
    %570 = arith.addf %569, %568 : vector<2x16xf32>
    %571 = arith.divf %569, %570 : vector<2x16xf32>
    %572 = vector.extract_strided_slice %537 {offsets = [0, 16], sizes = [2, 16], strides = [1, 1]} : vector<2x48xf32> to vector<2x16xf32>
    %573 = vector.extract_strided_slice %533 {offsets = [0, 16], sizes = [2, 16], strides = [1, 1]} : vector<2x48xf32> to vector<2x16xf32>
    %574 = arith.addf %572, %573 : vector<2x16xf32>
    %575 = arith.negf %574 : vector<2x16xf32>
    %576 = math.exp %575 : vector<2x16xf32>
    %cst_172 = arith.constant 1.000000e+00 : f32
    %577 = vector.broadcast %cst_172 : f32 to vector<2x16xf32>
    %578 = arith.addf %577, %576 : vector<2x16xf32>
    %579 = arith.divf %577, %578 : vector<2x16xf32>
    %580 = vector.extract_strided_slice %537 {offsets = [0, 32], sizes = [2, 16], strides = [1, 1]} : vector<2x48xf32> to vector<2x16xf32>
    %581 = vector.extract_strided_slice %533 {offsets = [0, 32], sizes = [2, 16], strides = [1, 1]} : vector<2x48xf32> to vector<2x16xf32>
    %582 = arith.mulf %571, %581 : vector<2x16xf32>
    %583 = arith.addf %580, %582 : vector<2x16xf32>
    %584 = math.tanh %583 : vector<2x16xf32>
    %cst_173 = arith.constant 1.000000e+00 : f32
    %585 = vector.broadcast %cst_173 : f32 to vector<2x16xf32>
    %586 = arith.subf %585, %579 : vector<2x16xf32>
    %587 = arith.mulf %586, %584 : vector<2x16xf32>
    %588 = arith.mulf %579, %517 : vector<2x16xf32>
    %589 = arith.addf %587, %588 : vector<2x16xf32>
    %590 = arith.truncf %563 : vector<2x16xf32> to vector<2x16xbf16>
    %c7_174 = arith.constant 7 : index
    %c0_175 = arith.constant 0 : index
    %c0_176 = arith.constant 0 : index
    %591 = vector.load %arg20[%c7_174, %c0_175, %c0_176] : memref<8x2x16xbf16, #tpu.memory_space<vmem>>, vector<1x2x16xbf16>
    %592 = vector.shape_cast %591 : vector<1x2x16xbf16> to vector<2x16xbf16>
    %593 = vector.shape_cast %590 : vector<2x16xbf16> to vector<1x2x16xbf16>
    tpu.vector_store %arg20[%c7_174, %c0_175, %c0_176], %593 {strides = array<i32>} : memref<8x2x16xbf16, #tpu.memory_space<vmem>>, vector<1x2x16xbf16>,
    %594 = arith.truncf %589 : vector<2x16xf32> to vector<2x16xbf16>
    %c0_177 = arith.constant 0 : index
    %c0_178 = arith.constant 0 : index
    %c0_179 = arith.constant 0 : index
    %595 = vector.load %arg21[%c0_177, %c0_178, %c0_179] : memref<8x2x16xbf16, #tpu.memory_space<vmem>>, vector<1x2x16xbf16>
    %596 = vector.shape_cast %595 : vector<1x2x16xbf16> to vector<2x16xbf16>
    %597 = vector.shape_cast %594 : vector<2x16xbf16> to vector<1x2x16xbf16>
    tpu.vector_store %arg21[%c0_177, %c0_178, %c0_179], %597 {strides = array<i32>} : memref<8x2x16xbf16, #tpu.memory_space<vmem>>, vector<1x2x16xbf16>,
    %c0_180 = arith.constant 0 : index
    %c0_181 = arith.constant 0 : index
    %c0_182 = arith.constant 0 : index
    %598 = vector.load %arg20[%c0_180, %c0_181, %c0_182] : memref<8x2x16xbf16, #tpu.memory_space<vmem>>, vector<8x2x16xbf16>
    %599 = vector.shape_cast %598 : vector<8x2x16xbf16> to vector<16x16xbf16>
    %c0_183 = arith.constant 0 : index
    %c0_184 = arith.constant 0 : index
    %c0_185 = arith.constant 0 : index
    %600 = vector.load %arg21[%c0_183, %c0_184, %c0_185] : memref<8x2x16xbf16, #tpu.memory_space<vmem>>, vector<8x2x16xbf16>
    %601 = vector.shape_cast %600 : vector<8x2x16xbf16> to vector<16x16xbf16>
    %cst_186 = arith.constant 0.000000e+00 : f32
    %602 = vector.broadcast %cst_186 : f32 to vector<8x2x1xf32>
    %c0_187 = arith.constant 0 : index
    %c0_188 = arith.constant 0 : index
    %c0_189 = arith.constant 0 : index
    %603 = vector.load %arg10[%c0_187, %c0_188, %c0_189] : memref<6x16x32xbf16, #tpu.memory_space<vmem>>, vector<1x16x32xbf16>
    %604 = vector.shape_cast %603 : vector<1x16x32xbf16> to vector<16x32xbf16>
    %cst_190 = arith.constant dense<0.000000e+00> : vector<16x32xf32>
    %605 = tpu.matmul %599, %604, %cst_190 {dimension_numbers = #tpu.dot_dimension_numbers<[1], [0], [0], [1], [0, 0, 1, 1], [], []>} : vector<16x16xbf16>, vector<16x32xbf16>, vector<16x32xf32> -> vector<16x32xf32>
    %c0_191 = arith.constant 0 : index
    %c0_192 = arith.constant 0 : index
    %c0_193 = arith.constant 0 : index
    %606 = vector.load %arg11[%c0_191, %c0_192, %c0_193] : memref<6x16x32xbf16, #tpu.memory_space<vmem>>, vector<1x16x32xbf16>
    %607 = vector.shape_cast %606 : vector<1x16x32xbf16> to vector<16x32xbf16>
    %cst_194 = arith.constant dense<0.000000e+00> : vector<16x32xf32>
    %608 = tpu.matmul %601, %607, %cst_194 {dimension_numbers = #tpu.dot_dimension_numbers<[1], [0], [0], [1], [0, 0, 1, 1], [], []>} : vector<16x16xbf16>, vector<16x32xbf16>, vector<16x32xf32> -> vector<16x32xf32>
    %609 = arith.addf %605, %608 : vector<16x32xf32>
    %c0_195 = arith.constant 0 : index
    %c0_196 = arith.constant 0 : index
    %c0_197 = arith.constant 0 : index
    %610 = vector.load %arg12[%c0_195, %c0_196, %c0_197] : memref<6x1x32xf32, #tpu.memory_space<vmem>>, vector<1x1x32xf32>
    %611 = vector.shape_cast %610 : vector<1x1x32xf32> to vector<1x32xf32>
    %612 = vector.broadcast %611 : vector<1x32xf32> to vector<16x32xf32>
    %613 = arith.addf %609, %612 : vector<16x32xf32>
    %614 = math.tanh %613 : vector<16x32xf32>
    %c0_198 = arith.constant 0 : index
    %c0_199 = arith.constant 0 : index
    %c0_200 = arith.constant 0 : index
    %615 = vector.load %arg13[%c0_198, %c0_199, %c0_200] : memref<6x1x32xf32, #tpu.memory_space<vmem>>, vector<1x1x32xf32>
    %616 = vector.shape_cast %615 : vector<1x1x32xf32> to vector<1x32xf32>
    %617 = vector.broadcast %616 : vector<1x32xf32> to vector<16x32xf32>
    %618 = arith.mulf %614, %617 : vector<16x32xf32>
    %cst_201 = arith.constant dense<0.000000e+00> : vector<16xf32>
    %619 = vector.multi_reduction <add>, %618, %cst_201 [1] : vector<16x32xf32> to vector<16xf32>
    %620 = vector.shape_cast %619 : vector<16xf32> to vector<16x1xf32>
    %621 = vector.shape_cast %620 : vector<16x1xf32> to vector<8x2x1xf32>
    %cst_202 = arith.constant dense<0xFF800000> : vector<2x1xf32>
    %622 = vector.multi_reduction <maximumf>, %621, %cst_202 [0] : vector<8x2x1xf32> to vector<2x1xf32>
    %623 = vector.shape_cast %622 : vector<2x1xf32> to vector<1x2x1xf32>
    %624 = vector.broadcast %623 : vector<1x2x1xf32> to vector<8x2x1xf32>
    %625 = arith.subf %621, %624 : vector<8x2x1xf32>
    %626 = math.exp %625 : vector<8x2x1xf32>
    %cst_203 = arith.constant dense<0.000000e+00> : vector<2x1xf32>
    %627 = vector.multi_reduction <add>, %626, %cst_203 [0] : vector<8x2x1xf32> to vector<2x1xf32>
    %628 = vector.shape_cast %627 : vector<2x1xf32> to vector<1x2x1xf32>
    %629 = tpu.reciprocal %628 {approx = true} : vector<1x2x1xf32> -> vector<1x2x1xf32>
    %630 = vector.broadcast %629 : vector<1x2x1xf32> to vector<8x2x1xf32>
    %631 = arith.mulf %626, %630 : vector<8x2x1xf32>
    %632 = arith.addf %602, %631 : vector<8x2x1xf32>
    %c1_204 = arith.constant 1 : index
    %c0_205 = arith.constant 0 : index
    %c0_206 = arith.constant 0 : index
    %633 = vector.load %arg10[%c1_204, %c0_205, %c0_206] : memref<6x16x32xbf16, #tpu.memory_space<vmem>>, vector<1x16x32xbf16>
    %634 = vector.shape_cast %633 : vector<1x16x32xbf16> to vector<16x32xbf16>
    %cst_207 = arith.constant dense<0.000000e+00> : vector<16x32xf32>
    %635 = tpu.matmul %599, %634, %cst_207 {dimension_numbers = #tpu.dot_dimension_numbers<[1], [0], [0], [1], [0, 0, 1, 1], [], []>} : vector<16x16xbf16>, vector<16x32xbf16>, vector<16x32xf32> -> vector<16x32xf32>
    %c1_208 = arith.constant 1 : index
    %c0_209 = arith.constant 0 : index
    %c0_210 = arith.constant 0 : index
    %636 = vector.load %arg11[%c1_208, %c0_209, %c0_210] : memref<6x16x32xbf16, #tpu.memory_space<vmem>>, vector<1x16x32xbf16>
    %637 = vector.shape_cast %636 : vector<1x16x32xbf16> to vector<16x32xbf16>
    %cst_211 = arith.constant dense<0.000000e+00> : vector<16x32xf32>
    %638 = tpu.matmul %601, %637, %cst_211 {dimension_numbers = #tpu.dot_dimension_numbers<[1], [0], [0], [1], [0, 0, 1, 1], [], []>} : vector<16x16xbf16>, vector<16x32xbf16>, vector<16x32xf32> -> vector<16x32xf32>
    %639 = arith.addf %635, %638 : vector<16x32xf32>
    %c1_212 = arith.constant 1 : index
    %c0_213 = arith.constant 0 : index
    %c0_214 = arith.constant 0 : index
    %640 = vector.load %arg12[%c1_212, %c0_213, %c0_214] : memref<6x1x32xf32, #tpu.memory_space<vmem>>, vector<1x1x32xf32>
    %641 = vector.shape_cast %640 : vector<1x1x32xf32> to vector<1x32xf32>
    %642 = vector.broadcast %641 : vector<1x32xf32> to vector<16x32xf32>
    %643 = arith.addf %639, %642 : vector<16x32xf32>
    %644 = math.tanh %643 : vector<16x32xf32>
    %c1_215 = arith.constant 1 : index
    %c0_216 = arith.constant 0 : index
    %c0_217 = arith.constant 0 : index
    %645 = vector.load %arg13[%c1_215, %c0_216, %c0_217] : memref<6x1x32xf32, #tpu.memory_space<vmem>>, vector<1x1x32xf32>
    %646 = vector.shape_cast %645 : vector<1x1x32xf32> to vector<1x32xf32>
    %647 = vector.broadcast %646 : vector<1x32xf32> to vector<16x32xf32>
    %648 = arith.mulf %644, %647 : vector<16x32xf32>
    %cst_218 = arith.constant dense<0.000000e+00> : vector<16xf32>
    %649 = vector.multi_reduction <add>, %648, %cst_218 [1] : vector<16x32xf32> to vector<16xf32>
    %650 = vector.shape_cast %649 : vector<16xf32> to vector<16x1xf32>
    %651 = vector.shape_cast %650 : vector<16x1xf32> to vector<8x2x1xf32>
    %cst_219 = arith.constant dense<0xFF800000> : vector<2x1xf32>
    %652 = vector.multi_reduction <maximumf>, %651, %cst_219 [0] : vector<8x2x1xf32> to vector<2x1xf32>
    %653 = vector.shape_cast %652 : vector<2x1xf32> to vector<1x2x1xf32>
    %654 = vector.broadcast %653 : vector<1x2x1xf32> to vector<8x2x1xf32>
    %655 = arith.subf %651, %654 : vector<8x2x1xf32>
    %656 = math.exp %655 : vector<8x2x1xf32>
    %cst_220 = arith.constant dense<0.000000e+00> : vector<2x1xf32>
    %657 = vector.multi_reduction <add>, %656, %cst_220 [0] : vector<8x2x1xf32> to vector<2x1xf32>
    %658 = vector.shape_cast %657 : vector<2x1xf32> to vector<1x2x1xf32>
    %659 = tpu.reciprocal %658 {approx = true} : vector<1x2x1xf32> -> vector<1x2x1xf32>
    %660 = vector.broadcast %659 : vector<1x2x1xf32> to vector<8x2x1xf32>
    %661 = arith.mulf %656, %660 : vector<8x2x1xf32>
    %662 = arith.addf %632, %661 : vector<8x2x1xf32>
    %c2_221 = arith.constant 2 : index
    %c0_222 = arith.constant 0 : index
    %c0_223 = arith.constant 0 : index
    %663 = vector.load %arg10[%c2_221, %c0_222, %c0_223] : memref<6x16x32xbf16, #tpu.memory_space<vmem>>, vector<1x16x32xbf16>
    %664 = vector.shape_cast %663 : vector<1x16x32xbf16> to vector<16x32xbf16>
    %cst_224 = arith.constant dense<0.000000e+00> : vector<16x32xf32>
    %665 = tpu.matmul %599, %664, %cst_224 {dimension_numbers = #tpu.dot_dimension_numbers<[1], [0], [0], [1], [0, 0, 1, 1], [], []>} : vector<16x16xbf16>, vector<16x32xbf16>, vector<16x32xf32> -> vector<16x32xf32>
    %c2_225 = arith.constant 2 : index
    %c0_226 = arith.constant 0 : index
    %c0_227 = arith.constant 0 : index
    %666 = vector.load %arg11[%c2_225, %c0_226, %c0_227] : memref<6x16x32xbf16, #tpu.memory_space<vmem>>, vector<1x16x32xbf16>
    %667 = vector.shape_cast %666 : vector<1x16x32xbf16> to vector<16x32xbf16>
    %cst_228 = arith.constant dense<0.000000e+00> : vector<16x32xf32>
    %668 = tpu.matmul %601, %667, %cst_228 {dimension_numbers = #tpu.dot_dimension_numbers<[1], [0], [0], [1], [0, 0, 1, 1], [], []>} : vector<16x16xbf16>, vector<16x32xbf16>, vector<16x32xf32> -> vector<16x32xf32>
    %669 = arith.addf %665, %668 : vector<16x32xf32>
    %c2_229 = arith.constant 2 : index
    %c0_230 = arith.constant 0 : index
    %c0_231 = arith.constant 0 : index
    %670 = vector.load %arg12[%c2_229, %c0_230, %c0_231] : memref<6x1x32xf32, #tpu.memory_space<vmem>>, vector<1x1x32xf32>
    %671 = vector.shape_cast %670 : vector<1x1x32xf32> to vector<1x32xf32>
    %672 = vector.broadcast %671 : vector<1x32xf32> to vector<16x32xf32>
    %673 = arith.addf %669, %672 : vector<16x32xf32>
    %674 = math.tanh %673 : vector<16x32xf32>
    %c2_232 = arith.constant 2 : index
    %c0_233 = arith.constant 0 : index
    %c0_234 = arith.constant 0 : index
    %675 = vector.load %arg13[%c2_232, %c0_233, %c0_234] : memref<6x1x32xf32, #tpu.memory_space<vmem>>, vector<1x1x32xf32>
    %676 = vector.shape_cast %675 : vector<1x1x32xf32> to vector<1x32xf32>
    %677 = vector.broadcast %676 : vector<1x32xf32> to vector<16x32xf32>
    %678 = arith.mulf %674, %677 : vector<16x32xf32>
    %cst_235 = arith.constant dense<0.000000e+00> : vector<16xf32>
    %679 = vector.multi_reduction <add>, %678, %cst_235 [1] : vector<16x32xf32> to vector<16xf32>
    %680 = vector.shape_cast %679 : vector<16xf32> to vector<16x1xf32>
    %681 = vector.shape_cast %680 : vector<16x1xf32> to vector<8x2x1xf32>
    %cst_236 = arith.constant dense<0xFF800000> : vector<2x1xf32>
    %682 = vector.multi_reduction <maximumf>, %681, %cst_236 [0] : vector<8x2x1xf32> to vector<2x1xf32>
    %683 = vector.shape_cast %682 : vector<2x1xf32> to vector<1x2x1xf32>
    %684 = vector.broadcast %683 : vector<1x2x1xf32> to vector<8x2x1xf32>
    %685 = arith.subf %681, %684 : vector<8x2x1xf32>
    %686 = math.exp %685 : vector<8x2x1xf32>
    %cst_237 = arith.constant dense<0.000000e+00> : vector<2x1xf32>
    %687 = vector.multi_reduction <add>, %686, %cst_237 [0] : vector<8x2x1xf32> to vector<2x1xf32>
    %688 = vector.shape_cast %687 : vector<2x1xf32> to vector<1x2x1xf32>
    %689 = tpu.reciprocal %688 {approx = true} : vector<1x2x1xf32> -> vector<1x2x1xf32>
    %690 = vector.broadcast %689 : vector<1x2x1xf32> to vector<8x2x1xf32>
    %691 = arith.mulf %686, %690 : vector<8x2x1xf32>
    %692 = arith.addf %662, %691 : vector<8x2x1xf32>
    %c3_238 = arith.constant 3 : index
    %c0_239 = arith.constant 0 : index
    %c0_240 = arith.constant 0 : index
    %693 = vector.load %arg10[%c3_238, %c0_239, %c0_240] : memref<6x16x32xbf16, #tpu.memory_space<vmem>>, vector<1x16x32xbf16>
    %694 = vector.shape_cast %693 : vector<1x16x32xbf16> to vector<16x32xbf16>
    %cst_241 = arith.constant dense<0.000000e+00> : vector<16x32xf32>
    %695 = tpu.matmul %599, %694, %cst_241 {dimension_numbers = #tpu.dot_dimension_numbers<[1], [0], [0], [1], [0, 0, 1, 1], [], []>} : vector<16x16xbf16>, vector<16x32xbf16>, vector<16x32xf32> -> vector<16x32xf32>
    %c3_242 = arith.constant 3 : index
    %c0_243 = arith.constant 0 : index
    %c0_244 = arith.constant 0 : index
    %696 = vector.load %arg11[%c3_242, %c0_243, %c0_244] : memref<6x16x32xbf16, #tpu.memory_space<vmem>>, vector<1x16x32xbf16>
    %697 = vector.shape_cast %696 : vector<1x16x32xbf16> to vector<16x32xbf16>
    %cst_245 = arith.constant dense<0.000000e+00> : vector<16x32xf32>
    %698 = tpu.matmul %601, %697, %cst_245 {dimension_numbers = #tpu.dot_dimension_numbers<[1], [0], [0], [1], [0, 0, 1, 1], [], []>} : vector<16x16xbf16>, vector<16x32xbf16>, vector<16x32xf32> -> vector<16x32xf32>
    %699 = arith.addf %695, %698 : vector<16x32xf32>
    %c3_246 = arith.constant 3 : index
    %c0_247 = arith.constant 0 : index
    %c0_248 = arith.constant 0 : index
    %700 = vector.load %arg12[%c3_246, %c0_247, %c0_248] : memref<6x1x32xf32, #tpu.memory_space<vmem>>, vector<1x1x32xf32>
    %701 = vector.shape_cast %700 : vector<1x1x32xf32> to vector<1x32xf32>
    %702 = vector.broadcast %701 : vector<1x32xf32> to vector<16x32xf32>
    %703 = arith.addf %699, %702 : vector<16x32xf32>
    %704 = math.tanh %703 : vector<16x32xf32>
    %c3_249 = arith.constant 3 : index
    %c0_250 = arith.constant 0 : index
    %c0_251 = arith.constant 0 : index
    %705 = vector.load %arg13[%c3_249, %c0_250, %c0_251] : memref<6x1x32xf32, #tpu.memory_space<vmem>>, vector<1x1x32xf32>
    %706 = vector.shape_cast %705 : vector<1x1x32xf32> to vector<1x32xf32>
    %707 = vector.broadcast %706 : vector<1x32xf32> to vector<16x32xf32>
    %708 = arith.mulf %704, %707 : vector<16x32xf32>
    %cst_252 = arith.constant dense<0.000000e+00> : vector<16xf32>
    %709 = vector.multi_reduction <add>, %708, %cst_252 [1] : vector<16x32xf32> to vector<16xf32>
    %710 = vector.shape_cast %709 : vector<16xf32> to vector<16x1xf32>
    %711 = vector.shape_cast %710 : vector<16x1xf32> to vector<8x2x1xf32>
    %cst_253 = arith.constant dense<0xFF800000> : vector<2x1xf32>
    %712 = vector.multi_reduction <maximumf>, %711, %cst_253 [0] : vector<8x2x1xf32> to vector<2x1xf32>
    %713 = vector.shape_cast %712 : vector<2x1xf32> to vector<1x2x1xf32>
    %714 = vector.broadcast %713 : vector<1x2x1xf32> to vector<8x2x1xf32>
    %715 = arith.subf %711, %714 : vector<8x2x1xf32>
    %716 = math.exp %715 : vector<8x2x1xf32>
    %cst_254 = arith.constant dense<0.000000e+00> : vector<2x1xf32>
    %717 = vector.multi_reduction <add>, %716, %cst_254 [0] : vector<8x2x1xf32> to vector<2x1xf32>
    %718 = vector.shape_cast %717 : vector<2x1xf32> to vector<1x2x1xf32>
    %719 = tpu.reciprocal %718 {approx = true} : vector<1x2x1xf32> -> vector<1x2x1xf32>
    %720 = vector.broadcast %719 : vector<1x2x1xf32> to vector<8x2x1xf32>
    %721 = arith.mulf %716, %720 : vector<8x2x1xf32>
    %722 = arith.addf %692, %721 : vector<8x2x1xf32>
    %c4_255 = arith.constant 4 : index
    %c0_256 = arith.constant 0 : index
    %c0_257 = arith.constant 0 : index
    %723 = vector.load %arg10[%c4_255, %c0_256, %c0_257] : memref<6x16x32xbf16, #tpu.memory_space<vmem>>, vector<1x16x32xbf16>
    %724 = vector.shape_cast %723 : vector<1x16x32xbf16> to vector<16x32xbf16>
    %cst_258 = arith.constant dense<0.000000e+00> : vector<16x32xf32>
    %725 = tpu.matmul %599, %724, %cst_258 {dimension_numbers = #tpu.dot_dimension_numbers<[1], [0], [0], [1], [0, 0, 1, 1], [], []>} : vector<16x16xbf16>, vector<16x32xbf16>, vector<16x32xf32> -> vector<16x32xf32>
    %c4_259 = arith.constant 4 : index
    %c0_260 = arith.constant 0 : index
    %c0_261 = arith.constant 0 : index
    %726 = vector.load %arg11[%c4_259, %c0_260, %c0_261] : memref<6x16x32xbf16, #tpu.memory_space<vmem>>, vector<1x16x32xbf16>
    %727 = vector.shape_cast %726 : vector<1x16x32xbf16> to vector<16x32xbf16>
    %cst_262 = arith.constant dense<0.000000e+00> : vector<16x32xf32>
    %728 = tpu.matmul %601, %727, %cst_262 {dimension_numbers = #tpu.dot_dimension_numbers<[1], [0], [0], [1], [0, 0, 1, 1], [], []>} : vector<16x16xbf16>, vector<16x32xbf16>, vector<16x32xf32> -> vector<16x32xf32>
    %729 = arith.addf %725, %728 : vector<16x32xf32>
    %c4_263 = arith.constant 4 : index
    %c0_264 = arith.constant 0 : index
    %c0_265 = arith.constant 0 : index
    %730 = vector.load %arg12[%c4_263, %c0_264, %c0_265] : memref<6x1x32xf32, #tpu.memory_space<vmem>>, vector<1x1x32xf32>
    %731 = vector.shape_cast %730 : vector<1x1x32xf32> to vector<1x32xf32>
    %732 = vector.broadcast %731 : vector<1x32xf32> to vector<16x32xf32>
    %733 = arith.addf %729, %732 : vector<16x32xf32>
    %734 = math.tanh %733 : vector<16x32xf32>
    %c4_266 = arith.constant 4 : index
    %c0_267 = arith.constant 0 : index
    %c0_268 = arith.constant 0 : index
    %735 = vector.load %arg13[%c4_266, %c0_267, %c0_268] : memref<6x1x32xf32, #tpu.memory_space<vmem>>, vector<1x1x32xf32>
    %736 = vector.shape_cast %735 : vector<1x1x32xf32> to vector<1x32xf32>
    %737 = vector.broadcast %736 : vector<1x32xf32> to vector<16x32xf32>
    %738 = arith.mulf %734, %737 : vector<16x32xf32>
    %cst_269 = arith.constant dense<0.000000e+00> : vector<16xf32>
    %739 = vector.multi_reduction <add>, %738, %cst_269 [1] : vector<16x32xf32> to vector<16xf32>
    %740 = vector.shape_cast %739 : vector<16xf32> to vector<16x1xf32>
    %741 = vector.shape_cast %740 : vector<16x1xf32> to vector<8x2x1xf32>
    %cst_270 = arith.constant dense<0xFF800000> : vector<2x1xf32>
    %742 = vector.multi_reduction <maximumf>, %741, %cst_270 [0] : vector<8x2x1xf32> to vector<2x1xf32>
    %743 = vector.shape_cast %742 : vector<2x1xf32> to vector<1x2x1xf32>
    %744 = vector.broadcast %743 : vector<1x2x1xf32> to vector<8x2x1xf32>
    %745 = arith.subf %741, %744 : vector<8x2x1xf32>
    %746 = math.exp %745 : vector<8x2x1xf32>
    %cst_271 = arith.constant dense<0.000000e+00> : vector<2x1xf32>
    %747 = vector.multi_reduction <add>, %746, %cst_271 [0] : vector<8x2x1xf32> to vector<2x1xf32>
    %748 = vector.shape_cast %747 : vector<2x1xf32> to vector<1x2x1xf32>
    %749 = tpu.reciprocal %748 {approx = true} : vector<1x2x1xf32> -> vector<1x2x1xf32>
    %750 = vector.broadcast %749 : vector<1x2x1xf32> to vector<8x2x1xf32>
    %751 = arith.mulf %746, %750 : vector<8x2x1xf32>
    %752 = arith.addf %722, %751 : vector<8x2x1xf32>
    %c5_272 = arith.constant 5 : index
    %c0_273 = arith.constant 0 : index
    %c0_274 = arith.constant 0 : index
    %753 = vector.load %arg10[%c5_272, %c0_273, %c0_274] : memref<6x16x32xbf16, #tpu.memory_space<vmem>>, vector<1x16x32xbf16>
    %754 = vector.shape_cast %753 : vector<1x16x32xbf16> to vector<16x32xbf16>
    %cst_275 = arith.constant dense<0.000000e+00> : vector<16x32xf32>
    %755 = tpu.matmul %599, %754, %cst_275 {dimension_numbers = #tpu.dot_dimension_numbers<[1], [0], [0], [1], [0, 0, 1, 1], [], []>} : vector<16x16xbf16>, vector<16x32xbf16>, vector<16x32xf32> -> vector<16x32xf32>
    %c5_276 = arith.constant 5 : index
    %c0_277 = arith.constant 0 : index
    %c0_278 = arith.constant 0 : index
    %756 = vector.load %arg11[%c5_276, %c0_277, %c0_278] : memref<6x16x32xbf16, #tpu.memory_space<vmem>>, vector<1x16x32xbf16>
    %757 = vector.shape_cast %756 : vector<1x16x32xbf16> to vector<16x32xbf16>
    %cst_279 = arith.constant dense<0.000000e+00> : vector<16x32xf32>
    %758 = tpu.matmul %601, %757, %cst_279 {dimension_numbers = #tpu.dot_dimension_numbers<[1], [0], [0], [1], [0, 0, 1, 1], [], []>} : vector<16x16xbf16>, vector<16x32xbf16>, vector<16x32xf32> -> vector<16x32xf32>
    %759 = arith.addf %755, %758 : vector<16x32xf32>
    %c5_280 = arith.constant 5 : index
    %c0_281 = arith.constant 0 : index
    %c0_282 = arith.constant 0 : index
    %760 = vector.load %arg12[%c5_280, %c0_281, %c0_282] : memref<6x1x32xf32, #tpu.memory_space<vmem>>, vector<1x1x32xf32>
    %761 = vector.shape_cast %760 : vector<1x1x32xf32> to vector<1x32xf32>
    %762 = vector.broadcast %761 : vector<1x32xf32> to vector<16x32xf32>
    %763 = arith.addf %759, %762 : vector<16x32xf32>
    %764 = math.tanh %763 : vector<16x32xf32>
    %c5_283 = arith.constant 5 : index
    %c0_284 = arith.constant 0 : index
    %c0_285 = arith.constant 0 : index
    %765 = vector.load %arg13[%c5_283, %c0_284, %c0_285] : memref<6x1x32xf32, #tpu.memory_space<vmem>>, vector<1x1x32xf32>
    %766 = vector.shape_cast %765 : vector<1x1x32xf32> to vector<1x32xf32>
    %767 = vector.broadcast %766 : vector<1x32xf32> to vector<16x32xf32>
    %768 = arith.mulf %764, %767 : vector<16x32xf32>
    %cst_286 = arith.constant dense<0.000000e+00> : vector<16xf32>
    %769 = vector.multi_reduction <add>, %768, %cst_286 [1] : vector<16x32xf32> to vector<16xf32>
    %770 = vector.shape_cast %769 : vector<16xf32> to vector<16x1xf32>
    %771 = vector.shape_cast %770 : vector<16x1xf32> to vector<8x2x1xf32>
    %cst_287 = arith.constant dense<0xFF800000> : vector<2x1xf32>
    %772 = vector.multi_reduction <maximumf>, %771, %cst_287 [0] : vector<8x2x1xf32> to vector<2x1xf32>
    %773 = vector.shape_cast %772 : vector<2x1xf32> to vector<1x2x1xf32>
    %774 = vector.broadcast %773 : vector<1x2x1xf32> to vector<8x2x1xf32>
    %775 = arith.subf %771, %774 : vector<8x2x1xf32>
    %776 = math.exp %775 : vector<8x2x1xf32>
    %cst_288 = arith.constant dense<0.000000e+00> : vector<2x1xf32>
    %777 = vector.multi_reduction <add>, %776, %cst_288 [0] : vector<8x2x1xf32> to vector<2x1xf32>
    %778 = vector.shape_cast %777 : vector<2x1xf32> to vector<1x2x1xf32>
    %779 = tpu.reciprocal %778 {approx = true} : vector<1x2x1xf32> -> vector<1x2x1xf32>
    %780 = vector.broadcast %779 : vector<1x2x1xf32> to vector<8x2x1xf32>
    %781 = arith.mulf %776, %780 : vector<8x2x1xf32>
    %782 = arith.addf %752, %781 : vector<8x2x1xf32>
    %cst_289 = arith.constant 0.166666672 : f32
    %783 = vector.broadcast %cst_289 : f32 to vector<8x2x1xf32>
    %784 = arith.mulf %782, %783 : vector<8x2x1xf32>
    %c0_290 = arith.constant 0 : index
    %c0_291 = arith.constant 0 : index
    %c0_292 = arith.constant 0 : index
    %785 = vector.load %arg20[%c0_290, %c0_291, %c0_292] : memref<8x2x16xbf16, #tpu.memory_space<vmem>>, vector<8x2x16xbf16>
    %786 = arith.extf %785 : vector<8x2x16xbf16> to vector<8x2x16xf32>
    %787 = vector.broadcast %784 : vector<8x2x1xf32> to vector<8x2x16xf32>
    %788 = arith.mulf %787, %786 : vector<8x2x16xf32>
    %cst_293 = arith.constant dense<0.000000e+00> : vector<2x16xf32>
    %789 = vector.multi_reduction <add>, %788, %cst_293 [0] : vector<8x2x16xf32> to vector<2x16xf32>
    %c0_294 = arith.constant 0 : index
    %c0_295 = arith.constant 0 : index
    %c0_296 = arith.constant 0 : index
    %790 = vector.load %arg21[%c0_294, %c0_295, %c0_296] : memref<8x2x16xbf16, #tpu.memory_space<vmem>>, vector<8x2x16xbf16>
    %791 = arith.extf %790 : vector<8x2x16xbf16> to vector<8x2x16xf32>
    %792 = vector.broadcast %784 : vector<8x2x1xf32> to vector<8x2x16xf32>
    %793 = arith.mulf %792, %791 : vector<8x2x16xf32>
    %cst_297 = arith.constant dense<0.000000e+00> : vector<2x16xf32>
    %794 = vector.multi_reduction <add>, %793, %cst_297 [0] : vector<8x2x16xf32> to vector<2x16xf32>
    %795 = arith.truncf %789 : vector<2x16xf32> to vector<2x16xbf16>
    %c0_298 = arith.constant 0 : index
    %c0_299 = arith.constant 0 : index
    %796 = vector.load %arg14[%c0_298, %c0_299] : memref<16x4xbf16, #tpu.memory_space<vmem>>, vector<16x4xbf16>
    %cst_300 = arith.constant dense<0.000000e+00> : vector<2x4xf32>
    %797 = tpu.matmul %795, %796, %cst_300 {dimension_numbers = #tpu.dot_dimension_numbers<[1], [0], [0], [1], [0, 0, 1, 1], [], []>} : vector<2x16xbf16>, vector<16x4xbf16>, vector<2x4xf32> -> vector<2x4xf32>
    %798 = arith.truncf %794 : vector<2x16xf32> to vector<2x16xbf16>
    %c0_301 = arith.constant 0 : index
    %c0_302 = arith.constant 0 : index
    %799 = vector.load %arg15[%c0_301, %c0_302] : memref<16x4xbf16, #tpu.memory_space<vmem>>, vector<16x4xbf16>
    %cst_303 = arith.constant dense<0.000000e+00> : vector<2x4xf32>
    %800 = tpu.matmul %798, %799, %cst_303 {dimension_numbers = #tpu.dot_dimension_numbers<[1], [0], [0], [1], [0, 0, 1, 1], [], []>} : vector<2x16xbf16>, vector<16x4xbf16>, vector<2x4xf32> -> vector<2x4xf32>
    %801 = arith.addf %797, %800 : vector<2x4xf32>
    %c0_304 = arith.constant 0 : index
    %c0_305 = arith.constant 0 : index
    %802 = vector.load %arg16[%c0_304, %c0_305] : memref<1x4xf32, #tpu.memory_space<vmem>>, vector<1x4xf32>
    %803 = vector.broadcast %802 : vector<1x4xf32> to vector<2x4xf32>
    %804 = arith.addf %801, %803 : vector<2x4xf32>
    %c0_306 = arith.constant 0 : index
    %c0_307 = arith.constant 0 : index
    %805 = vector.load %arg17[%c0_306, %c0_307] : memref<2x4xf32, #tpu.memory_space<vmem>>, vector<2x4xf32>
    tpu.vector_store %arg17[%c0_306, %c0_307], %804 {strides = array<i32>} : memref<2x4xf32, #tpu.memory_space<vmem>>, vector<2x4xf32>,
    return
  }
  func.func @transform_0(%arg0: i32) -> (i32, i32, i32) {
    %c0_i32 = arith.constant 0 : i32
    %c0_i32_0 = arith.constant 0 : i32
    %c0_i32_1 = arith.constant 0 : i32
    return %c0_i32, %arg0, %c0_i32_0 : i32, i32, i32
  }
  func.func @transform_1(%arg0: i32) -> (i32, i32) {
    %c0_i32 = arith.constant 0 : i32
    %c0_i32_0 = arith.constant 0 : i32
    %c0_i32_1 = arith.constant 0 : i32
    return %c0_i32, %c0_i32_0 : i32, i32
  }
  func.func @transform_2(%arg0: i32) -> (i32, i32) {
    %c0_i32 = arith.constant 0 : i32
    %c0_i32_0 = arith.constant 0 : i32
    %c0_i32_1 = arith.constant 0 : i32
    return %c0_i32, %c0_i32_0 : i32, i32
  }
  func.func @transform_3(%arg0: i32) -> (i32, i32) {
    %c0_i32 = arith.constant 0 : i32
    %c0_i32_0 = arith.constant 0 : i32
    %c0_i32_1 = arith.constant 0 : i32
    return %c0_i32, %c0_i32_0 : i32, i32
  }
  func.func @transform_4(%arg0: i32) -> (i32, i32) {
    %c0_i32 = arith.constant 0 : i32
    %c0_i32_0 = arith.constant 0 : i32
    %c0_i32_1 = arith.constant 0 : i32
    return %c0_i32, %c0_i32_0 : i32, i32
  }
  func.func @transform_5(%arg0: i32) -> (i32, i32) {
    %c0_i32 = arith.constant 0 : i32
    %c0_i32_0 = arith.constant 0 : i32
    %c0_i32_1 = arith.constant 0 : i32
    return %c0_i32, %c0_i32_0 : i32, i32
  }
  func.func @transform_6(%arg0: i32) -> (i32, i32) {
    %c0_i32 = arith.constant 0 : i32
    %c0_i32_0 = arith.constant 0 : i32
    %c0_i32_1 = arith.constant 0 : i32
    return %c0_i32, %c0_i32_0 : i32, i32
  }
  func.func @transform_7(%arg0: i32) -> (i32, i32) {
    %c0_i32 = arith.constant 0 : i32
    %c0_i32_0 = arith.constant 0 : i32
    %c0_i32_1 = arith.constant 0 : i32
    return %c0_i32, %c0_i32_0 : i32, i32
  }
  func.func @transform_8(%arg0: i32) -> (i32, i32) {
    %c0_i32 = arith.constant 0 : i32
    %c0_i32_0 = arith.constant 0 : i32
    %c0_i32_1 = arith.constant 0 : i32
    return %c0_i32, %c0_i32_0 : i32, i32
  }
  func.func @transform_9(%arg0: i32) -> (i32, i32, i32) {
    %c0_i32 = arith.constant 0 : i32
    %c0_i32_0 = arith.constant 0 : i32
    %c0_i32_1 = arith.constant 0 : i32
    %c0_i32_2 = arith.constant 0 : i32
    return %c0_i32, %c0_i32_0, %c0_i32_1 : i32, i32, i32
  }
  func.func @transform_10(%arg0: i32) -> (i32, i32, i32) {
    %c0_i32 = arith.constant 0 : i32
    %c0_i32_0 = arith.constant 0 : i32
    %c0_i32_1 = arith.constant 0 : i32
    %c0_i32_2 = arith.constant 0 : i32
    return %c0_i32, %c0_i32_0, %c0_i32_1 : i32, i32, i32
  }
  func.func @transform_11(%arg0: i32) -> (i32, i32, i32) {
    %c0_i32 = arith.constant 0 : i32
    %c0_i32_0 = arith.constant 0 : i32
    %c0_i32_1 = arith.constant 0 : i32
    %c0_i32_2 = arith.constant 0 : i32
    return %c0_i32, %c0_i32_0, %c0_i32_1 : i32, i32, i32
  }
  func.func @transform_12(%arg0: i32) -> (i32, i32, i32) {
    %c0_i32 = arith.constant 0 : i32
    %c0_i32_0 = arith.constant 0 : i32
    %c0_i32_1 = arith.constant 0 : i32
    %c0_i32_2 = arith.constant 0 : i32
    return %c0_i32, %c0_i32_0, %c0_i32_1 : i32, i32, i32
  }
  func.func @transform_13(%arg0: i32) -> (i32, i32) {
    %c0_i32 = arith.constant 0 : i32
    %c0_i32_0 = arith.constant 0 : i32
    %c0_i32_1 = arith.constant 0 : i32
    return %c0_i32, %c0_i32_0 : i32, i32
  }
  func.func @transform_14(%arg0: i32) -> (i32, i32) {
    %c0_i32 = arith.constant 0 : i32
    %c0_i32_0 = arith.constant 0 : i32
    %c0_i32_1 = arith.constant 0 : i32
    return %c0_i32, %c0_i32_0 : i32, i32
  }
  func.func @transform_15(%arg0: i32) -> (i32, i32) {
    %c0_i32 = arith.constant 0 : i32
    %c0_i32_0 = arith.constant 0 : i32
    %c0_i32_1 = arith.constant 0 : i32
    return %c0_i32, %c0_i32_0 : i32, i32
  }
  func.func @transform_16(%arg0: i32) -> (i32, i32) {
    %c0_i32 = arith.constant 0 : i32
    %c0_i32_0 = arith.constant 0 : i32
    return %arg0, %c0_i32 : i32, i32
  }
}

</mosaic_0001>

<llo_original>
// kernel: tpu_custom_call.1
$region0: #{tpu_custom_call.1}
  #allocation0 [shape = 'u32[]', space=smem, size = 0x4, offset = 0x4, fixed_abs, tag = 'smem constant byte address 0x4 - core index']
  #allocation1 [shape = 'u32[144,128]{1,0:T(1,128)}', space=vmem, size = 0x12000, scoped, tag = 'internal scratch']
  #allocation2 [shape = 'f32[8,2,48]{2,1,0:T(2,128)}', space=vmem, size = 0x2000, scoped, tag = 'scratch operand']
  #allocation3 [shape = 'f32[8,2,48]{2,1,0:T(2,128)}', space=vmem, size = 0x2000, scoped, tag = 'scratch operand']
  #allocation4 [shape = 'bf16[8,2,16]{2,1,0:T(2,128)(2,1)}', space=vmem, size = 0x1000, scoped, tag = 'scratch operand']
  #allocation5 [shape = 'bf16[8,2,16]{2,1,0:T(2,128)(2,1)}', space=vmem, size = 0x1000, scoped, tag = 'scratch operand']
  %s0 = inlined_call_operand.hbm [shape: bf16[8,2,32], index: 0, kind: input, shape index: {}]
  %s1 = inlined_call_operand.hbm [shape: bf16[32,48], index: 1, kind: input, shape index: {}]
  %s2 = inlined_call_operand.hbm [shape: f32[1,48], index: 2, kind: input, shape index: {}]
  %s3 = inlined_call_operand.hbm [shape: bf16[32,48], index: 3, kind: input, shape index: {}]
  %s4 = inlined_call_operand.hbm [shape: f32[1,48], index: 4, kind: input, shape index: {}]
  %s5 = inlined_call_operand.hbm [shape: bf16[16,48], index: 5, kind: input, shape index: {}]
  %s6 = inlined_call_operand.hbm [shape: f32[1,48], index: 6, kind: input, shape index: {}]
  %s7 = inlined_call_operand.hbm [shape: bf16[16,48], index: 7, kind: input, shape index: {}]
  %s8 = inlined_call_operand.hbm [shape: f32[1,48], index: 8, kind: input, shape index: {}]
  %s9 = inlined_call_operand.hbm [shape: bf16[6,16,32], index: 9, kind: input, shape index: {}]
  %s10 = inlined_call_operand.hbm [shape: bf16[6,16,32], index: 10, kind: input, shape index: {}]
  %s11 = inlined_call_operand.hbm [shape: f32[6,1,32], index: 11, kind: input, shape index: {}]
  %s12 = inlined_call_operand.hbm [shape: f32[6,1,32], index: 12, kind: input, shape index: {}]
  %s13 = inlined_call_operand.hbm [shape: bf16[16,4], index: 13, kind: input, shape index: {}]
  %s14 = inlined_call_operand.hbm [shape: bf16[16,4], index: 14, kind: input, shape index: {}]
  %s15 = inlined_call_operand.hbm [shape: f32[1,4], index: 15, kind: input, shape index: {}]
  %s16 = inlined_call_operand.hbm [shape: f32[2,4], index: 16, kind: output, shape index: {}]
  %s17 = sld [smem:[#allocation0]]
  $region138: #{tpu_custom_call.1} parent=0
    _
  %s19 = ssub.s32 1, %s17
  %s20 = scalar_select 0, %s19, %s17
  $region1: #{tpu_custom_call.1} parent=0
    #allocation6 [shape = 'u8[4096]{0}', space=vmem, size = 0x1000, scoped, tag = 'input window, operand 0, single buffered']
    #allocation7 [shape = 's32[1]{0}', space=sflag, size = 0x4, scoped, tag = 'scoped memory for tpu_custom_call.1']
    #allocation8 [shape = 's32[1]{0}', space=sflag, size = 0x4, scoped, tag = 'scoped memory for tpu_custom_call.1']
    #allocation9 [shape = 'u8[8192]{0}', space=vmem, size = 0x2000, scoped, tag = 'input window, operand 1, single buffered']
    #allocation10 [shape = 's32[1]{0}', space=sflag, size = 0x4, scoped, tag = 'scoped memory for tpu_custom_call.1']
    #allocation11 [shape = 'u8[512]{0}', space=vmem, size = 0x400, scoped, tag = 'input window, operand 2, single buffered']
    #allocation12 [shape = 'u8[8192]{0}', space=vmem, size = 0x2000, scoped, tag = 'input window, operand 3, single buffered']
    #allocation13 [shape = 's32[1]{0}', space=sflag, size = 0x4, scoped, tag = 'scoped memory for tpu_custom_call.1']
    #allocation14 [shape = 'u8[512]{0}', space=vmem, size = 0x400, scoped, tag = 'input window, operand 4, single buffered']
    #allocation15 [shape = 'u8[4096]{0}', space=vmem, size = 0x1000, scoped, tag = 'input window, operand 5, single buffered']
    #allocation16 [shape = 's32[1]{0}', space=sflag, size = 0x4, scoped, tag = 'scoped memory for tpu_custom_call.1']
    #allocation17 [shape = 'u8[512]{0}', space=vmem, size = 0x400, scoped, tag = 'input window, operand 6, single buffered']
    #allocation18 [shape = 'u8[4096]{0}', space=vmem, size = 0x1000, scoped, tag = 'input window, operand 7, single buffered']
    #allocation19 [shape = 's32[1]{0}', space=sflag, size = 0x4, scoped, tag = 'scoped memory for tpu_custom_call.1']
    #allocation20 [shape = 'u8[512]{0}', space=vmem, size = 0x400, scoped, tag = 'input window, operand 8, single buffered']
    #allocation21 [shape = 'u8[24576]{0}', space=vmem, size = 0x6000, scoped, tag = 'input window, operand 9, single buffered']
    #allocation22 [shape = 's32[1]{0}', space=sflag, size = 0x4, scoped, tag = 'scoped memory for tpu_custom_call.1']
    #allocation23 [shape = 'u8[24576]{0}', space=vmem, size = 0x6000, scoped, tag = 'input window, operand 10, single buffered']
    #allocation24 [shape = 'u8[3072]{0}', space=vmem, size = 0xc00, scoped, tag = 'input window, operand 11, single buffered']
    #allocation25 [shape = 's32[1]{0}', space=sflag, size = 0x4, scoped, tag = 'scoped memory for tpu_custom_call.1']
    #allocation26 [shape = 'u8[3072]{0}', space=vmem, size = 0xc00, scoped, tag = 'input window, operand 12, single buffered']
    #allocation27 [shape = 'u8[4096]{0}', space=vmem, size = 0x1000, scoped, tag = 'input window, operand 13, single buffered']
    #allocation28 [shape = 's32[1]{0}', space=sflag, size = 0x4, scoped, tag = 'scoped memory for tpu_custom_call.1']
    #allocation29 [shape = 'u8[4096]{0}', space=vmem, size = 0x1000, scoped, tag = 'input window, operand 14, single buffered']
    #allocation30 [shape = 'u8[512]{0}', space=vmem, size = 0x400, scoped, tag = 'input window, operand 15, single buffered']
    #allocation31 [shape = 's32[1]{0}', space=sflag, size = 0x4, scoped, tag = 'scoped memory for tpu_custom_call.1']
    #allocation32 [shape = 'u8[1024]{0}', space=vmem, size = 0x400, scoped, tag = 'output window, operand 0, single buffered']
    %21 = vsyncpa [#allocation7], 0
    %22 = vsyncpa [#allocation10], 0
    %23 = vsyncpa [#allocation13], 0
    %24 = vsyncpa [#allocation16], 0
    %25 = vsyncpa [#allocation19], 0
    %26 = vsyncpa [#allocation22], 0
    %27 = vsyncpa [#allocation25], 0
    %28 = vsyncpa [#allocation28], 0
    %29 = vsyncpa [#allocation31], 0
    %30 = vsyncpa [#allocation8], 0
    // Predicated region
    $region2: #{tpu_custom_call.1} parent=1 // pred_check
      _
    $region3: #{tpu_custom_call.1} parent=1 // pred_check_branch
      %32 = sbr.rel (0) target = $region5
    $region4: #{tpu_custom_call.1} parent=1 // pred_region
      %s34 = ssub.s32 128, 128
      %35 = vsyncadd [#allocation7], %s34
      %s36 = sshll.u32 [#allocation6], 4
      %s37 = int_to_ptr.vmem [resolvable:$true] %s36
      %42 = dma.hbm_to_vmem [thread:$0]  %s0, 128, %s37, [#allocation7], 16, 16, 1
    $region5: #{tpu_custom_call.1} parent=1 // pred_fallthru
      _
    // Predicated region
    $region6: #{tpu_custom_call.1} parent=1 // pred_check
      _
    $region7: #{tpu_custom_call.1} parent=1 // pred_check_branch
      %44 = sbr.rel (0) target = $region9
    $region8: #{tpu_custom_call.1} parent=1 // pred_region
      %s46 = ssub.s32 256, 256
      %47 = vsyncadd [#allocation10], %s46
      %s48 = sshll.u32 [#allocation9], 4
      %s49 = int_to_ptr.vmem [resolvable:$true] %s48
      %54 = dma.hbm_to_vmem [thread:$0]  %s1, 256, %s49, [#allocation10], 64, 64, 4
    $region9: #{tpu_custom_call.1} parent=1 // pred_fallthru
      _
    // Predicated region
    $region10: #{tpu_custom_call.1} parent=1 // pred_check
      _
    $region11: #{tpu_custom_call.1} parent=1 // pred_check_branch
      %56 = sbr.rel (0) target = $region13
    $region12: #{tpu_custom_call.1} parent=1 // pred_region
      %s58 = ssub.s32 16, 16
      %59 = vsyncadd [#allocation10], %s58
      %s61 = sshll.u32 [#allocation11], 4
      %s62 = int_to_ptr.vmem [resolvable:$true] %s61
      %64 = dma.hbm_to_vmem [thread:$0]  %s2, 16, %s62, [#allocation10]
    $region13: #{tpu_custom_call.1} parent=1 // pred_fallthru
      _
    // Predicated region
    $region14: #{tpu_custom_call.1} parent=1 // pred_check
      _
    $region15: #{tpu_custom_call.1} parent=1 // pred_check_branch
      %66 = sbr.rel (0) target = $region17
    $region16: #{tpu_custom_call.1} parent=1 // pred_region
      %s68 = ssub.s32 256, 256
      %69 = vsyncadd [#allocation13], %s68
      %s70 = sshll.u32 [#allocation12], 4
      %s71 = int_to_ptr.vmem [resolvable:$true] %s70
      %76 = dma.hbm_to_vmem [thread:$0]  %s3, 256, %s71, [#allocation13], 64, 64, 4
    $region17: #{tpu_custom_call.1} parent=1 // pred_fallthru
      _
    // Predicated region
    $region18: #{tpu_custom_call.1} parent=1 // pred_check
      _
    $region19: #{tpu_custom_call.1} parent=1 // pred_check_branch
      %78 = sbr.rel (0) target = $region21
    $region20: #{tpu_custom_call.1} parent=1 // pred_region
      %s80 = ssub.s32 16, 16
      %81 = vsyncadd [#allocation13], %s80
      %s83 = sshll.u32 [#allocation14], 4
      %s84 = int_to_ptr.vmem [resolvable:$true] %s83
      %86 = dma.hbm_to_vmem [thread:$0]  %s4, 16, %s84, [#allocation13]
    $region21: #{tpu_custom_call.1} parent=1 // pred_fallthru
      _
    // Predicated region
    $region22: #{tpu_custom_call.1} parent=1 // pred_check
      _
    $region23: #{tpu_custom_call.1} parent=1 // pred_check_branch
      %88 = sbr.rel (0) target = $region25
    $region24: #{tpu_custom_call.1} parent=1 // pred_region
      %s90 = ssub.s32 128, 128
      %91 = vsyncadd [#allocation16], %s90
      %s92 = sshll.u32 [#allocation15], 4
      %s93 = int_to_ptr.vmem [resolvable:$true] %s92
      %98 = dma.hbm_to_vmem [thread:$0]  %s5, 128, %s93, [#allocation16], 64, 64, 4
    $region25: #{tpu_custom_call.1} parent=1 // pred_fallthru
      _
    // Predicated region
    $region26: #{tpu_custom_call.1} parent=1 // pred_check
      _
    $region27: #{tpu_custom_call.1} parent=1 // pred_check_branch
      %100 = sbr.rel (0) target = $region29
    $region28: #{tpu_custom_call.1} parent=1 // pred_region
      %s102 = ssub.s32 16, 16
      %103 = vsyncadd [#allocation16], %s102
      %s105 = sshll.u32 [#allocation17], 4
      %s106 = int_to_ptr.vmem [resolvable:$true] %s105
      %108 = dma.hbm_to_vmem [thread:$0]  %s6, 16, %s106, [#allocation16]
    $region29: #{tpu_custom_call.1} parent=1 // pred_fallthru
      _
    // Predicated region
    $region30: #{tpu_custom_call.1} parent=1 // pred_check
      _
    $region31: #{tpu_custom_call.1} parent=1 // pred_check_branch
      %110 = sbr.rel (0) target = $region33
    $region32: #{tpu_custom_call.1} parent=1 // pred_region
      %s112 = ssub.s32 128, 128
      %113 = vsyncadd [#allocation19], %s112
      %s114 = sshll.u32 [#allocation18], 4
      %s115 = int_to_ptr.vmem [resolvable:$true] %s114
      %120 = dma.hbm_to_vmem [thread:$0]  %s7, 128, %s115, [#allocation19], 64, 64, 4
    $region33: #{tpu_custom_call.1} parent=1 // pred_fallthru
      _
    // Predicated region
    $region34: #{tpu_custom_call.1} parent=1 // pred_check
      _
    $region35: #{tpu_custom_call.1} parent=1 // pred_check_branch
      %122 = sbr.rel (0) target = $region37
    $region36: #{tpu_custom_call.1} parent=1 // pred_region
      %s124 = ssub.s32 16, 16
      %125 = vsyncadd [#allocation19], %s124
      %s127 = sshll.u32 [#allocation20], 4
      %s128 = int_to_ptr.vmem [resolvable:$true] %s127
      %130 = dma.hbm_to_vmem [thread:$0]  %s8, 16, %s128, [#allocation19]
    $region37: #{tpu_custom_call.1} parent=1 // pred_fallthru
      _
    // Predicated region
    $region38: #{tpu_custom_call.1} parent=1 // pred_check
      _
    $region39: #{tpu_custom_call.1} parent=1 // pred_check_branch
      %132 = sbr.rel (0) target = $region41
    $region40: #{tpu_custom_call.1} parent=1 // pred_region
      %s134 = ssub.s32 768, 768
      %135 = vsyncadd [#allocation22], %s134
      %s136 = sshll.u32 [#allocation21], 4
      %s137 = int_to_ptr.vmem [resolvable:$true] %s136
      %142 = dma.hbm_to_vmem [thread:$0]  %s9, 768, %s137, [#allocation22], 64, 64, 4
    $region41: #{tpu_custom_call.1} parent=1 // pred_fallthru
      _
    // Predicated region
    $region42: #{tpu_custom_call.1} parent=1 // pred_check
      _
    $region43: #{tpu_custom_call.1} parent=1 // pred_check_branch
      %144 = sbr.rel (0) target = $region45
    $region44: #{tpu_custom_call.1} parent=1 // pred_region
      %s146 = ssub.s32 768, 768
      %147 = vsyncadd [#allocation22], %s146
      %s148 = sshll.u32 [#allocation23], 4
      %s149 = int_to_ptr.vmem [resolvable:$true] %s148
      %154 = dma.hbm_to_vmem [thread:$0]  %s10, 768, %s149, [#allocation22], 64, 64, 4
    $region45: #{tpu_custom_call.1} parent=1 // pred_fallthru
      _
    // Predicated region
    $region46: #{tpu_custom_call.1} parent=1 // pred_check
      _
    $region47: #{tpu_custom_call.1} parent=1 // pred_check_branch
      %156 = sbr.rel (0) target = $region49
    $region48: #{tpu_custom_call.1} parent=1 // pred_region
      %s158 = ssub.s32 96, 96
      %159 = vsyncadd [#allocation25], %s158
      %s160 = sshll.u32 [#allocation24], 4
      %s161 = int_to_ptr.vmem [resolvable:$true] %s160
      %166 = dma.hbm_to_vmem [thread:$0]  %s11, 96, %s161, [#allocation25], 16, 16, 1
    $region49: #{tpu_custom_call.1} parent=1 // pred_fallthru
      _
    // Predicated region
    $region50: #{tpu_custom_call.1} parent=1 // pred_check
      _
    $region51: #{tpu_custom_call.1} parent=1 // pred_check_branch
      %168 = sbr.rel (0) target = $region53
    $region52: #{tpu_custom_call.1} parent=1 // pred_region
      %s170 = ssub.s32 96, 96
      %171 = vsyncadd [#allocation25], %s170
      %s172 = sshll.u32 [#allocation26], 4
      %s173 = int_to_ptr.vmem [resolvable:$true] %s172
      %178 = dma.hbm_to_vmem [thread:$0]  %s12, 96, %s173, [#allocation25], 16, 16, 1
    $region53: #{tpu_custom_call.1} parent=1 // pred_fallthru
      _
    // Predicated region
    $region54: #{tpu_custom_call.1} parent=1 // pred_check
      _
    $region55: #{tpu_custom_call.1} parent=1 // pred_check_branch
      %180 = sbr.rel (0) target = $region57
    $region56: #{tpu_custom_call.1} parent=1 // pred_region
      %s182 = ssub.s32 128, 128
      %183 = vsyncadd [#allocation28], %s182
      %s184 = sshll.u32 [#allocation27], 4
      %s185 = int_to_ptr.vmem [resolvable:$true] %s184
      %190 = dma.hbm_to_vmem [thread:$0]  %s13, 128, %s185, [#allocation28], 64, 64, 4
    $region57: #{tpu_custom_call.1} parent=1 // pred_fallthru
      _
    // Predicated region
    $region58: #{tpu_custom_call.1} parent=1 // pred_check
      _
    $region59: #{tpu_custom_call.1} parent=1 // pred_check_branch
      %192 = sbr.rel (0) target = $region61
    $region60: #{tpu_custom_call.1} parent=1 // pred_region
      %s194 = ssub.s32 128, 128
      %195 = vsyncadd [#allocation28], %s194
      %s196 = sshll.u32 [#allocation29], 4
      %s197 = int_to_ptr.vmem [resolvable:$true] %s196
      %202 = dma.hbm_to_vmem [thread:$0]  %s14, 128, %s197, [#allocation28], 64, 64, 4
    $region61: #{tpu_custom_call.1} parent=1 // pred_fallthru
      _
    // Predicated region
    $region62: #{tpu_custom_call.1} parent=1 // pred_check
      _
    $region63: #{tpu_custom_call.1} parent=1 // pred_check_branch
      %204 = sbr.rel (0) target = $region65
    $region64: #{tpu_custom_call.1} parent=1 // pred_region
      %s206 = ssub.s32 16, 16
      %207 = vsyncadd [#allocation31], %s206
      %s209 = sshll.u32 [#allocation30], 4
      %s210 = int_to_ptr.vmem [resolvable:$true] %s209
      %212 = dma.hbm_to_vmem [thread:$0]  %s15, 16, %s210, [#allocation31]
    $region65: #{tpu_custom_call.1} parent=1 // pred_fallthru
      _
    // Predicated region
    $region66: #{tpu_custom_call.1} parent=1 // pred_check
      _
    $region67: #{tpu_custom_call.1} parent=1 // pred_check_branch
      %214 = sbr.rel (0) target = $region69
    $region68: #{tpu_custom_call.1} parent=1 // pred_region
      %215 = dma.done [#allocation7], 128
    $region69: #{tpu_custom_call.1} parent=1 // pred_fallthru
      _
    // Predicated region
    $region70: #{tpu_custom_call.1} parent=1 // pred_check
      _
    $region71: #{tpu_custom_call.1} parent=1 // pred_check_branch
      %217 = sbr.rel (0) target = $region73
    $region72: #{tpu_custom_call.1} parent=1 // pred_region
      %218 = dma.done [#allocation10], 256
    $region73: #{tpu_custom_call.1} parent=1 // pred_fallthru
      _
    // Predicated region
    $region74: #{tpu_custom_call.1} parent=1 // pred_check
      _
    $region75: #{tpu_custom_call.1} parent=1 // pred_check_branch
      %220 = sbr.rel (0) target = $region77
    $region76: #{tpu_custom_call.1} parent=1 // pred_region
      %221 = dma.done [#allocation10], 16
    $region77: #{tpu_custom_call.1} parent=1 // pred_fallthru
      _
    // Predicated region
    $region78: #{tpu_custom_call.1} parent=1 // pred_check
      _
    $region79: #{tpu_custom_call.1} parent=1 // pred_check_branch
      %223 = sbr.rel (0) target = $region81
    $region80: #{tpu_custom_call.1} parent=1 // pred_region
      %224 = dma.done [#allocation13], 256
    $region81: #{tpu_custom_call.1} parent=1 // pred_fallthru
      _
    // Predicated region
    $region82: #{tpu_custom_call.1} parent=1 // pred_check
      _
    $region83: #{tpu_custom_call.1} parent=1 // pred_check_branch
      %226 = sbr.rel (0) target = $region85
    $region84: #{tpu_custom_call.1} parent=1 // pred_region
      %227 = dma.done [#allocation13], 16
    $region85: #{tpu_custom_call.1} parent=1 // pred_fallthru
      _
    // Predicated region
    $region86: #{tpu_custom_call.1} parent=1 // pred_check
      _
    $region87: #{tpu_custom_call.1} parent=1 // pred_check_branch
      %229 = sbr.rel (0) target = $region89
    $region88: #{tpu_custom_call.1} parent=1 // pred_region
      %230 = dma.done [#allocation16], 128
    $region89: #{tpu_custom_call.1} parent=1 // pred_fallthru
      _
    // Predicated region
    $region90: #{tpu_custom_call.1} parent=1 // pred_check
      _
    $region91: #{tpu_custom_call.1} parent=1 // pred_check_branch
      %232 = sbr.rel (0) target = $region93
    $region92: #{tpu_custom_call.1} parent=1 // pred_region
      %233 = dma.done [#allocation16], 16
    $region93: #{tpu_custom_call.1} parent=1 // pred_fallthru
      _
    // Predicated region
    $region94: #{tpu_custom_call.1} parent=1 // pred_check
      _
    $region95: #{tpu_custom_call.1} parent=1 // pred_check_branch
      %235 = sbr.rel (0) target = $region97
    $region96: #{tpu_custom_call.1} parent=1 // pred_region
      %236 = dma.done [#allocation19], 128
    $region97: #{tpu_custom_call.1} parent=1 // pred_fallthru
      _
    // Predicated region
    $region98: #{tpu_custom_call.1} parent=1 // pred_check
      _
    $region99: #{tpu_custom_call.1} parent=1 // pred_check_branch
      %238 = sbr.rel (0) target = $region101
    $region100: #{tpu_custom_call.1} parent=1 // pred_region
      %239 = dma.done [#allocation19], 16
    $region101: #{tpu_custom_call.1} parent=1 // pred_fallthru
      _
    // Predicated region
    $region102: #{tpu_custom_call.1} parent=1 // pred_check
      _
    $region103: #{tpu_custom_call.1} parent=1 // pred_check_branch
      %241 = sbr.rel (0) target = $region105
    $region104: #{tpu_custom_call.1} parent=1 // pred_region
      %242 = dma.done [#allocation22], 768
    $region105: #{tpu_custom_call.1} parent=1 // pred_fallthru
      _
    // Predicated region
    $region106: #{tpu_custom_call.1} parent=1 // pred_check
      _
    $region107: #{tpu_custom_call.1} parent=1 // pred_check_branch
      %244 = sbr.rel (0) target = $region109
    $region108: #{tpu_custom_call.1} parent=1 // pred_region
      %245 = dma.done [#allocation22], 768
    $region109: #{tpu_custom_call.1} parent=1 // pred_fallthru
      _
    // Predicated region
    $region110: #{tpu_custom_call.1} parent=1 // pred_check
      _
    $region111: #{tpu_custom_call.1} parent=1 // pred_check_branch
      %247 = sbr.rel (0) target = $region113
    $region112: #{tpu_custom_call.1} parent=1 // pred_region
      %248 = dma.done [#allocation25], 96
    $region113: #{tpu_custom_call.1} parent=1 // pred_fallthru
      _
    // Predicated region
    $region114: #{tpu_custom_call.1} parent=1 // pred_check
      _
    $region115: #{tpu_custom_call.1} parent=1 // pred_check_branch
      %250 = sbr.rel (0) target = $region117
    $region116: #{tpu_custom_call.1} parent=1 // pred_region
      %251 = dma.done [#allocation25], 96
    $region117: #{tpu_custom_call.1} parent=1 // pred_fallthru
      _
    // Predicated region
    $region118: #{tpu_custom_call.1} parent=1 // pred_check
      _
    $region119: #{tpu_custom_call.1} parent=1 // pred_check_branch
      %253 = sbr.rel (0) target = $region121
    $region120: #{tpu_custom_call.1} parent=1 // pred_region
      %254 = dma.done [#allocation28], 128
    $region121: #{tpu_custom_call.1} parent=1 // pred_fallthru
      _
    // Predicated region
    $region122: #{tpu_custom_call.1} parent=1 // pred_check
      _
    $region123: #{tpu_custom_call.1} parent=1 // pred_check_branch
      %256 = sbr.rel (0) target = $region125
    $region124: #{tpu_custom_call.1} parent=1 // pred_region
      %257 = dma.done [#allocation28], 128
    $region125: #{tpu_custom_call.1} parent=1 // pred_fallthru
      _
    // Predicated region
    $region126: #{tpu_custom_call.1} parent=1 // pred_check
      _
    $region127: #{tpu_custom_call.1} parent=1 // pred_check_branch
      %259 = sbr.rel (0) target = $region129
    $region128: #{tpu_custom_call.1} parent=1 // pred_region
      %260 = dma.done [#allocation31], 16
    $region129: #{tpu_custom_call.1} parent=1 // pred_fallthru
      _
    %v262 = vld [vmem:[#allocation6] sm:$0x1]
    %v263 = vld [vmem:[#allocation6 + $0x1] sm:$0x1]
    %v264 = vld [vmem:[#allocation6 + $0x2] sm:$0x1]
    %v265 = vld [vmem:[#allocation6 + $0x3] sm:$0x1]
    %v266 = vld [vmem:[#allocation6 + $0x4] sm:$0x1]
    %v267 = vld [vmem:[#allocation6 + $0x5] sm:$0x1]
    %v268 = vld [vmem:[#allocation6 + $0x6] sm:$0x1]
    %v269 = vld [vmem:[#allocation6 + $0x7] sm:$0x1]
    %v270 = vld [vmem:[#allocation9] sm:$0xf]
    %v271 = vld [vmem:[#allocation9 + $0x4] sm:$0xf]
    %v272 = vld [vmem:[#allocation9 + $0x8] sm:$0xf]
    %v273 = vld [vmem:[#allocation9 + $0xc] sm:$0xf]
    %v274 = vld [vmem:[#allocation11] sm:$0x1]
    %v276 = vlaneseq
    %v277 = vshrl.u32 %v276, 7
    %v278 = vsub.s32 0, %v277
    %v279 = vrot.slane %v274, %v278
    %v289 = vcombine.low %v262, %v263
    %v290 = vcombine.low %v264, %v265
    %v291 = vcombine.low %v266, %v267
    %v292 = vcombine.low %v268, %v269
    %v294 = vunpack.c.l.s4 1966171168
    %v295 = vunpack.c.0.s8 %v294
    %v296 = vlaneseq
    %v297 = vshrl.u32 %v296, 7
    %v298 = vsub.s32 %v295, %v297
    %v299 = vrot.slane %v289, %v298
    %v301 = vunpack.c.l.s4 1966171168
    %v302 = vunpack.c.0.s8 %v301
    %v303 = vlaneseq
    %v304 = vshrl.u32 %v303, 7
    %v305 = vsub.s32 %v302, %v304
    %v306 = vrot.slane %v290, %v305
    %v308 = vunpack.c.l.s4 1966171168
    %v309 = vunpack.c.0.s8 %v308
    %v310 = vlaneseq
    %v311 = vshrl.u32 %v310, 7
    %v312 = vsub.s32 %v309, %v311
    %v313 = vrot.slane %v291, %v312
    %v315 = vunpack.c.l.s4 1966171168
    %v316 = vunpack.c.0.s8 %v315
    %v317 = vlaneseq
    %v318 = vshrl.u32 %v317, 7
    %v319 = vsub.s32 %v316, %v318
    %v320 = vrot.slane %v292, %v319
    %v321 = vcombine.low %v299, %v306
    %v322 = vcombine.low %v313, %v320
    %v324 = vunpack.c.l.s4 1966171168
    %v325 = vunpack.c.0.s8 %v324
    %v326 = vlaneseq
    %v327 = vshrl.u32 %v326, 7
    %v328 = vsub.s32 %v325, %v327
    %v329 = vrot.slane %v321, %v328
    %v331 = vunpack.c.l.s4 1966171168
    %v332 = vunpack.c.0.s8 %v331
    %v333 = vlaneseq
    %v334 = vshrl.u32 %v333, 7
    %v335 = vsub.s32 %v332, %v334
    %v336 = vrot.slane %v322, %v335
    %v337 = vcombine.low %v329, %v336
    %v342 = vunpack.c.l.b16 %v270
    %v343 = vunpack.c.l.b16 %v271
    %v344 = vunpack.c.l.b16 %v272
    %v345 = vunpack.c.l.b16 %v273
    %v346 = vpack.c.b16 %v343, %v342
    %v347 = vpack.c.b16 %v345, %v344
    %vm350 = vcmask 261120
    %v352 = vsel %vm350, %v337, 0
    %354 = vmatprep.subr.bf16.mxu0 0
    %355 = vmatpush1.bf16.msra.mxu0 %v346
    %356 = vmatprep.subr.bf16.mxu0 0
    %357 = vmatpush1.bf16.msra.mxu0 %v347
    %358 = vmatprep.subr.bf16.mxu0 0
    %359 = vmatpush1.bf16.msra.mxu0 0
    %360 = vmatprep.subr.bf16.mxu0 0
    %361 = vmatpush1.bf16.msra.mxu0 0
    %362 = vmatprep.subr.bf16.mxu0 0
    %363 = vmatpush1.bf16.msra.mxu0 0
    %364 = vmatprep.subr.bf16.mxu0 0
    %365 = vmatpush1.bf16.msra.mxu0 0
    %366 = vmatprep.subr.bf16.mxu0 0
    %367 = vmatpush1.bf16.msra.mxu0 0
    %368 = vmatprep.subr.bf16.mxu0 0
    %369 = vmatpush1.bf16.msra.mxu0 0
    %370 = vmatprep.subr.bf16.mxu0 0
    %371 = vmatpush1.bf16.msra.mxu0 0
    %372 = vmatprep.subr.bf16.mxu0 0
    %373 = vmatpush1.bf16.msra.mxu0 0
    %374 = vmatprep.subr.bf16.mxu0 0
    %375 = vmatpush1.bf16.msra.mxu0 0
    %376 = vmatprep.subr.bf16.mxu0 0
    %377 = vmatpush1.bf16.msra.mxu0 0
    %378 = vmatprep.subr.bf16.mxu0 0
    %379 = vmatpush1.bf16.msra.mxu0 0
    %380 = vmatprep.subr.bf16.mxu0 0
    %381 = vmatpush1.bf16.msra.mxu0 0
    %382 = vmatprep.subr.bf16.mxu0 0
    %383 = vmatpush1.bf16.msra.mxu0 0
    %384 = vmatprep.subr.bf16.mxu0 0
    %385 = vmatpush1.bf16.msra.mxu0 0
    %386 = vmatprep.mubr.bf16.mxu0 0
    %387 = vmatmul.mubr.bf16.gmra.mrb[0].mxu0 %v352
    %v388 = vpop.f32.mrb[0].mxu0
    %v389 = vadd.f32 %v279, %v388
    %v390 = vpop.f32.mrb[0].mxu0
    %v391 = vpop.f32.mrb[0].mxu0
    %v392 = vadd.f32 %v279, %v391
    %v393 = vpop.f32.mrb[0].mxu0
    %394 = vdwg.mxu0
    %v397 = vcombine.high %v389, %v389
    %v399 = vunpack.c.l.s4 1983009808
    %v400 = vunpack.c.0.s8 %v399
    %v401 = vlaneseq
    %v402 = vshrl.u32 %v401, 7
    %v403 = vsub.s32 %v400, %v402
    %v404 = vrot.slane %v389, %v403
    %v406 = vunpack.c.l.s4 1983009808
    %v407 = vunpack.c.0.s8 %v406
    %v408 = vlaneseq
    %v409 = vshrl.u32 %v408, 7
    %v410 = vsub.s32 %v407, %v409
    %v411 = vrot.slane %v397, %v410
    %v412 = vcombine.high %v404, %v404
    %v413 = vcombine.high %v411, %v411
    %v414 = vcombine.high %v392, %v392
    %v416 = vunpack.c.l.s4 1983009808
    %v417 = vunpack.c.0.s8 %v416
    %v418 = vlaneseq
    %v419 = vshrl.u32 %v418, 7
    %v420 = vsub.s32 %v417, %v419
    %v421 = vrot.slane %v392, %v420
    %v423 = vunpack.c.l.s4 1983009808
    %v424 = vunpack.c.0.s8 %v423
    %v425 = vlaneseq
    %v426 = vshrl.u32 %v425, 7
    %v427 = vsub.s32 %v424, %v426
    %v428 = vrot.slane %v414, %v427
    %v429 = vcombine.high %v421, %v421
    %v430 = vcombine.high %v428, %v428
    %vm439 = vcmask 386048
    %440 = vst.msk [vmem:[#allocation2] sm:$0x3] %vm439, %v404
    %441 = vst.msk [vmem:[#allocation2 + $0x2] sm:$0x3] %vm439, %v412
    %442 = vst.msk [vmem:[#allocation2 + $0x4] sm:$0x3] %vm439, %v411
    %443 = vst.msk [vmem:[#allocation2 + $0x6] sm:$0x3] %vm439, %v413
    %444 = vst.msk [vmem:[#allocation2 + $0x8] sm:$0x3] %vm439, %v421
    %445 = vst.msk [vmem:[#allocation2 + $0xa] sm:$0x3] %vm439, %v429
    %446 = vst.msk [vmem:[#allocation2 + $0xc] sm:$0x3] %vm439, %v428
    %447 = vst.msk [vmem:[#allocation2 + $0xe] sm:$0x3] %vm439, %v430
    %v448 = vld [vmem:[#allocation12] sm:$0xf]
    %v449 = vld [vmem:[#allocation12 + $0x4] sm:$0xf]
    %v450 = vld [vmem:[#allocation12 + $0x8] sm:$0xf]
    %v451 = vld [vmem:[#allocation12 + $0xc] sm:$0xf]
    %v452 = vld [vmem:[#allocation14] sm:$0x1]
    %v454 = vlaneseq
    %v455 = vshrl.u32 %v454, 7
    %v456 = vsub.s32 0, %v455
    %v457 = vrot.slane %v452, %v456
    %v463 = vunpack.c.l.b16 %v448
    %v464 = vunpack.c.l.b16 %v449
    %v465 = vunpack.c.l.b16 %v450
    %v466 = vunpack.c.l.b16 %v451
    %v467 = vpack.c.b16 %v464, %v463
    %v468 = vpack.c.b16 %v466, %v465
    %471 = vmatprep.subr.bf16.mxu0 0
    %472 = vmatpush1.bf16.msra.mxu0 %v467
    %473 = vmatprep.subr.bf16.mxu0 0
    %474 = vmatpush1.bf16.msra.mxu0 %v468
    %475 = vmatprep.subr.bf16.mxu0 0
    %476 = vmatpush1.bf16.msra.mxu0 0
    %477 = vmatprep.subr.bf16.mxu0 0
    %478 = vmatpush1.bf16.msra.mxu0 0
    %479 = vmatprep.subr.bf16.mxu0 0
    %480 = vmatpush1.bf16.msra.mxu0 0
    %481 = vmatprep.subr.bf16.mxu0 0
    %482 = vmatpush1.bf16.msra.mxu0 0
    %483 = vmatprep.subr.bf16.mxu0 0
    %484 = vmatpush1.bf16.msra.mxu0 0
    %485 = vmatprep.subr.bf16.mxu0 0
    %486 = vmatpush1.bf16.msra.mxu0 0
    %487 = vmatprep.subr.bf16.mxu0 0
    %488 = vmatpush1.bf16.msra.mxu0 0
    %489 = vmatprep.subr.bf16.mxu0 0
    %490 = vmatpush1.bf16.msra.mxu0 0
    %491 = vmatprep.subr.bf16.mxu0 0
    %492 = vmatpush1.bf16.msra.mxu0 0
    %493 = vmatprep.subr.bf16.mxu0 0
    %494 = vmatpush1.bf16.msra.mxu0 0
    %495 = vmatprep.subr.bf16.mxu0 0
    %496 = vmatpush1.bf16.msra.mxu0 0
    %497 = vmatprep.subr.bf16.mxu0 0
    %498 = vmatpush1.bf16.msra.mxu0 0
    %499 = vmatprep.subr.bf16.mxu0 0
    %500 = vmatpush1.bf16.msra.mxu0 0
    %501 = vmatprep.subr.bf16.mxu0 0
    %502 = vmatpush1.bf16.msra.mxu0 0
    %503 = vmatprep.mubr.bf16.mxu0 0
    %504 = vmatmul.mubr.bf16.gmra.mrb[0].mxu0 %v352
    %v505 = vpop.f32.mrb[0].mxu0
    %v506 = vadd.f32 %v457, %v505
    %v507 = vpop.f32.mrb[0].mxu0
    %v508 = vpop.f32.mrb[0].mxu0
    %v509 = vadd.f32 %v457, %v508
    %v510 = vpop.f32.mrb[0].mxu0
    %511 = vdwg.mxu0
    %v514 = vcombine.high %v506, %v506
    %v516 = vunpack.c.l.s4 1983009808
    %v517 = vunpack.c.0.s8 %v516
    %v518 = vlaneseq
    %v519 = vshrl.u32 %v518, 7
    %v520 = vsub.s32 %v517, %v519
    %v521 = vrot.slane %v506, %v520
    %v523 = vunpack.c.l.s4 1983009808
    %v524 = vunpack.c.0.s8 %v523
    %v525 = vlaneseq
    %v526 = vshrl.u32 %v525, 7
    %v527 = vsub.s32 %v524, %v526
    %v528 = vrot.slane %v514, %v527
    %v529 = vcombine.high %v521, %v521
    %v530 = vcombine.high %v528, %v528
    %v531 = vcombine.high %v509, %v509
    %v533 = vunpack.c.l.s4 1983009808
    %v534 = vunpack.c.0.s8 %v533
    %v535 = vlaneseq
    %v536 = vshrl.u32 %v535, 7
    %v537 = vsub.s32 %v534, %v536
    %v538 = vrot.slane %v509, %v537
    %v540 = vunpack.c.l.s4 1983009808
    %v541 = vunpack.c.0.s8 %v540
    %v542 = vlaneseq
    %v543 = vshrl.u32 %v542, 7
    %v544 = vsub.s32 %v541, %v543
    %v545 = vrot.slane %v531, %v544
    %v546 = vcombine.high %v538, %v538
    %v547 = vcombine.high %v545, %v545
    %556 = vst.msk [vmem:[#allocation3] sm:$0x3] %vm439, %v521
    %557 = vst.msk [vmem:[#allocation3 + $0x2] sm:$0x3] %vm439, %v529
    %558 = vst.msk [vmem:[#allocation3 + $0x4] sm:$0x3] %vm439, %v528
    %559 = vst.msk [vmem:[#allocation3 + $0x6] sm:$0x3] %vm439, %v530
    %560 = vst.msk [vmem:[#allocation3 + $0x8] sm:$0x3] %vm439, %v538
    %561 = vst.msk [vmem:[#allocation3 + $0xa] sm:$0x3] %vm439, %v546
    %562 = vst.msk [vmem:[#allocation3 + $0xc] sm:$0x3] %vm439, %v545
    %563 = vst.msk [vmem:[#allocation3 + $0xe] sm:$0x3] %vm439, %v547
    %v564 = vld [vmem:[#allocation15] sm:$0xf]
    %v565 = vld [vmem:[#allocation15 + $0x4] sm:$0xf]
    %v566 = vld [vmem:[#allocation18] sm:$0xf]
    %v567 = vld [vmem:[#allocation18 + $0x4] sm:$0xf]
    %v568 = vld [vmem:[#allocation17] sm:$0x1]
    %v569 = vld [vmem:[#allocation20] sm:$0x1]
    %v571 = vlaneseq
    %v572 = vshrl.u32 %v571, 7
    %v573 = vsub.s32 0, %v572
    %v574 = vrot.slane %v568, %v573
    %v578 = vunpack.c.l.b16 %v564
    %v579 = vunpack.c.l.b16 %v565
    %v580 = vpack.c.b16 %v579, %v578
    %vm582 = vcmask 130048
    %v584 = vsel %vm582, 0, 0
    %586 = vmatprep.subr.bf16.mxu0 0
    %587 = vmatpush1.bf16.msra.mxu0 %v580
    %588 = vmatprep.subr.bf16.mxu0 0
    %589 = vmatpush1.bf16.msra.mxu0 0
    %590 = vmatprep.subr.bf16.mxu0 0
    %591 = vmatpush1.bf16.msra.mxu0 0
    %592 = vmatprep.subr.bf16.mxu0 0
    %593 = vmatpush1.bf16.msra.mxu0 0
    %594 = vmatprep.subr.bf16.mxu0 0
    %595 = vmatpush1.bf16.msra.mxu0 0
    %596 = vmatprep.subr.bf16.mxu0 0
    %597 = vmatpush1.bf16.msra.mxu0 0
    %598 = vmatprep.subr.bf16.mxu0 0
    %599 = vmatpush1.bf16.msra.mxu0 0
    %600 = vmatprep.subr.bf16.mxu0 0
    %601 = vmatpush1.bf16.msra.mxu0 0
    %602 = vmatprep.subr.bf16.mxu0 0
    %603 = vmatpush1.bf16.msra.mxu0 0
    %604 = vmatprep.subr.bf16.mxu0 0
    %605 = vmatpush1.bf16.msra.mxu0 0
    %606 = vmatprep.subr.bf16.mxu0 0
    %607 = vmatpush1.bf16.msra.mxu0 0
    %608 = vmatprep.subr.bf16.mxu0 0
    %609 = vmatpush1.bf16.msra.mxu0 0
    %610 = vmatprep.subr.bf16.mxu0 0
    %611 = vmatpush1.bf16.msra.mxu0 0
    %612 = vmatprep.subr.bf16.mxu0 0
    %613 = vmatpush1.bf16.msra.mxu0 0
    %614 = vmatprep.subr.bf16.mxu0 0
    %615 = vmatpush1.bf16.msra.mxu0 0
    %616 = vmatprep.subr.bf16.mxu0 0
    %617 = vmatpush1.bf16.msra.mxu0 0
    %618 = vmatprep.mubr.bf16.mxu0 0
    %619 = vmatmul.mubr.bf16.gmra.mrb[0].mxu0 %v584
    %v620 = vpop.f32.mrb[0].mxu0
    %v621 = vadd.f32 %v574, %v620
    %v622 = vpop.f32.mrb[0].mxu0
    %v623 = vpop.f32.mrb[0].mxu0
    %v624 = vpop.f32.mrb[0].mxu0
    %625 = vdwg.mxu0
    %v627 = vlaneseq
    %v628 = vshrl.u32 %v627, 7
    %v629 = vsub.s32 0, %v628
    %v630 = vrot.slane %v569, %v629
    %v634 = vunpack.c.l.b16 %v566
    %v635 = vunpack.c.l.b16 %v567
    %v636 = vpack.c.b16 %v635, %v634
    %638 = vmatprep.subr.bf16.mxu0 0
    %639 = vmatpush1.bf16.msra.mxu0 %v636
    %640 = vmatprep.subr.bf16.mxu0 0
    %641 = vmatpush1.bf16.msra.mxu0 0
    %642 = vmatprep.subr.bf16.mxu0 0
    %643 = vmatpush1.bf16.msra.mxu0 0
    %644 = vmatprep.subr.bf16.mxu0 0
    %645 = vmatpush1.bf16.msra.mxu0 0
    %646 = vmatprep.subr.bf16.mxu0 0
    %647 = vmatpush1.bf16.msra.mxu0 0
    %648 = vmatprep.subr.bf16.mxu0 0
    %649 = vmatpush1.bf16.msra.mxu0 0
    %650 = vmatprep.subr.bf16.mxu0 0
    %651 = vmatpush1.bf16.msra.mxu0 0
    %652 = vmatprep.subr.bf16.mxu0 0
    %653 = vmatpush1.bf16.msra.mxu0 0
    %654 = vmatprep.subr.bf16.mxu0 0
    %655 = vmatpush1.bf16.msra.mxu0 0
    %656 = vmatprep.subr.bf16.mxu0 0
    %657 = vmatpush1.bf16.msra.mxu0 0
    %658 = vmatprep.subr.bf16.mxu0 0
    %659 = vmatpush1.bf16.msra.mxu0 0
    %660 = vmatprep.subr.bf16.mxu0 0
    %661 = vmatpush1.bf16.msra.mxu0 0
    %662 = vmatprep.subr.bf16.mxu0 0
    %663 = vmatpush1.bf16.msra.mxu0 0
    %664 = vmatprep.subr.bf16.mxu0 0
    %665 = vmatpush1.bf16.msra.mxu0 0
    %666 = vmatprep.subr.bf16.mxu0 0
    %667 = vmatpush1.bf16.msra.mxu0 0
    %668 = vmatprep.subr.bf16.mxu0 0
    %669 = vmatpush1.bf16.msra.mxu0 0
    %670 = vmatprep.mubr.bf16.mxu0 0
    %671 = vmatmul.mubr.bf16.gmra.mrb[0].mxu0 %v584
    %v672 = vpop.f32.mrb[0].mxu0
    %v673 = vadd.f32 %v630, %v672
    %v674 = vpop.f32.mrb[0].mxu0
    %v675 = vpop.f32.mrb[0].mxu0
    %v676 = vpop.f32.mrb[0].mxu0
    %677 = vdwg.mxu0
    %v678 = vld [vmem:[#allocation2] sm:$0x3]
    %s679 = scalar_lea.vmem [#allocation3], 14
    %v680 = vld [vmem:[%s679] sm:$0x3]
    %v681 = vadd.f32 %v678, %v621
    %v682 = vxor.u32 %v681, 2147483648
    %v683 = vmul.f32 %v682, 1.442695
    %v684 = vpow.pop %v683
    %v685 = vadd.f32 %v684, 1.0
    %v686 = vrcp.pop %v685
    %v687 = vmul.f32 1.0, %v686
    %689 = vrot.lane.b32.xlu0 %v621, 96
    %v690 = vpop.permute.xlu0 %689
    %v692 = vmul.f32 %v687, %v690
    %694 = vrot.lane.b32.xlu0 %v692, 32
    %v695 = vpop.permute.xlu0 %694
    %v697 = vadd.f32 %v678, %v695
    %v698 = vtanh.pop %v697
    %v699 = vsub.f32 1.0, %v687
    %701 = vrot.lane.b32.xlu0 %v698, 112
    %v702 = vpop.permute.xlu0 %701
    %v704 = vmul.f32 %v699, %v702
    %v705 = vmul.f32 %v687, 0.0
    %v706 = vadd.f32 %v704, %v705
    %v707 = vadd.f32 %v680, %v673
    %v708 = vxor.u32 %v707, 2147483648
    %v709 = vmul.f32 %v708, 1.442695
    %v710 = vpow.pop %v709
    %v711 = vadd.f32 %v710, 1.0
    %v712 = vrcp.pop %v711
    %v713 = vmul.f32 1.0, %v712
    %715 = vrot.lane.b32.xlu0 %v673, 96
    %v716 = vpop.permute.xlu0 %715
    %v718 = vmul.f32 %v713, %v716
    %720 = vrot.lane.b32.xlu0 %v718, 32
    %v721 = vpop.permute.xlu0 %720
    %v723 = vadd.f32 %v680, %v721
    %v724 = vtanh.pop %v723
    %v725 = vsub.f32 1.0, %v713
    %727 = vrot.lane.b32.xlu0 %v724, 112
    %v728 = vpop.permute.xlu0 %727
    %v730 = vmul.f32 %v725, %v728
    %v731 = vmul.f32 %v713, 0.0
    %v732 = vadd.f32 %v730, %v731
    %v733 = vpack.c.bf16 %v706, %v706
    %v736 = vunpack.c.l.s4 1966171168
    %v737 = vunpack.c.0.s8 %v736
    %v738 = vlaneseq
    %v739 = vshrl.u32 %v738, 7
    %v740 = vsub.s32 %v737, %v739
    %v741 = vrot.slane %v733, %v740
    %v743 = vunpack.c.l.s4 1966171168
    %v744 = vunpack.c.0.s8 %v743
    %v745 = vlaneseq
    %v746 = vshrl.u32 %v745, 7
    %v747 = vsub.s32 %v744, %v746
    %v748 = vrot.slane %v741, %v747
    %749 = vrot.lane.b32.xlu0 %v748, 112
    %v750 = vpop.permute.xlu0 %749
    %vm752 = vcmask 122880
    %753 = vst.msk [vmem:[#allocation4] sm:$0x1] %vm752, %v750
    %v754 = vpack.c.bf16 %v732, %v732
    %v757 = vunpack.c.l.s4 1966171168
    %v758 = vunpack.c.0.s8 %v757
    %v759 = vlaneseq
    %v760 = vshrl.u32 %v759, 7
    %v761 = vsub.s32 %v758, %v760
    %v762 = vrot.slane %v754, %v761
    %v764 = vunpack.c.l.s4 1966171168
    %v765 = vunpack.c.0.s8 %v764
    %v766 = vlaneseq
    %v767 = vshrl.u32 %v766, 7
    %v768 = vsub.s32 %v765, %v767
    %v769 = vrot.slane %v762, %v768
    %770 = vrot.lane.b32.xlu0 %v769, 112
    %v771 = vpop.permute.xlu0 %770
    %s773 = scalar_lea.vmem [#allocation5], 7
    %774 = vst.msk [vmem:[%s773] sm:$0x1] %vm752, %v771
    %775 = vrot.lane.b32.xlu0 %v733, 112
    %v776 = vpop.permute.xlu0 %775
    %v778 = vsel %vm582, %v776, 0
    %780 = vmatprep.subr.bf16.mxu0 0
    %781 = vmatpush1.bf16.msra.mxu0 %v580
    %782 = vmatprep.subr.bf16.mxu0 0
    %783 = vmatpush1.bf16.msra.mxu0 0
    %784 = vmatprep.subr.bf16.mxu0 0
    %785 = vmatpush1.bf16.msra.mxu0 0
    %786 = vmatprep.subr.bf16.mxu0 0
    %787 = vmatpush1.bf16.msra.mxu0 0
    %788 = vmatprep.subr.bf16.mxu0 0
    %789 = vmatpush1.bf16.msra.mxu0 0
    %790 = vmatprep.subr.bf16.mxu0 0
    %791 = vmatpush1.bf16.msra.mxu0 0
    %792 = vmatprep.subr.bf16.mxu0 0
    %793 = vmatpush1.bf16.msra.mxu0 0
    %794 = vmatprep.subr.bf16.mxu0 0
    %795 = vmatpush1.bf16.msra.mxu0 0
    %796 = vmatprep.subr.bf16.mxu0 0
    %797 = vmatpush1.bf16.msra.mxu0 0
    %798 = vmatprep.subr.bf16.mxu0 0
    %799 = vmatpush1.bf16.msra.mxu0 0
    %800 = vmatprep.subr.bf16.mxu0 0
    %801 = vmatpush1.bf16.msra.mxu0 0
    %802 = vmatprep.subr.bf16.mxu0 0
    %803 = vmatpush1.bf16.msra.mxu0 0
    %804 = vmatprep.subr.bf16.mxu0 0
    %805 = vmatpush1.bf16.msra.mxu0 0
    %806 = vmatprep.subr.bf16.mxu0 0
    %807 = vmatpush1.bf16.msra.mxu0 0
    %808 = vmatprep.subr.bf16.mxu0 0
    %809 = vmatpush1.bf16.msra.mxu0 0
    %810 = vmatprep.subr.bf16.mxu0 0
    %811 = vmatpush1.bf16.msra.mxu0 0
    %812 = vmatprep.mubr.bf16.mxu0 0
    %813 = vmatmul.mubr.bf16.gmra.mrb[0].mxu0 %v778
    %v814 = vpop.f32.mrb[0].mxu0
    %v815 = vadd.f32 %v574, %v814
    %v816 = vpop.f32.mrb[0].mxu0
    %v817 = vpop.f32.mrb[0].mxu0
    %v818 = vpop.f32.mrb[0].mxu0
    %819 = vdwg.mxu0
    %820 = vrot.lane.b32.xlu0 %v754, 112
    %v821 = vpop.permute.xlu0 %820
    %v823 = vsel %vm582, %v821, 0
    %825 = vmatprep.subr.bf16.mxu0 0
    %826 = vmatpush1.bf16.msra.mxu0 %v636
    %827 = vmatprep.subr.bf16.mxu0 0
    %828 = vmatpush1.bf16.msra.mxu0 0
    %829 = vmatprep.subr.bf16.mxu0 0
    %830 = vmatpush1.bf16.msra.mxu0 0
    %831 = vmatprep.subr.bf16.mxu0 0
    %832 = vmatpush1.bf16.msra.mxu0 0
    %833 = vmatprep.subr.bf16.mxu0 0
    %834 = vmatpush1.bf16.msra.mxu0 0
    %835 = vmatprep.subr.bf16.mxu0 0
    %836 = vmatpush1.bf16.msra.mxu0 0
    %837 = vmatprep.subr.bf16.mxu0 0
    %838 = vmatpush1.bf16.msra.mxu0 0
    %839 = vmatprep.subr.bf16.mxu0 0
    %840 = vmatpush1.bf16.msra.mxu0 0
    %841 = vmatprep.subr.bf16.mxu0 0
    %842 = vmatpush1.bf16.msra.mxu0 0
    %843 = vmatprep.subr.bf16.mxu0 0
    %844 = vmatpush1.bf16.msra.mxu0 0
    %845 = vmatprep.subr.bf16.mxu0 0
    %846 = vmatpush1.bf16.msra.mxu0 0
    %847 = vmatprep.subr.bf16.mxu0 0
    %848 = vmatpush1.bf16.msra.mxu0 0
    %849 = vmatprep.subr.bf16.mxu0 0
    %850 = vmatpush1.bf16.msra.mxu0 0
    %851 = vmatprep.subr.bf16.mxu0 0
    %852 = vmatpush1.bf16.msra.mxu0 0
    %853 = vmatprep.subr.bf16.mxu0 0
    %854 = vmatpush1.bf16.msra.mxu0 0
    %855 = vmatprep.subr.bf16.mxu0 0
    %856 = vmatpush1.bf16.msra.mxu0 0
    %857 = vmatprep.mubr.bf16.mxu0 0
    %858 = vmatmul.mubr.bf16.gmra.mrb[0].mxu0 %v823
    %v859 = vpop.f32.mrb[0].mxu0
    %v860 = vadd.f32 %v630, %v859
    %v861 = vpop.f32.mrb[0].mxu0
    %v862 = vpop.f32.mrb[0].mxu0
    %v863 = vpop.f32.mrb[0].mxu0
    %864 = vdwg.mxu0
    %s865 = scalar_lea.vmem [#allocation2], 2
    %v866 = vld [vmem:[%s865] sm:$0x3]
    %s867 = scalar_lea.vmem [#allocation3], 12
    %v868 = vld [vmem:[%s867] sm:$0x3]
    %v869 = vadd.f32 %v866, %v815
    %v870 = vxor.u32 %v869, 2147483648
    %v871 = vmul.f32 %v870, 1.442695
    %v872 = vpow.pop %v871
    %v873 = vadd.f32 %v872, 1.0
    %v874 = vrcp.pop %v873
    %v875 = vmul.f32 1.0, %v874
    %877 = vrot.lane.b32.xlu0 %v815, 96
    %v878 = vpop.permute.xlu0 %877
    %v880 = vmul.f32 %v875, %v878
    %882 = vrot.lane.b32.xlu0 %v880, 32
    %v883 = vpop.permute.xlu0 %882
    %v885 = vadd.f32 %v866, %v883
    %v886 = vtanh.pop %v885
    %v887 = vsub.f32 1.0, %v875
    %889 = vrot.lane.b32.xlu0 %v886, 112
    %v890 = vpop.permute.xlu0 %889
    %v892 = vmul.f32 %v887, %v890
    %v893 = vmul.f32 %v875, %v706
    %v894 = vadd.f32 %v892, %v893
    %v895 = vadd.f32 %v868, %v860
    %v896 = vxor.u32 %v895, 2147483648
    %v897 = vmul.f32 %v896, 1.442695
    %v898 = vpow.pop %v897
    %v899 = vadd.f32 %v898, 1.0
    %v900 = vrcp.pop %v899
    %v901 = vmul.f32 1.0, %v900
    %903 = vrot.lane.b32.xlu0 %v860, 96
    %v904 = vpop.permute.xlu0 %903
    %v906 = vmul.f32 %v901, %v904
    %908 = vrot.lane.b32.xlu0 %v906, 32
    %v909 = vpop.permute.xlu0 %908
    %v911 = vadd.f32 %v868, %v909
    %v912 = vtanh.pop %v911
    %v913 = vsub.f32 1.0, %v901
    %915 = vrot.lane.b32.xlu0 %v912, 112
    %v916 = vpop.permute.xlu0 %915
    %v918 = vmul.f32 %v913, %v916
    %v919 = vmul.f32 %v901, %v732
    %v920 = vadd.f32 %v918, %v919
    %v921 = vpack.c.bf16 %v894, %v894
    %v924 = vunpack.c.l.s4 1966171168
    %v925 = vunpack.c.0.s8 %v924
    %v926 = vlaneseq
    %v927 = vshrl.u32 %v926, 7
    %v928 = vsub.s32 %v925, %v927
    %v929 = vrot.slane %v921, %v928
    %v931 = vunpack.c.l.s4 1966171168
    %v932 = vunpack.c.0.s8 %v931
    %v933 = vlaneseq
    %v934 = vshrl.u32 %v933, 7
    %v935 = vsub.s32 %v932, %v934
    %v936 = vrot.slane %v929, %v935
    %937 = vrot.lane.b32.xlu0 %v936, 112
    %v938 = vpop.permute.xlu0 %937
    %s940 = scalar_lea.vmem [#allocation4], 1
    %941 = vst.msk [vmem:[%s940] sm:$0x1] %vm752, %v938
    %v942 = vpack.c.bf16 %v920, %v920
    %v945 = vunpack.c.l.s4 1966171168
    %v946 = vunpack.c.0.s8 %v945
    %v947 = vlaneseq
    %v948 = vshrl.u32 %v947, 7
    %v949 = vsub.s32 %v946, %v948
    %v950 = vrot.slane %v942, %v949
    %v952 = vunpack.c.l.s4 1966171168
    %v953 = vunpack.c.0.s8 %v952
    %v954 = vlaneseq
    %v955 = vshrl.u32 %v954, 7
    %v956 = vsub.s32 %v953, %v955
    %v957 = vrot.slane %v950, %v956
    %958 = vrot.lane.b32.xlu0 %v957, 112
    %v959 = vpop.permute.xlu0 %958
    %s961 = scalar_lea.vmem [#allocation5], 6
    %962 = vst.msk [vmem:[%s961] sm:$0x1] %vm752, %v959
    %963 = vrot.lane.b32.xlu0 %v921, 112
    %v964 = vpop.permute.xlu0 %963
    %v966 = vsel %vm582, %v964, 0
    %968 = vmatprep.subr.bf16.mxu0 0
    %969 = vmatpush1.bf16.msra.mxu0 %v580
    %970 = vmatprep.subr.bf16.mxu0 0
    %971 = vmatpush1.bf16.msra.mxu0 0
    %972 = vmatprep.subr.bf16.mxu0 0
    %973 = vmatpush1.bf16.msra.mxu0 0
    %974 = vmatprep.subr.bf16.mxu0 0
    %975 = vmatpush1.bf16.msra.mxu0 0
    %976 = vmatprep.subr.bf16.mxu0 0
    %977 = vmatpush1.bf16.msra.mxu0 0
    %978 = vmatprep.subr.bf16.mxu0 0
    %979 = vmatpush1.bf16.msra.mxu0 0
    %980 = vmatprep.subr.bf16.mxu0 0
    %981 = vmatpush1.bf16.msra.mxu0 0
    %982 = vmatprep.subr.bf16.mxu0 0
    %983 = vmatpush1.bf16.msra.mxu0 0
    %984 = vmatprep.subr.bf16.mxu0 0
    %985 = vmatpush1.bf16.msra.mxu0 0
    %986 = vmatprep.subr.bf16.mxu0 0
    %987 = vmatpush1.bf16.msra.mxu0 0
    %988 = vmatprep.subr.bf16.mxu0 0
    %989 = vmatpush1.bf16.msra.mxu0 0
    %990 = vmatprep.subr.bf16.mxu0 0
    %991 = vmatpush1.bf16.msra.mxu0 0
    %992 = vmatprep.subr.bf16.mxu0 0
    %993 = vmatpush1.bf16.msra.mxu0 0
    %994 = vmatprep.subr.bf16.mxu0 0
    %995 = vmatpush1.bf16.msra.mxu0 0
    %996 = vmatprep.subr.bf16.mxu0 0
    %997 = vmatpush1.bf16.msra.mxu0 0
    %998 = vmatprep.subr.bf16.mxu0 0
    %999 = vmatpush1.bf16.msra.mxu0 0
    %1000 = vmatprep.mubr.bf16.mxu0 0
    %1001 = vmatmul.mubr.bf16.gmra.mrb[0].mxu0 %v966
    %v1002 = vpop.f32.mrb[0].mxu0
    %v1003 = vadd.f32 %v574, %v1002
    %v1004 = vpop.f32.mrb[0].mxu0
    %v1005 = vpop.f32.mrb[0].mxu0
    %v1006 = vpop.f32.mrb[0].mxu0
    %1007 = vdwg.mxu0
    %1008 = vrot.lane.b32.xlu0 %v942, 112
    %v1009 = vpop.permute.xlu0 %1008
    %v1011 = vsel %vm582, %v1009, 0
    %1013 = vmatprep.subr.bf16.mxu0 0
    %1014 = vmatpush1.bf16.msra.mxu0 %v636
    %1015 = vmatprep.subr.bf16.mxu0 0
    %1016 = vmatpush1.bf16.msra.mxu0 0
    %1017 = vmatprep.subr.bf16.mxu0 0
    %1018 = vmatpush1.bf16.msra.mxu0 0
    %1019 = vmatprep.subr.bf16.mxu0 0
    %1020 = vmatpush1.bf16.msra.mxu0 0
    %1021 = vmatprep.subr.bf16.mxu0 0
    %1022 = vmatpush1.bf16.msra.mxu0 0
    %1023 = vmatprep.subr.bf16.mxu0 0
    %1024 = vmatpush1.bf16.msra.mxu0 0
    %1025 = vmatprep.subr.bf16.mxu0 0
    %1026 = vmatpush1.bf16.msra.mxu0 0
    %1027 = vmatprep.subr.bf16.mxu0 0
    %1028 = vmatpush1.bf16.msra.mxu0 0
    %1029 = vmatprep.subr.bf16.mxu0 0
    %1030 = vmatpush1.bf16.msra.mxu0 0
    %1031 = vmatprep.subr.bf16.mxu0 0
    %1032 = vmatpush1.bf16.msra.mxu0 0
    %1033 = vmatprep.subr.bf16.mxu0 0
    %1034 = vmatpush1.bf16.msra.mxu0 0
    %1035 = vmatprep.subr.bf16.mxu0 0
    %1036 = vmatpush1.bf16.msra.mxu0 0
    %1037 = vmatprep.subr.bf16.mxu0 0
    %1038 = vmatpush1.bf16.msra.mxu0 0
    %1039 = vmatprep.subr.bf16.mxu0 0
    %1040 = vmatpush1.bf16.msra.mxu0 0
    %1041 = vmatprep.subr.bf16.mxu0 0
    %1042 = vmatpush1.bf16.msra.mxu0 0
    %1043 = vmatprep.subr.bf16.mxu0 0
    %1044 = vmatpush1.bf16.msra.mxu0 0
    %1045 = vmatprep.mubr.bf16.mxu0 0
    %1046 = vmatmul.mubr.bf16.gmra.mrb[0].mxu0 %v1011
    %v1047 = vpop.f32.mrb[0].mxu0
    %v1048 = vadd.f32 %v630, %v1047
    %v1049 = vpop.f32.mrb[0].mxu0
    %v1050 = vpop.f32.mrb[0].mxu0
    %v1051 = vpop.f32.mrb[0].mxu0
    %1052 = vdwg.mxu0
    %s1053 = scalar_lea.vmem [#allocation2], 4
    %v1054 = vld [vmem:[%s1053] sm:$0x3]
    %s1055 = scalar_lea.vmem [#allocation3], 10
    %v1056 = vld [vmem:[%s1055] sm:$0x3]
    %v1057 = vadd.f32 %v1054, %v1003
    %v1058 = vxor.u32 %v1057, 2147483648
    %v1059 = vmul.f32 %v1058, 1.442695
    %v1060 = vpow.pop %v1059
    %v1061 = vadd.f32 %v1060, 1.0
    %v1062 = vrcp.pop %v1061
    %v1063 = vmul.f32 1.0, %v1062
    %1065 = vrot.lane.b32.xlu0 %v1003, 96
    %v1066 = vpop.permute.xlu0 %1065
    %v1068 = vmul.f32 %v1063, %v1066
    %1070 = vrot.lane.b32.xlu0 %v1068, 32
    %v1071 = vpop.permute.xlu0 %1070
    %v1073 = vadd.f32 %v1054, %v1071
    %v1074 = vtanh.pop %v1073
    %v1075 = vsub.f32 1.0, %v1063
    %1077 = vrot.lane.b32.xlu0 %v1074, 112
    %v1078 = vpop.permute.xlu0 %1077
    %v1080 = vmul.f32 %v1075, %v1078
    %v1081 = vmul.f32 %v1063, %v894
    %v1082 = vadd.f32 %v1080, %v1081
    %v1083 = vadd.f32 %v1056, %v1048
    %v1084 = vxor.u32 %v1083, 2147483648
    %v1085 = vmul.f32 %v1084, 1.442695
    %v1086 = vpow.pop %v1085
    %v1087 = vadd.f32 %v1086, 1.0
    %v1088 = vrcp.pop %v1087
    %v1089 = vmul.f32 1.0, %v1088
    %1091 = vrot.lane.b32.xlu0 %v1048, 96
    %v1092 = vpop.permute.xlu0 %1091
    %v1094 = vmul.f32 %v1089, %v1092
    %1096 = vrot.lane.b32.xlu0 %v1094, 32
    %v1097 = vpop.permute.xlu0 %1096
    %v1099 = vadd.f32 %v1056, %v1097
    %v1100 = vtanh.pop %v1099
    %v1101 = vsub.f32 1.0, %v1089
    %1103 = vrot.lane.b32.xlu0 %v1100, 112
    %v1104 = vpop.permute.xlu0 %1103
    %v1106 = vmul.f32 %v1101, %v1104
    %v1107 = vmul.f32 %v1089, %v920
    %v1108 = vadd.f32 %v1106, %v1107
    %v1109 = vpack.c.bf16 %v1082, %v1082
    %v1112 = vunpack.c.l.s4 1966171168
    %v1113 = vunpack.c.0.s8 %v1112
    %v1114 = vlaneseq
    %v1115 = vshrl.u32 %v1114, 7
    %v1116 = vsub.s32 %v1113, %v1115
    %v1117 = vrot.slane %v1109, %v1116
    %v1119 = vunpack.c.l.s4 1966171168
    %v1120 = vunpack.c.0.s8 %v1119
    %v1121 = vlaneseq
    %v1122 = vshrl.u32 %v1121, 7
    %v1123 = vsub.s32 %v1120, %v1122
    %v1124 = vrot.slane %v1117, %v1123
    %1125 = vrot.lane.b32.xlu0 %v1124, 112
    %v1126 = vpop.permute.xlu0 %1125
    %s1128 = scalar_lea.vmem [#allocation4], 2
    %1129 = vst.msk [vmem:[%s1128] sm:$0x1] %vm752, %v1126
    %v1130 = vpack.c.bf16 %v1108, %v1108
    %v1133 = vunpack.c.l.s4 1966171168
    %v1134 = vunpack.c.0.s8 %v1133
    %v1135 = vlaneseq
    %v1136 = vshrl.u32 %v1135, 7
    %v1137 = vsub.s32 %v1134, %v1136
    %v1138 = vrot.slane %v1130, %v1137
    %v1140 = vunpack.c.l.s4 1966171168
    %v1141 = vunpack.c.0.s8 %v1140
    %v1142 = vlaneseq
    %v1143 = vshrl.u32 %v1142, 7
    %v1144 = vsub.s32 %v1141, %v1143
    %v1145 = vrot.slane %v1138, %v1144
    %1146 = vrot.lane.b32.xlu0 %v1145, 112
    %v1147 = vpop.permute.xlu0 %1146
    %s1149 = scalar_lea.vmem [#allocation5], 5
    %1150 = vst.msk [vmem:[%s1149] sm:$0x1] %vm752, %v1147
    %1151 = vrot.lane.b32.xlu0 %v1109, 112
    %v1152 = vpop.permute.xlu0 %1151
    %v1154 = vsel %vm582, %v1152, 0
    %1156 = vmatprep.subr.bf16.mxu0 0
    %1157 = vmatpush1.bf16.msra.mxu0 %v580
    %1158 = vmatprep.subr.bf16.mxu0 0
    %1159 = vmatpush1.bf16.msra.mxu0 0
    %1160 = vmatprep.subr.bf16.mxu0 0
    %1161 = vmatpush1.bf16.msra.mxu0 0
    %1162 = vmatprep.subr.bf16.mxu0 0
    %1163 = vmatpush1.bf16.msra.mxu0 0
    %1164 = vmatprep.subr.bf16.mxu0 0
    %1165 = vmatpush1.bf16.msra.mxu0 0
    %1166 = vmatprep.subr.bf16.mxu0 0
    %1167 = vmatpush1.bf16.msra.mxu0 0
    %1168 = vmatprep.subr.bf16.mxu0 0
    %1169 = vmatpush1.bf16.msra.mxu0 0
    %1170 = vmatprep.subr.bf16.mxu0 0
    %1171 = vmatpush1.bf16.msra.mxu0 0
    %1172 = vmatprep.subr.bf16.mxu0 0
    %1173 = vmatpush1.bf16.msra.mxu0 0
    %1174 = vmatprep.subr.bf16.mxu0 0
    %1175 = vmatpush1.bf16.msra.mxu0 0
    %1176 = vmatprep.subr.bf16.mxu0 0
    %1177 = vmatpush1.bf16.msra.mxu0 0
    %1178 = vmatprep.subr.bf16.mxu0 0
    %1179 = vmatpush1.bf16.msra.mxu0 0
    %1180 = vmatprep.subr.bf16.mxu0 0
    %1181 = vmatpush1.bf16.msra.mxu0 0
    %1182 = vmatprep.subr.bf16.mxu0 0
    %1183 = vmatpush1.bf16.msra.mxu0 0
    %1184 = vmatprep.subr.bf16.mxu0 0
    %1185 = vmatpush1.bf16.msra.mxu0 0
    %1186 = vmatprep.subr.bf16.mxu0 0
    %1187 = vmatpush1.bf16.msra.mxu0 0
    %1188 = vmatprep.mubr.bf16.mxu0 0
    %1189 = vmatmul.mubr.bf16.gmra.mrb[0].mxu0 %v1154
    %v1190 = vpop.f32.mrb[0].mxu0
    %v1191 = vadd.f32 %v574, %v1190
    %v1192 = vpop.f32.mrb[0].mxu0
    %v1193 = vpop.f32.mrb[0].mxu0
    %v1194 = vpop.f32.mrb[0].mxu0
    %1195 = vdwg.mxu0
    %1196 = vrot.lane.b32.xlu0 %v1130, 112
    %v1197 = vpop.permute.xlu0 %1196
    %v1199 = vsel %vm582, %v1197, 0
    %1201 = vmatprep.subr.bf16.mxu0 0
    %1202 = vmatpush1.bf16.msra.mxu0 %v636
    %1203 = vmatprep.subr.bf16.mxu0 0
    %1204 = vmatpush1.bf16.msra.mxu0 0
    %1205 = vmatprep.subr.bf16.mxu0 0
    %1206 = vmatpush1.bf16.msra.mxu0 0
    %1207 = vmatprep.subr.bf16.mxu0 0
    %1208 = vmatpush1.bf16.msra.mxu0 0
    %1209 = vmatprep.subr.bf16.mxu0 0
    %1210 = vmatpush1.bf16.msra.mxu0 0
    %1211 = vmatprep.subr.bf16.mxu0 0
    %1212 = vmatpush1.bf16.msra.mxu0 0
    %1213 = vmatprep.subr.bf16.mxu0 0
    %1214 = vmatpush1.bf16.msra.mxu0 0
    %1215 = vmatprep.subr.bf16.mxu0 0
    %1216 = vmatpush1.bf16.msra.mxu0 0
    %1217 = vmatprep.subr.bf16.mxu0 0
    %1218 = vmatpush1.bf16.msra.mxu0 0
    %1219 = vmatprep.subr.bf16.mxu0 0
    %1220 = vmatpush1.bf16.msra.mxu0 0
    %1221 = vmatprep.subr.bf16.mxu0 0
    %1222 = vmatpush1.bf16.msra.mxu0 0
    %1223 = vmatprep.subr.bf16.mxu0 0
    %1224 = vmatpush1.bf16.msra.mxu0 0
    %1225 = vmatprep.subr.bf16.mxu0 0
    %1226 = vmatpush1.bf16.msra.mxu0 0
    %1227 = vmatprep.subr.bf16.mxu0 0
    %1228 = vmatpush1.bf16.msra.mxu0 0
    %1229 = vmatprep.subr.bf16.mxu0 0
    %1230 = vmatpush1.bf16.msra.mxu0 0
    %1231 = vmatprep.subr.bf16.mxu0 0
    %1232 = vmatpush1.bf16.msra.mxu0 0
    %1233 = vmatprep.mubr.bf16.mxu0 0
    %1234 = vmatmul.mubr.bf16.gmra.mrb[0].mxu0 %v1199
    %v1235 = vpop.f32.mrb[0].mxu0
    %v1236 = vadd.f32 %v630, %v1235
    %v1237 = vpop.f32.mrb[0].mxu0
    %v1238 = vpop.f32.mrb[0].mxu0
    %v1239 = vpop.f32.mrb[0].mxu0
    %1240 = vdwg.mxu0
    %s1241 = scalar_lea.vmem [#allocation2], 6
    %v1242 = vld [vmem:[%s1241] sm:$0x3]
    %s1243 = scalar_lea.vmem [#allocation3], 8
    %v1244 = vld [vmem:[%s1243] sm:$0x3]
    %v1245 = vadd.f32 %v1242, %v1191
    %v1246 = vxor.u32 %v1245, 2147483648
    %v1247 = vmul.f32 %v1246, 1.442695
    %v1248 = vpow.pop %v1247
    %v1249 = vadd.f32 %v1248, 1.0
    %v1250 = vrcp.pop %v1249
    %v1251 = vmul.f32 1.0, %v1250
    %1253 = vrot.lane.b32.xlu0 %v1191, 96
    %v1254 = vpop.permute.xlu0 %1253
    %v1256 = vmul.f32 %v1251, %v1254
    %1258 = vrot.lane.b32.xlu0 %v1256, 32
    %v1259 = vpop.permute.xlu0 %1258
    %v1261 = vadd.f32 %v1242, %v1259
    %v1262 = vtanh.pop %v1261
    %v1263 = vsub.f32 1.0, %v1251
    %1265 = vrot.lane.b32.xlu0 %v1262, 112
    %v1266 = vpop.permute.xlu0 %1265
    %v1268 = vmul.f32 %v1263, %v1266
    %v1269 = vmul.f32 %v1251, %v1082
    %v1270 = vadd.f32 %v1268, %v1269
    %v1271 = vadd.f32 %v1244, %v1236
    %v1272 = vxor.u32 %v1271, 2147483648
    %v1273 = vmul.f32 %v1272, 1.442695
    %v1274 = vpow.pop %v1273
    %v1275 = vadd.f32 %v1274, 1.0
    %v1276 = vrcp.pop %v1275
    %v1277 = vmul.f32 1.0, %v1276
    %1279 = vrot.lane.b32.xlu0 %v1236, 96
    %v1280 = vpop.permute.xlu0 %1279
    %v1282 = vmul.f32 %v1277, %v1280
    %1284 = vrot.lane.b32.xlu0 %v1282, 32
    %v1285 = vpop.permute.xlu0 %1284
    %v1287 = vadd.f32 %v1244, %v1285
    %v1288 = vtanh.pop %v1287
    %v1289 = vsub.f32 1.0, %v1277
    %1291 = vrot.lane.b32.xlu0 %v1288, 112
    %v1292 = vpop.permute.xlu0 %1291
    %v1294 = vmul.f32 %v1289, %v1292
    %v1295 = vmul.f32 %v1277, %v1108
    %v1296 = vadd.f32 %v1294, %v1295
    %v1297 = vpack.c.bf16 %v1270, %v1270
    %v1300 = vunpack.c.l.s4 1966171168
    %v1301 = vunpack.c.0.s8 %v1300
    %v1302 = vlaneseq
    %v1303 = vshrl.u32 %v1302, 7
    %v1304 = vsub.s32 %v1301, %v1303
    %v1305 = vrot.slane %v1297, %v1304
    %v1307 = vunpack.c.l.s4 1966171168
    %v1308 = vunpack.c.0.s8 %v1307
    %v1309 = vlaneseq
    %v1310 = vshrl.u32 %v1309, 7
    %v1311 = vsub.s32 %v1308, %v1310
    %v1312 = vrot.slane %v1305, %v1311
    %1313 = vrot.lane.b32.xlu0 %v1312, 112
    %v1314 = vpop.permute.xlu0 %1313
    %s1316 = scalar_lea.vmem [#allocation4], 3
    %1317 = vst.msk [vmem:[%s1316] sm:$0x1] %vm752, %v1314
    %v1318 = vpack.c.bf16 %v1296, %v1296
    %v1321 = vunpack.c.l.s4 1966171168
    %v1322 = vunpack.c.0.s8 %v1321
    %v1323 = vlaneseq
    %v1324 = vshrl.u32 %v1323, 7
    %v1325 = vsub.s32 %v1322, %v1324
    %v1326 = vrot.slane %v1318, %v1325
    %v1328 = vunpack.c.l.s4 1966171168
    %v1329 = vunpack.c.0.s8 %v1328
    %v1330 = vlaneseq
    %v1331 = vshrl.u32 %v1330, 7
    %v1332 = vsub.s32 %v1329, %v1331
    %v1333 = vrot.slane %v1326, %v1332
    %1334 = vrot.lane.b32.xlu0 %v1333, 112
    %v1335 = vpop.permute.xlu0 %1334
    %s1337 = scalar_lea.vmem [#allocation5], 4
    %1338 = vst.msk [vmem:[%s1337] sm:$0x1] %vm752, %v1335
    %1339 = vrot.lane.b32.xlu0 %v1297, 112
    %v1340 = vpop.permute.xlu0 %1339
    %v1342 = vsel %vm582, %v1340, 0
    %1344 = vmatprep.subr.bf16.mxu0 0
    %1345 = vmatpush1.bf16.msra.mxu0 %v580
    %1346 = vmatprep.subr.bf16.mxu0 0
    %1347 = vmatpush1.bf16.msra.mxu0 0
    %1348 = vmatprep.subr.bf16.mxu0 0
    %1349 = vmatpush1.bf16.msra.mxu0 0
    %1350 = vmatprep.subr.bf16.mxu0 0
    %1351 = vmatpush1.bf16.msra.mxu0 0
    %1352 = vmatprep.subr.bf16.mxu0 0
    %1353 = vmatpush1.bf16.msra.mxu0 0
    %1354 = vmatprep.subr.bf16.mxu0 0
    %1355 = vmatpush1.bf16.msra.mxu0 0
    %1356 = vmatprep.subr.bf16.mxu0 0
    %1357 = vmatpush1.bf16.msra.mxu0 0
    %1358 = vmatprep.subr.bf16.mxu0 0
    %1359 = vmatpush1.bf16.msra.mxu0 0
    %1360 = vmatprep.subr.bf16.mxu0 0
    %1361 = vmatpush1.bf16.msra.mxu0 0
    %1362 = vmatprep.subr.bf16.mxu0 0
    %1363 = vmatpush1.bf16.msra.mxu0 0
    %1364 = vmatprep.subr.bf16.mxu0 0
    %1365 = vmatpush1.bf16.msra.mxu0 0
    %1366 = vmatprep.subr.bf16.mxu0 0
    %1367 = vmatpush1.bf16.msra.mxu0 0
    %1368 = vmatprep.subr.bf16.mxu0 0
    %1369 = vmatpush1.bf16.msra.mxu0 0
    %1370 = vmatprep.subr.bf16.mxu0 0
    %1371 = vmatpush1.bf16.msra.mxu0 0
    %1372 = vmatprep.subr.bf16.mxu0 0
    %1373 = vmatpush1.bf16.msra.mxu0 0
    %1374 = vmatprep.subr.bf16.mxu0 0
    %1375 = vmatpush1.bf16.msra.mxu0 0
    %1376 = vmatprep.mubr.bf16.mxu0 0
    %1377 = vmatmul.mubr.bf16.gmra.mrb[0].mxu0 %v1342
    %v1378 = vpop.f32.mrb[0].mxu0
    %v1379 = vadd.f32 %v574, %v1378
    %v1380 = vpop.f32.mrb[0].mxu0
    %v1381 = vpop.f32.mrb[0].mxu0
    %v1382 = vpop.f32.mrb[0].mxu0
    %1383 = vdwg.mxu0
    %1384 = vrot.lane.b32.xlu0 %v1318, 112
    %v1385 = vpop.permute.xlu0 %1384
    %v1387 = vsel %vm582, %v1385, 0
    %1389 = vmatprep.subr.bf16.mxu0 0
    %1390 = vmatpush1.bf16.msra.mxu0 %v636
    %1391 = vmatprep.subr.bf16.mxu0 0
    %1392 = vmatpush1.bf16.msra.mxu0 0
    %1393 = vmatprep.subr.bf16.mxu0 0
    %1394 = vmatpush1.bf16.msra.mxu0 0
    %1395 = vmatprep.subr.bf16.mxu0 0
    %1396 = vmatpush1.bf16.msra.mxu0 0
    %1397 = vmatprep.subr.bf16.mxu0 0
    %1398 = vmatpush1.bf16.msra.mxu0 0
    %1399 = vmatprep.subr.bf16.mxu0 0
    %1400 = vmatpush1.bf16.msra.mxu0 0
    %1401 = vmatprep.subr.bf16.mxu0 0
    %1402 = vmatpush1.bf16.msra.mxu0 0
    %1403 = vmatprep.subr.bf16.mxu0 0
    %1404 = vmatpush1.bf16.msra.mxu0 0
    %1405 = vmatprep.subr.bf16.mxu0 0
    %1406 = vmatpush1.bf16.msra.mxu0 0
    %1407 = vmatprep.subr.bf16.mxu0 0
    %1408 = vmatpush1.bf16.msra.mxu0 0
    %1409 = vmatprep.subr.bf16.mxu0 0
    %1410 = vmatpush1.bf16.msra.mxu0 0
    %1411 = vmatprep.subr.bf16.mxu0 0
    %1412 = vmatpush1.bf16.msra.mxu0 0
    %1413 = vmatprep.subr.bf16.mxu0 0
    %1414 = vmatpush1.bf16.msra.mxu0 0
    %1415 = vmatprep.subr.bf16.mxu0 0
    %1416 = vmatpush1.bf16.msra.mxu0 0
    %1417 = vmatprep.subr.bf16.mxu0 0
    %1418 = vmatpush1.bf16.msra.mxu0 0
    %1419 = vmatprep.subr.bf16.mxu0 0
    %1420 = vmatpush1.bf16.msra.mxu0 0
    %1421 = vmatprep.mubr.bf16.mxu0 0
    %1422 = vmatmul.mubr.bf16.gmra.mrb[0].mxu0 %v1387
    %v1423 = vpop.f32.mrb[0].mxu0
    %v1424 = vadd.f32 %v630, %v1423
    %v1425 = vpop.f32.mrb[0].mxu0
    %v1426 = vpop.f32.mrb[0].mxu0
    %v1427 = vpop.f32.mrb[0].mxu0
    %1428 = vdwg.mxu0
    %s1429 = scalar_lea.vmem [#allocation2], 8
    %v1430 = vld [vmem:[%s1429] sm:$0x3]
    %s1431 = scalar_lea.vmem [#allocation3], 6
    %v1432 = vld [vmem:[%s1431] sm:$0x3]
    %v1433 = vadd.f32 %v1430, %v1379
    %v1434 = vxor.u32 %v1433, 2147483648
    %v1435 = vmul.f32 %v1434, 1.442695
    %v1436 = vpow.pop %v1435
    %v1437 = vadd.f32 %v1436, 1.0
    %v1438 = vrcp.pop %v1437
    %v1439 = vmul.f32 1.0, %v1438
    %1441 = vrot.lane.b32.xlu0 %v1379, 96
    %v1442 = vpop.permute.xlu0 %1441
    %v1444 = vmul.f32 %v1439, %v1442
    %1446 = vrot.lane.b32.xlu0 %v1444, 32
    %v1447 = vpop.permute.xlu0 %1446
    %v1449 = vadd.f32 %v1430, %v1447
    %v1450 = vtanh.pop %v1449
    %v1451 = vsub.f32 1.0, %v1439
    %1453 = vrot.lane.b32.xlu0 %v1450, 112
    %v1454 = vpop.permute.xlu0 %1453
    %v1456 = vmul.f32 %v1451, %v1454
    %v1457 = vmul.f32 %v1439, %v1270
    %v1458 = vadd.f32 %v1456, %v1457
    %v1459 = vadd.f32 %v1432, %v1424
    %v1460 = vxor.u32 %v1459, 2147483648
    %v1461 = vmul.f32 %v1460, 1.442695
    %v1462 = vpow.pop %v1461
    %v1463 = vadd.f32 %v1462, 1.0
    %v1464 = vrcp.pop %v1463
    %v1465 = vmul.f32 1.0, %v1464
    %1467 = vrot.lane.b32.xlu0 %v1424, 96
    %v1468 = vpop.permute.xlu0 %1467
    %v1470 = vmul.f32 %v1465, %v1468
    %1472 = vrot.lane.b32.xlu0 %v1470, 32
    %v1473 = vpop.permute.xlu0 %1472
    %v1475 = vadd.f32 %v1432, %v1473
    %v1476 = vtanh.pop %v1475
    %v1477 = vsub.f32 1.0, %v1465
    %1479 = vrot.lane.b32.xlu0 %v1476, 112
    %v1480 = vpop.permute.xlu0 %1479
    %v1482 = vmul.f32 %v1477, %v1480
    %v1483 = vmul.f32 %v1465, %v1296
    %v1484 = vadd.f32 %v1482, %v1483
    %v1485 = vpack.c.bf16 %v1458, %v1458
    %v1488 = vunpack.c.l.s4 1966171168
    %v1489 = vunpack.c.0.s8 %v1488
    %v1490 = vlaneseq
    %v1491 = vshrl.u32 %v1490, 7
    %v1492 = vsub.s32 %v1489, %v1491
    %v1493 = vrot.slane %v1485, %v1492
    %v1495 = vunpack.c.l.s4 1966171168
    %v1496 = vunpack.c.0.s8 %v1495
    %v1497 = vlaneseq
    %v1498 = vshrl.u32 %v1497, 7
    %v1499 = vsub.s32 %v1496, %v1498
    %v1500 = vrot.slane %v1493, %v1499
    %1501 = vrot.lane.b32.xlu0 %v1500, 112
    %v1502 = vpop.permute.xlu0 %1501
    %s1504 = scalar_lea.vmem [#allocation4], 4
    %1505 = vst.msk [vmem:[%s1504] sm:$0x1] %vm752, %v1502
    %v1506 = vpack.c.bf16 %v1484, %v1484
    %v1509 = vunpack.c.l.s4 1966171168
    %v1510 = vunpack.c.0.s8 %v1509
    %v1511 = vlaneseq
    %v1512 = vshrl.u32 %v1511, 7
    %v1513 = vsub.s32 %v1510, %v1512
    %v1514 = vrot.slane %v1506, %v1513
    %v1516 = vunpack.c.l.s4 1966171168
    %v1517 = vunpack.c.0.s8 %v1516
    %v1518 = vlaneseq
    %v1519 = vshrl.u32 %v1518, 7
    %v1520 = vsub.s32 %v1517, %v1519
    %v1521 = vrot.slane %v1514, %v1520
    %1522 = vrot.lane.b32.xlu0 %v1521, 112
    %v1523 = vpop.permute.xlu0 %1522
    %s1525 = scalar_lea.vmem [#allocation5], 3
    %1526 = vst.msk [vmem:[%s1525] sm:$0x1] %vm752, %v1523
    %1527 = vrot.lane.b32.xlu0 %v1485, 112
    %v1528 = vpop.permute.xlu0 %1527
    %v1530 = vsel %vm582, %v1528, 0
    %1532 = vmatprep.subr.bf16.mxu0 0
    %1533 = vmatpush1.bf16.msra.mxu0 %v580
    %1534 = vmatprep.subr.bf16.mxu0 0
    %1535 = vmatpush1.bf16.msra.mxu0 0
    %1536 = vmatprep.subr.bf16.mxu0 0
    %1537 = vmatpush1.bf16.msra.mxu0 0
    %1538 = vmatprep.subr.bf16.mxu0 0
    %1539 = vmatpush1.bf16.msra.mxu0 0
    %1540 = vmatprep.subr.bf16.mxu0 0
    %1541 = vmatpush1.bf16.msra.mxu0 0
    %1542 = vmatprep.subr.bf16.mxu0 0
    %1543 = vmatpush1.bf16.msra.mxu0 0
    %1544 = vmatprep.subr.bf16.mxu0 0
    %1545 = vmatpush1.bf16.msra.mxu0 0
    %1546 = vmatprep.subr.bf16.mxu0 0
    %1547 = vmatpush1.bf16.msra.mxu0 0
    %1548 = vmatprep.subr.bf16.mxu0 0
    %1549 = vmatpush1.bf16.msra.mxu0 0
    %1550 = vmatprep.subr.bf16.mxu0 0
    %1551 = vmatpush1.bf16.msra.mxu0 0
    %1552 = vmatprep.subr.bf16.mxu0 0
    %1553 = vmatpush1.bf16.msra.mxu0 0
    %1554 = vmatprep.subr.bf16.mxu0 0
    %1555 = vmatpush1.bf16.msra.mxu0 0
    %1556 = vmatprep.subr.bf16.mxu0 0
    %1557 = vmatpush1.bf16.msra.mxu0 0
    %1558 = vmatprep.subr.bf16.mxu0 0
    %1559 = vmatpush1.bf16.msra.mxu0 0
    %1560 = vmatprep.subr.bf16.mxu0 0
    %1561 = vmatpush1.bf16.msra.mxu0 0
    %1562 = vmatprep.subr.bf16.mxu0 0
    %1563 = vmatpush1.bf16.msra.mxu0 0
    %1564 = vmatprep.mubr.bf16.mxu0 0
    %1565 = vmatmul.mubr.bf16.gmra.mrb[0].mxu0 %v1530
    %v1566 = vpop.f32.mrb[0].mxu0
    %v1567 = vadd.f32 %v574, %v1566
    %v1568 = vpop.f32.mrb[0].mxu0
    %v1569 = vpop.f32.mrb[0].mxu0
    %v1570 = vpop.f32.mrb[0].mxu0
    %1571 = vdwg.mxu0
    %1572 = vrot.lane.b32.xlu0 %v1506, 112
    %v1573 = vpop.permute.xlu0 %1572
    %v1575 = vsel %vm582, %v1573, 0
    %1577 = vmatprep.subr.bf16.mxu0 0
    %1578 = vmatpush1.bf16.msra.mxu0 %v636
    %1579 = vmatprep.subr.bf16.mxu0 0
    %1580 = vmatpush1.bf16.msra.mxu0 0
    %1581 = vmatprep.subr.bf16.mxu0 0
    %1582 = vmatpush1.bf16.msra.mxu0 0
    %1583 = vmatprep.subr.bf16.mxu0 0
    %1584 = vmatpush1.bf16.msra.mxu0 0
    %1585 = vmatprep.subr.bf16.mxu0 0
    %1586 = vmatpush1.bf16.msra.mxu0 0
    %1587 = vmatprep.subr.bf16.mxu0 0
    %1588 = vmatpush1.bf16.msra.mxu0 0
    %1589 = vmatprep.subr.bf16.mxu0 0
    %1590 = vmatpush1.bf16.msra.mxu0 0
    %1591 = vmatprep.subr.bf16.mxu0 0
    %1592 = vmatpush1.bf16.msra.mxu0 0
    %1593 = vmatprep.subr.bf16.mxu0 0
    %1594 = vmatpush1.bf16.msra.mxu0 0
    %1595 = vmatprep.subr.bf16.mxu0 0
    %1596 = vmatpush1.bf16.msra.mxu0 0
    %1597 = vmatprep.subr.bf16.mxu0 0
    %1598 = vmatpush1.bf16.msra.mxu0 0
    %1599 = vmatprep.subr.bf16.mxu0 0
    %1600 = vmatpush1.bf16.msra.mxu0 0
    %1601 = vmatprep.subr.bf16.mxu0 0
    %1602 = vmatpush1.bf16.msra.mxu0 0
    %1603 = vmatprep.subr.bf16.mxu0 0
    %1604 = vmatpush1.bf16.msra.mxu0 0
    %1605 = vmatprep.subr.bf16.mxu0 0
    %1606 = vmatpush1.bf16.msra.mxu0 0
    %1607 = vmatprep.subr.bf16.mxu0 0
    %1608 = vmatpush1.bf16.msra.mxu0 0
    %1609 = vmatprep.mubr.bf16.mxu0 0
    %1610 = vmatmul.mubr.bf16.gmra.mrb[0].mxu0 %v1575
    %v1611 = vpop.f32.mrb[0].mxu0
    %v1612 = vadd.f32 %v630, %v1611
    %v1613 = vpop.f32.mrb[0].mxu0
    %v1614 = vpop.f32.mrb[0].mxu0
    %v1615 = vpop.f32.mrb[0].mxu0
    %1616 = vdwg.mxu0
    %s1617 = scalar_lea.vmem [#allocation2], 10
    %v1618 = vld [vmem:[%s1617] sm:$0x3]
    %s1619 = scalar_lea.vmem [#allocation3], 4
    %v1620 = vld [vmem:[%s1619] sm:$0x3]
    %v1621 = vadd.f32 %v1618, %v1567
    %v1622 = vxor.u32 %v1621, 2147483648
    %v1623 = vmul.f32 %v1622, 1.442695
    %v1624 = vpow.pop %v1623
    %v1625 = vadd.f32 %v1624, 1.0
    %v1626 = vrcp.pop %v1625
    %v1627 = vmul.f32 1.0, %v1626
    %1629 = vrot.lane.b32.xlu0 %v1567, 96
    %v1630 = vpop.permute.xlu0 %1629
    %v1632 = vmul.f32 %v1627, %v1630
    %1634 = vrot.lane.b32.xlu0 %v1632, 32
    %v1635 = vpop.permute.xlu0 %1634
    %v1637 = vadd.f32 %v1618, %v1635
    %v1638 = vtanh.pop %v1637
    %v1639 = vsub.f32 1.0, %v1627
    %1641 = vrot.lane.b32.xlu0 %v1638, 112
    %v1642 = vpop.permute.xlu0 %1641
    %v1644 = vmul.f32 %v1639, %v1642
    %v1645 = vmul.f32 %v1627, %v1458
    %v1646 = vadd.f32 %v1644, %v1645
    %v1647 = vadd.f32 %v1620, %v1612
    %v1648 = vxor.u32 %v1647, 2147483648
    %v1649 = vmul.f32 %v1648, 1.442695
    %v1650 = vpow.pop %v1649
    %v1651 = vadd.f32 %v1650, 1.0
    %v1652 = vrcp.pop %v1651
    %v1653 = vmul.f32 1.0, %v1652
    %1655 = vrot.lane.b32.xlu0 %v1612, 96
    %v1656 = vpop.permute.xlu0 %1655
    %v1658 = vmul.f32 %v1653, %v1656
    %1660 = vrot.lane.b32.xlu0 %v1658, 32
    %v1661 = vpop.permute.xlu0 %1660
    %v1663 = vadd.f32 %v1620, %v1661
    %v1664 = vtanh.pop %v1663
    %v1665 = vsub.f32 1.0, %v1653
    %1667 = vrot.lane.b32.xlu0 %v1664, 112
    %v1668 = vpop.permute.xlu0 %1667
    %v1670 = vmul.f32 %v1665, %v1668
    %v1671 = vmul.f32 %v1653, %v1484
    %v1672 = vadd.f32 %v1670, %v1671
    %v1673 = vpack.c.bf16 %v1646, %v1646
    %v1676 = vunpack.c.l.s4 1966171168
    %v1677 = vunpack.c.0.s8 %v1676
    %v1678 = vlaneseq
    %v1679 = vshrl.u32 %v1678, 7
    %v1680 = vsub.s32 %v1677, %v1679
    %v1681 = vrot.slane %v1673, %v1680
    %v1683 = vunpack.c.l.s4 1966171168
    %v1684 = vunpack.c.0.s8 %v1683
    %v1685 = vlaneseq
    %v1686 = vshrl.u32 %v1685, 7
    %v1687 = vsub.s32 %v1684, %v1686
    %v1688 = vrot.slane %v1681, %v1687
    %1689 = vrot.lane.b32.xlu0 %v1688, 112
    %v1690 = vpop.permute.xlu0 %1689
    %s1692 = scalar_lea.vmem [#allocation4], 5
    %1693 = vst.msk [vmem:[%s1692] sm:$0x1] %vm752, %v1690
    %v1694 = vpack.c.bf16 %v1672, %v1672
    %v1697 = vunpack.c.l.s4 1966171168
    %v1698 = vunpack.c.0.s8 %v1697
    %v1699 = vlaneseq
    %v1700 = vshrl.u32 %v1699, 7
    %v1701 = vsub.s32 %v1698, %v1700
    %v1702 = vrot.slane %v1694, %v1701
    %v1704 = vunpack.c.l.s4 1966171168
    %v1705 = vunpack.c.0.s8 %v1704
    %v1706 = vlaneseq
    %v1707 = vshrl.u32 %v1706, 7
    %v1708 = vsub.s32 %v1705, %v1707
    %v1709 = vrot.slane %v1702, %v1708
    %1710 = vrot.lane.b32.xlu0 %v1709, 112
    %v1711 = vpop.permute.xlu0 %1710
    %s1713 = scalar_lea.vmem [#allocation5], 2
    %1714 = vst.msk [vmem:[%s1713] sm:$0x1] %vm752, %v1711
    %1715 = vrot.lane.b32.xlu0 %v1673, 112
    %v1716 = vpop.permute.xlu0 %1715
    %v1718 = vsel %vm582, %v1716, 0
    %1720 = vmatprep.subr.bf16.mxu0 0
    %1721 = vmatpush1.bf16.msra.mxu0 %v580
    %1722 = vmatprep.subr.bf16.mxu0 0
    %1723 = vmatpush1.bf16.msra.mxu0 0
    %1724 = vmatprep.subr.bf16.mxu0 0
    %1725 = vmatpush1.bf16.msra.mxu0 0
    %1726 = vmatprep.subr.bf16.mxu0 0
    %1727 = vmatpush1.bf16.msra.mxu0 0
    %1728 = vmatprep.subr.bf16.mxu0 0
    %1729 = vmatpush1.bf16.msra.mxu0 0
    %1730 = vmatprep.subr.bf16.mxu0 0
    %1731 = vmatpush1.bf16.msra.mxu0 0
    %1732 = vmatprep.subr.bf16.mxu0 0
    %1733 = vmatpush1.bf16.msra.mxu0 0
    %1734 = vmatprep.subr.bf16.mxu0 0
    %1735 = vmatpush1.bf16.msra.mxu0 0
    %1736 = vmatprep.subr.bf16.mxu0 0
    %1737 = vmatpush1.bf16.msra.mxu0 0
    %1738 = vmatprep.subr.bf16.mxu0 0
    %1739 = vmatpush1.bf16.msra.mxu0 0
    %1740 = vmatprep.subr.bf16.mxu0 0
    %1741 = vmatpush1.bf16.msra.mxu0 0
    %1742 = vmatprep.subr.bf16.mxu0 0
    %1743 = vmatpush1.bf16.msra.mxu0 0
    %1744 = vmatprep.subr.bf16.mxu0 0
    %1745 = vmatpush1.bf16.msra.mxu0 0
    %1746 = vmatprep.subr.bf16.mxu0 0
    %1747 = vmatpush1.bf16.msra.mxu0 0
    %1748 = vmatprep.subr.bf16.mxu0 0
    %1749 = vmatpush1.bf16.msra.mxu0 0
    %1750 = vmatprep.subr.bf16.mxu0 0
    %1751 = vmatpush1.bf16.msra.mxu0 0
    %1752 = vmatprep.mubr.bf16.mxu0 0
    %1753 = vmatmul.mubr.bf16.gmra.mrb[0].mxu0 %v1718
    %v1754 = vpop.f32.mrb[0].mxu0
    %v1755 = vadd.f32 %v574, %v1754
    %v1756 = vpop.f32.mrb[0].mxu0
    %v1757 = vpop.f32.mrb[0].mxu0
    %v1758 = vpop.f32.mrb[0].mxu0
    %1759 = vdwg.mxu0
    %1760 = vrot.lane.b32.xlu0 %v1694, 112
    %v1761 = vpop.permute.xlu0 %1760
    %v1763 = vsel %vm582, %v1761, 0
    %1765 = vmatprep.subr.bf16.mxu0 0
    %1766 = vmatpush1.bf16.msra.mxu0 %v636
    %1767 = vmatprep.subr.bf16.mxu0 0
    %1768 = vmatpush1.bf16.msra.mxu0 0
    %1769 = vmatprep.subr.bf16.mxu0 0
    %1770 = vmatpush1.bf16.msra.mxu0 0
    %1771 = vmatprep.subr.bf16.mxu0 0
    %1772 = vmatpush1.bf16.msra.mxu0 0
    %1773 = vmatprep.subr.bf16.mxu0 0
    %1774 = vmatpush1.bf16.msra.mxu0 0
    %1775 = vmatprep.subr.bf16.mxu0 0
    %1776 = vmatpush1.bf16.msra.mxu0 0
    %1777 = vmatprep.subr.bf16.mxu0 0
    %1778 = vmatpush1.bf16.msra.mxu0 0
    %1779 = vmatprep.subr.bf16.mxu0 0
    %1780 = vmatpush1.bf16.msra.mxu0 0
    %1781 = vmatprep.subr.bf16.mxu0 0
    %1782 = vmatpush1.bf16.msra.mxu0 0
    %1783 = vmatprep.subr.bf16.mxu0 0
    %1784 = vmatpush1.bf16.msra.mxu0 0
    %1785 = vmatprep.subr.bf16.mxu0 0
    %1786 = vmatpush1.bf16.msra.mxu0 0
    %1787 = vmatprep.subr.bf16.mxu0 0
    %1788 = vmatpush1.bf16.msra.mxu0 0
    %1789 = vmatprep.subr.bf16.mxu0 0
    %1790 = vmatpush1.bf16.msra.mxu0 0
    %1791 = vmatprep.subr.bf16.mxu0 0
    %1792 = vmatpush1.bf16.msra.mxu0 0
    %1793 = vmatprep.subr.bf16.mxu0 0
    %1794 = vmatpush1.bf16.msra.mxu0 0
    %1795 = vmatprep.subr.bf16.mxu0 0
    %1796 = vmatpush1.bf16.msra.mxu0 0
    %1797 = vmatprep.mubr.bf16.mxu0 0
    %1798 = vmatmul.mubr.bf16.gmra.mrb[0].mxu0 %v1763
    %v1799 = vpop.f32.mrb[0].mxu0
    %v1800 = vadd.f32 %v630, %v1799
    %v1801 = vpop.f32.mrb[0].mxu0
    %v1802 = vpop.f32.mrb[0].mxu0
    %v1803 = vpop.f32.mrb[0].mxu0
    %1804 = vdwg.mxu0
    %s1805 = scalar_lea.vmem [#allocation2], 12
    %v1806 = vld [vmem:[%s1805] sm:$0x3]
    %s1807 = scalar_lea.vmem [#allocation3], 2
    %v1808 = vld [vmem:[%s1807] sm:$0x3]
    %v1809 = vadd.f32 %v1806, %v1755
    %v1810 = vxor.u32 %v1809, 2147483648
    %v1811 = vmul.f32 %v1810, 1.442695
    %v1812 = vpow.pop %v1811
    %v1813 = vadd.f32 %v1812, 1.0
    %v1814 = vrcp.pop %v1813
    %v1815 = vmul.f32 1.0, %v1814
    %1817 = vrot.lane.b32.xlu0 %v1755, 96
    %v1818 = vpop.permute.xlu0 %1817
    %v1820 = vmul.f32 %v1815, %v1818
    %1822 = vrot.lane.b32.xlu0 %v1820, 32
    %v1823 = vpop.permute.xlu0 %1822
    %v1825 = vadd.f32 %v1806, %v1823
    %v1826 = vtanh.pop %v1825
    %v1827 = vsub.f32 1.0, %v1815
    %1829 = vrot.lane.b32.xlu0 %v1826, 112
    %v1830 = vpop.permute.xlu0 %1829
    %v1832 = vmul.f32 %v1827, %v1830
    %v1833 = vmul.f32 %v1815, %v1646
    %v1834 = vadd.f32 %v1832, %v1833
    %v1835 = vadd.f32 %v1808, %v1800
    %v1836 = vxor.u32 %v1835, 2147483648
    %v1837 = vmul.f32 %v1836, 1.442695
    %v1838 = vpow.pop %v1837
    %v1839 = vadd.f32 %v1838, 1.0
    %v1840 = vrcp.pop %v1839
    %v1841 = vmul.f32 1.0, %v1840
    %1843 = vrot.lane.b32.xlu0 %v1800, 96
    %v1844 = vpop.permute.xlu0 %1843
    %v1846 = vmul.f32 %v1841, %v1844
    %1848 = vrot.lane.b32.xlu0 %v1846, 32
    %v1849 = vpop.permute.xlu0 %1848
    %v1851 = vadd.f32 %v1808, %v1849
    %v1852 = vtanh.pop %v1851
    %v1853 = vsub.f32 1.0, %v1841
    %1855 = vrot.lane.b32.xlu0 %v1852, 112
    %v1856 = vpop.permute.xlu0 %1855
    %v1858 = vmul.f32 %v1853, %v1856
    %v1859 = vmul.f32 %v1841, %v1672
    %v1860 = vadd.f32 %v1858, %v1859
    %v1861 = vpack.c.bf16 %v1834, %v1834
    %v1864 = vunpack.c.l.s4 1966171168
    %v1865 = vunpack.c.0.s8 %v1864
    %v1866 = vlaneseq
    %v1867 = vshrl.u32 %v1866, 7
    %v1868 = vsub.s32 %v1865, %v1867
    %v1869 = vrot.slane %v1861, %v1868
    %v1871 = vunpack.c.l.s4 1966171168
    %v1872 = vunpack.c.0.s8 %v1871
    %v1873 = vlaneseq
    %v1874 = vshrl.u32 %v1873, 7
    %v1875 = vsub.s32 %v1872, %v1874
    %v1876 = vrot.slane %v1869, %v1875
    %1877 = vrot.lane.b32.xlu0 %v1876, 112
    %v1878 = vpop.permute.xlu0 %1877
    %s1880 = scalar_lea.vmem [#allocation4], 6
    %1881 = vst.msk [vmem:[%s1880] sm:$0x1] %vm752, %v1878
    %v1882 = vpack.c.bf16 %v1860, %v1860
    %v1885 = vunpack.c.l.s4 1966171168
    %v1886 = vunpack.c.0.s8 %v1885
    %v1887 = vlaneseq
    %v1888 = vshrl.u32 %v1887, 7
    %v1889 = vsub.s32 %v1886, %v1888
    %v1890 = vrot.slane %v1882, %v1889
    %v1892 = vunpack.c.l.s4 1966171168
    %v1893 = vunpack.c.0.s8 %v1892
    %v1894 = vlaneseq
    %v1895 = vshrl.u32 %v1894, 7
    %v1896 = vsub.s32 %v1893, %v1895
    %v1897 = vrot.slane %v1890, %v1896
    %1898 = vrot.lane.b32.xlu0 %v1897, 112
    %v1899 = vpop.permute.xlu0 %1898
    %s1901 = scalar_lea.vmem [#allocation5], 1
    %1902 = vst.msk [vmem:[%s1901] sm:$0x1] %vm752, %v1899
    %1903 = vrot.lane.b32.xlu0 %v1861, 112
    %v1904 = vpop.permute.xlu0 %1903
    %v1906 = vsel %vm582, %v1904, 0
    %1908 = vmatprep.subr.bf16.mxu0 0
    %1909 = vmatpush1.bf16.msra.mxu0 %v580
    %1910 = vmatprep.subr.bf16.mxu0 0
    %1911 = vmatpush1.bf16.msra.mxu0 0
    %1912 = vmatprep.subr.bf16.mxu0 0
    %1913 = vmatpush1.bf16.msra.mxu0 0
    %1914 = vmatprep.subr.bf16.mxu0 0
    %1915 = vmatpush1.bf16.msra.mxu0 0
    %1916 = vmatprep.subr.bf16.mxu0 0
    %1917 = vmatpush1.bf16.msra.mxu0 0
    %1918 = vmatprep.subr.bf16.mxu0 0
    %1919 = vmatpush1.bf16.msra.mxu0 0
    %1920 = vmatprep.subr.bf16.mxu0 0
    %1921 = vmatpush1.bf16.msra.mxu0 0
    %1922 = vmatprep.subr.bf16.mxu0 0
    %1923 = vmatpush1.bf16.msra.mxu0 0
    %1924 = vmatprep.subr.bf16.mxu0 0
    %1925 = vmatpush1.bf16.msra.mxu0 0
    %1926 = vmatprep.subr.bf16.mxu0 0
    %1927 = vmatpush1.bf16.msra.mxu0 0
    %1928 = vmatprep.subr.bf16.mxu0 0
    %1929 = vmatpush1.bf16.msra.mxu0 0
    %1930 = vmatprep.subr.bf16.mxu0 0
    %1931 = vmatpush1.bf16.msra.mxu0 0
    %1932 = vmatprep.subr.bf16.mxu0 0
    %1933 = vmatpush1.bf16.msra.mxu0 0
    %1934 = vmatprep.subr.bf16.mxu0 0
    %1935 = vmatpush1.bf16.msra.mxu0 0
    %1936 = vmatprep.subr.bf16.mxu0 0
    %1937 = vmatpush1.bf16.msra.mxu0 0
    %1938 = vmatprep.subr.bf16.mxu0 0
    %1939 = vmatpush1.bf16.msra.mxu0 0
    %1940 = vmatprep.mubr.bf16.mxu0 0
    %1941 = vmatmul.mubr.bf16.gmra.mrb[0].mxu0 %v1906
    %v1942 = vpop.f32.mrb[0].mxu0
    %v1943 = vadd.f32 %v574, %v1942
    %v1944 = vpop.f32.mrb[0].mxu0
    %v1945 = vpop.f32.mrb[0].mxu0
    %v1946 = vpop.f32.mrb[0].mxu0
    %1947 = vdwg.mxu0
    %1948 = vrot.lane.b32.xlu0 %v1882, 112
    %v1949 = vpop.permute.xlu0 %1948
    %v1951 = vsel %vm582, %v1949, 0
    %1953 = vmatprep.subr.bf16.mxu0 0
    %1954 = vmatpush1.bf16.msra.mxu0 %v636
    %1955 = vmatprep.subr.bf16.mxu0 0
    %1956 = vmatpush1.bf16.msra.mxu0 0
    %1957 = vmatprep.subr.bf16.mxu0 0
    %1958 = vmatpush1.bf16.msra.mxu0 0
    %1959 = vmatprep.subr.bf16.mxu0 0
    %1960 = vmatpush1.bf16.msra.mxu0 0
    %1961 = vmatprep.subr.bf16.mxu0 0
    %1962 = vmatpush1.bf16.msra.mxu0 0
    %1963 = vmatprep.subr.bf16.mxu0 0
    %1964 = vmatpush1.bf16.msra.mxu0 0
    %1965 = vmatprep.subr.bf16.mxu0 0
    %1966 = vmatpush1.bf16.msra.mxu0 0
    %1967 = vmatprep.subr.bf16.mxu0 0
    %1968 = vmatpush1.bf16.msra.mxu0 0
    %1969 = vmatprep.subr.bf16.mxu0 0
    %1970 = vmatpush1.bf16.msra.mxu0 0
    %1971 = vmatprep.subr.bf16.mxu0 0
    %1972 = vmatpush1.bf16.msra.mxu0 0
    %1973 = vmatprep.subr.bf16.mxu0 0
    %1974 = vmatpush1.bf16.msra.mxu0 0
    %1975 = vmatprep.subr.bf16.mxu0 0
    %1976 = vmatpush1.bf16.msra.mxu0 0
    %1977 = vmatprep.subr.bf16.mxu0 0
    %1978 = vmatpush1.bf16.msra.mxu0 0
    %1979 = vmatprep.subr.bf16.mxu0 0
    %1980 = vmatpush1.bf16.msra.mxu0 0
    %1981 = vmatprep.subr.bf16.mxu0 0
    %1982 = vmatpush1.bf16.msra.mxu0 0
    %1983 = vmatprep.subr.bf16.mxu0 0
    %1984 = vmatpush1.bf16.msra.mxu0 0
    %1985 = vmatprep.mubr.bf16.mxu0 0
    %1986 = vmatmul.mubr.bf16.gmra.mrb[0].mxu0 %v1951
    %v1987 = vpop.f32.mrb[0].mxu0
    %v1988 = vadd.f32 %v630, %v1987
    %v1989 = vpop.f32.mrb[0].mxu0
    %v1990 = vpop.f32.mrb[0].mxu0
    %v1991 = vpop.f32.mrb[0].mxu0
    %1992 = vdwg.mxu0
    %s1993 = scalar_lea.vmem [#allocation2], 14
    %v1994 = vld [vmem:[%s1993] sm:$0x3]
    %v1995 = vld [vmem:[#allocation3] sm:$0x3]
    %v1996 = vadd.f32 %v1994, %v1943
    %v1997 = vxor.u32 %v1996, 2147483648
    %v1998 = vmul.f32 %v1997, 1.442695
    %v1999 = vpow.pop %v1998
    %v2000 = vadd.f32 %v1999, 1.0
    %v2001 = vrcp.pop %v2000
    %v2002 = vmul.f32 1.0, %v2001
    %2004 = vrot.lane.b32.xlu0 %v1943, 96
    %v2005 = vpop.permute.xlu0 %2004
    %v2007 = vmul.f32 %v2002, %v2005
    %2009 = vrot.lane.b32.xlu0 %v2007, 32
    %v2010 = vpop.permute.xlu0 %2009
    %v2012 = vadd.f32 %v1994, %v2010
    %v2013 = vtanh.pop %v2012
    %v2014 = vsub.f32 1.0, %v2002
    %2016 = vrot.lane.b32.xlu0 %v2013, 112
    %v2017 = vpop.permute.xlu0 %2016
    %v2019 = vmul.f32 %v2014, %v2017
    %v2020 = vmul.f32 %v2002, %v1834
    %v2021 = vadd.f32 %v2019, %v2020
    %v2022 = vadd.f32 %v1995, %v1988
    %v2023 = vxor.u32 %v2022, 2147483648
    %v2024 = vmul.f32 %v2023, 1.442695
    %v2025 = vpow.pop %v2024
    %v2026 = vadd.f32 %v2025, 1.0
    %v2027 = vrcp.pop %v2026
    %v2028 = vmul.f32 1.0, %v2027
    %2030 = vrot.lane.b32.xlu0 %v1988, 96
    %v2031 = vpop.permute.xlu0 %2030
    %v2033 = vmul.f32 %v2028, %v2031
    %2035 = vrot.lane.b32.xlu0 %v2033, 32
    %v2036 = vpop.permute.xlu0 %2035
    %v2038 = vadd.f32 %v1995, %v2036
    %v2039 = vtanh.pop %v2038
    %v2040 = vsub.f32 1.0, %v2028
    %2042 = vrot.lane.b32.xlu0 %v2039, 112
    %v2043 = vpop.permute.xlu0 %2042
    %v2045 = vmul.f32 %v2040, %v2043
    %v2046 = vmul.f32 %v2028, %v1860
    %v2047 = vadd.f32 %v2045, %v2046
    %v2048 = vpack.c.bf16 %v2021, %v2021
    %v2051 = vunpack.c.l.s4 1966171168
    %v2052 = vunpack.c.0.s8 %v2051
    %v2053 = vlaneseq
    %v2054 = vshrl.u32 %v2053, 7
    %v2055 = vsub.s32 %v2052, %v2054
    %v2056 = vrot.slane %v2048, %v2055
    %v2058 = vunpack.c.l.s4 1966171168
    %v2059 = vunpack.c.0.s8 %v2058
    %v2060 = vlaneseq
    %v2061 = vshrl.u32 %v2060, 7
    %v2062 = vsub.s32 %v2059, %v2061
    %v2063 = vrot.slane %v2056, %v2062
    %2064 = vrot.lane.b32.xlu0 %v2063, 112
    %v2065 = vpop.permute.xlu0 %2064
    %s2067 = scalar_lea.vmem [#allocation4], 7
    %2068 = vst.msk [vmem:[%s2067] sm:$0x1] %vm752, %v2065
    %v2069 = vpack.c.bf16 %v2047, %v2047
    %v2072 = vunpack.c.l.s4 1966171168
    %v2073 = vunpack.c.0.s8 %v2072
    %v2074 = vlaneseq
    %v2075 = vshrl.u32 %v2074, 7
    %v2076 = vsub.s32 %v2073, %v2075
    %v2077 = vrot.slane %v2069, %v2076
    %v2079 = vunpack.c.l.s4 1966171168
    %v2080 = vunpack.c.0.s8 %v2079
    %v2081 = vlaneseq
    %v2082 = vshrl.u32 %v2081, 7
    %v2083 = vsub.s32 %v2080, %v2082
    %v2084 = vrot.slane %v2077, %v2083
    %2085 = vrot.lane.b32.xlu0 %v2084, 112
    %v2086 = vpop.permute.xlu0 %2085
    %2088 = vst.msk [vmem:[#allocation5] sm:$0x1] %vm752, %v2086
    %v2089 = vld [vmem:[#allocation4] sm:$0x1]
    %v2090 = vld [vmem:[#allocation4 + $0x1] sm:$0x1]
    %v2091 = vld [vmem:[#allocation4 + $0x2] sm:$0x1]
    %v2092 = vld [vmem:[#allocation4 + $0x3] sm:$0x1]
    %v2093 = vld [vmem:[#allocation4 + $0x4] sm:$0x1]
    %v2094 = vld [vmem:[#allocation4 + $0x5] sm:$0x1]
    %v2095 = vld [vmem:[#allocation4 + $0x6] sm:$0x1]
    %v2096 = vld [vmem:[#allocation4 + $0x7] sm:$0x1]
    %v2097 = vld [vmem:[#allocation5] sm:$0x1]
    %v2098 = vld [vmem:[#allocation5 + $0x1] sm:$0x1]
    %v2099 = vld [vmem:[#allocation5 + $0x2] sm:$0x1]
    %v2100 = vld [vmem:[#allocation5 + $0x3] sm:$0x1]
    %v2101 = vld [vmem:[#allocation5 + $0x4] sm:$0x1]
    %v2102 = vld [vmem:[#allocation5 + $0x5] sm:$0x1]
    %v2103 = vld [vmem:[#allocation5 + $0x6] sm:$0x1]
    %v2104 = vld [vmem:[#allocation5 + $0x7] sm:$0x1]
    %v2105 = vld [vmem:[#allocation21] sm:$0xf]
    %v2106 = vld [vmem:[#allocation21 + $0x4] sm:$0xf]
    %v2107 = vld [vmem:[#allocation23] sm:$0xf]
    %v2108 = vld [vmem:[#allocation23 + $0x4] sm:$0xf]
    %v2117 = vcombine.low %v2097, %v2098
    %v2118 = vcombine.low %v2099, %v2100
    %v2119 = vcombine.low %v2101, %v2102
    %v2120 = vcombine.low %v2103, %v2104
    %v2122 = vunpack.c.l.s4 1966171168
    %v2123 = vunpack.c.0.s8 %v2122
    %v2124 = vlaneseq
    %v2125 = vshrl.u32 %v2124, 7
    %v2126 = vsub.s32 %v2123, %v2125
    %v2127 = vrot.slane %v2117, %v2126
    %v2129 = vunpack.c.l.s4 1966171168
    %v2130 = vunpack.c.0.s8 %v2129
    %v2131 = vlaneseq
    %v2132 = vshrl.u32 %v2131, 7
    %v2133 = vsub.s32 %v2130, %v2132
    %v2134 = vrot.slane %v2118, %v2133
    %v2136 = vunpack.c.l.s4 1966171168
    %v2137 = vunpack.c.0.s8 %v2136
    %v2138 = vlaneseq
    %v2139 = vshrl.u32 %v2138, 7
    %v2140 = vsub.s32 %v2137, %v2139
    %v2141 = vrot.slane %v2119, %v2140
    %v2143 = vunpack.c.l.s4 1966171168
    %v2144 = vunpack.c.0.s8 %v2143
    %v2145 = vlaneseq
    %v2146 = vshrl.u32 %v2145, 7
    %v2147 = vsub.s32 %v2144, %v2146
    %v2148 = vrot.slane %v2120, %v2147
    %v2149 = vcombine.low %v2127, %v2134
    %v2150 = vcombine.low %v2141, %v2148
    %v2152 = vunpack.c.l.s4 1966171168
    %v2153 = vunpack.c.0.s8 %v2152
    %v2154 = vlaneseq
    %v2155 = vshrl.u32 %v2154, 7
    %v2156 = vsub.s32 %v2153, %v2155
    %v2157 = vrot.slane %v2149, %v2156
    %v2159 = vunpack.c.l.s4 1966171168
    %v2160 = vunpack.c.0.s8 %v2159
    %v2161 = vlaneseq
    %v2162 = vshrl.u32 %v2161, 7
    %v2163 = vsub.s32 %v2160, %v2162
    %v2164 = vrot.slane %v2150, %v2163
    %v2165 = vcombine.low %v2157, %v2164
    %v2168 = vunpack.c.l.b16 %v2107
    %v2169 = vunpack.c.l.b16 %v2108
    %v2170 = vpack.c.b16 %v2169, %v2168
    %v2173 = vsel %vm582, %v2165, 0
    %2175 = vmatprep.subr.bf16.mxu0 0
    %2176 = vmatpush1.bf16.msra.mxu0 %v2170
    %2177 = vmatprep.subr.bf16.mxu0 0
    %2178 = vmatpush1.bf16.msra.mxu0 0
    %2179 = vmatprep.subr.bf16.mxu0 0
    %2180 = vmatpush1.bf16.msra.mxu0 0
    %2181 = vmatprep.subr.bf16.mxu0 0
    %2182 = vmatpush1.bf16.msra.mxu0 0
    %2183 = vmatprep.subr.bf16.mxu0 0
    %2184 = vmatpush1.bf16.msra.mxu0 0
    %2185 = vmatprep.subr.bf16.mxu0 0
    %2186 = vmatpush1.bf16.msra.mxu0 0
    %2187 = vmatprep.subr.bf16.mxu0 0
    %2188 = vmatpush1.bf16.msra.mxu0 0
    %2189 = vmatprep.subr.bf16.mxu0 0
    %2190 = vmatpush1.bf16.msra.mxu0 0
    %2191 = vmatprep.subr.bf16.mxu0 0
    %2192 = vmatpush1.bf16.msra.mxu0 0
    %2193 = vmatprep.subr.bf16.mxu0 0
    %2194 = vmatpush1.bf16.msra.mxu0 0
    %2195 = vmatprep.subr.bf16.mxu0 0
    %2196 = vmatpush1.bf16.msra.mxu0 0
    %2197 = vmatprep.subr.bf16.mxu0 0
    %2198 = vmatpush1.bf16.msra.mxu0 0
    %2199 = vmatprep.subr.bf16.mxu0 0
    %2200 = vmatpush1.bf16.msra.mxu0 0
    %2201 = vmatprep.subr.bf16.mxu0 0
    %2202 = vmatpush1.bf16.msra.mxu0 0
    %2203 = vmatprep.subr.bf16.mxu0 0
    %2204 = vmatpush1.bf16.msra.mxu0 0
    %2205 = vmatprep.subr.bf16.mxu0 0
    %2206 = vmatpush1.bf16.msra.mxu0 0
    %2207 = vmatprep.mubr.bf16.mxu0 0
    %2208 = vmatmul.mubr.bf16.gmra.mrb[0].mxu0 %v2173
    %v2209 = vpop.f32.mrb[0].mxu0
    %v2210 = vadd.f32 0.0, %v2209
    %v2211 = vpop.f32.mrb[0].mxu0
    %v2212 = vpop.f32.mrb[0].mxu0
    %v2213 = vadd.f32 0.0, %v2212
    %v2214 = vpop.f32.mrb[0].mxu0
    %2215 = vdwg.mxu0
    %v2224 = vcombine.low %v2089, %v2090
    %v2225 = vcombine.low %v2091, %v2092
    %v2226 = vcombine.low %v2093, %v2094
    %v2227 = vcombine.low %v2095, %v2096
    %v2229 = vunpack.c.l.s4 1966171168
    %v2230 = vunpack.c.0.s8 %v2229
    %v2231 = vlaneseq
    %v2232 = vshrl.u32 %v2231, 7
    %v2233 = vsub.s32 %v2230, %v2232
    %v2234 = vrot.slane %v2224, %v2233
    %v2236 = vunpack.c.l.s4 1966171168
    %v2237 = vunpack.c.0.s8 %v2236
    %v2238 = vlaneseq
    %v2239 = vshrl.u32 %v2238, 7
    %v2240 = vsub.s32 %v2237, %v2239
    %v2241 = vrot.slane %v2225, %v2240
    %v2243 = vunpack.c.l.s4 1966171168
    %v2244 = vunpack.c.0.s8 %v2243
    %v2245 = vlaneseq
    %v2246 = vshrl.u32 %v2245, 7
    %v2247 = vsub.s32 %v2244, %v2246
    %v2248 = vrot.slane %v2226, %v2247
    %v2250 = vunpack.c.l.s4 1966171168
    %v2251 = vunpack.c.0.s8 %v2250
    %v2252 = vlaneseq
    %v2253 = vshrl.u32 %v2252, 7
    %v2254 = vsub.s32 %v2251, %v2253
    %v2255 = vrot.slane %v2227, %v2254
    %v2256 = vcombine.low %v2234, %v2241
    %v2257 = vcombine.low %v2248, %v2255
    %v2259 = vunpack.c.l.s4 1966171168
    %v2260 = vunpack.c.0.s8 %v2259
    %v2261 = vlaneseq
    %v2262 = vshrl.u32 %v2261, 7
    %v2263 = vsub.s32 %v2260, %v2262
    %v2264 = vrot.slane %v2256, %v2263
    %v2266 = vunpack.c.l.s4 1966171168
    %v2267 = vunpack.c.0.s8 %v2266
    %v2268 = vlaneseq
    %v2269 = vshrl.u32 %v2268, 7
    %v2270 = vsub.s32 %v2267, %v2269
    %v2271 = vrot.slane %v2257, %v2270
    %v2272 = vcombine.low %v2264, %v2271
    %v2275 = vunpack.c.l.b16 %v2105
    %v2276 = vunpack.c.l.b16 %v2106
    %v2277 = vpack.c.b16 %v2276, %v2275
    %v2280 = vsel %vm582, %v2272, 0
    %2282 = vmatprep.subr.bf16.mxu0 0
    %2283 = vmatpush1.bf16.msra.mxu0 %v2277
    %2284 = vmatprep.subr.bf16.mxu0 0
    %2285 = vmatpush1.bf16.msra.mxu0 0
    %2286 = vmatprep.subr.bf16.mxu0 0
    %2287 = vmatpush1.bf16.msra.mxu0 0
    %2288 = vmatprep.subr.bf16.mxu0 0
    %2289 = vmatpush1.bf16.msra.mxu0 0
    %2290 = vmatprep.subr.bf16.mxu0 0
    %2291 = vmatpush1.bf16.msra.mxu0 0
    %2292 = vmatprep.subr.bf16.mxu0 0
    %2293 = vmatpush1.bf16.msra.mxu0 0
    %2294 = vmatprep.subr.bf16.mxu0 0
    %2295 = vmatpush1.bf16.msra.mxu0 0
    %2296 = vmatprep.subr.bf16.mxu0 0
    %2297 = vmatpush1.bf16.msra.mxu0 0
    %2298 = vmatprep.subr.bf16.mxu0 0
    %2299 = vmatpush1.bf16.msra.mxu0 0
    %2300 = vmatprep.subr.bf16.mxu0 0
    %2301 = vmatpush1.bf16.msra.mxu0 0
    %2302 = vmatprep.subr.bf16.mxu0 0
    %2303 = vmatpush1.bf16.msra.mxu0 0
    %2304 = vmatprep.subr.bf16.mxu0 0
    %2305 = vmatpush1.bf16.msra.mxu0 0
    %2306 = vmatprep.subr.bf16.mxu0 0
    %2307 = vmatpush1.bf16.msra.mxu0 0
    %2308 = vmatprep.subr.bf16.mxu0 0
    %2309 = vmatpush1.bf16.msra.mxu0 0
    %2310 = vmatprep.subr.bf16.mxu0 0
    %2311 = vmatpush1.bf16.msra.mxu0 0
    %2312 = vmatprep.subr.bf16.mxu0 0
    %2313 = vmatpush1.bf16.msra.mxu0 0
    %2314 = vmatprep.mubr.bf16.mxu0 0
    %2315 = vmatmul.mubr.bf16.gmra.mrb[0].mxu0 %v2280
    %v2316 = vpop.f32.mrb[0].mxu0
    %v2317 = vadd.f32 %v2210, %v2316
    %v2318 = vpop.f32.mrb[0].mxu0
    %v2319 = vpop.f32.mrb[0].mxu0
    %v2320 = vadd.f32 %v2213, %v2319
    %v2321 = vpop.f32.mrb[0].mxu0
    %2322 = vdwg.mxu0
    %v2323 = vld [vmem:[#allocation24] sm:$0x1]
    %v2325 = vlaneseq
    %v2326 = vshrl.u32 %v2325, 7
    %v2327 = vsub.s32 0, %v2326
    %v2328 = vrot.slane %v2323, %v2327
    %v2330 = vadd.f32 %v2317, %v2328
    %v2331 = vadd.f32 %v2320, %v2328
    %v2332 = vtanh.pop %v2330
    %v2333 = vtanh.pop %v2331
    %v2334 = vld [vmem:[#allocation26] sm:$0x1]
    %v2336 = vlaneseq
    %v2337 = vshrl.u32 %v2336, 7
    %v2338 = vsub.s32 0, %v2337
    %v2339 = vrot.slane %v2334, %v2338
    %v2341 = vmul.f32 %v2332, %v2339
    %v2342 = vmul.f32 %v2333, %v2339
    %v2343 = vsel %vm350, %v2341, 0.0
    %2344 = vadd.xlane.f32.xlu0 %v2343
    %v2345 = vpop.xlane.xlu0 %2344
    %v2346 = vsel %vm350, %v2342, 0.0
    %2347 = vadd.xlane.f32.xlu0 %v2346
    %v2348 = vpop.xlane.xlu0 %2347
    %v2352 = vunpack.c.l.s4 269488144
    %v2353 = vunpack.c.0.s8 %v2352
    %v2354 = vlaneseq
    %v2355 = vshrl.u32 %v2354, 7
    %v2356 = vsub.s32 %v2353, %v2355
    %v2357 = vrot.slane %v2345, %v2356
    %v2359 = vunpack.c.l.s4 842150450
    %v2360 = vunpack.c.0.s8 %v2359
    %v2361 = vlaneseq
    %v2362 = vshrl.u32 %v2361, 7
    %v2363 = vsub.s32 %v2360, %v2362
    %v2364 = vrot.slane %v2345, %v2363
    %v2366 = vunpack.c.l.s4 1414812756
    %v2367 = vunpack.c.0.s8 %v2366
    %v2368 = vlaneseq
    %v2369 = vshrl.u32 %v2368, 7
    %v2370 = vsub.s32 %v2367, %v2369
    %v2371 = vrot.slane %v2345, %v2370
    %v2373 = vunpack.c.l.s4 1987475062
    %v2374 = vunpack.c.0.s8 %v2373
    %v2375 = vlaneseq
    %v2376 = vshrl.u32 %v2375, 7
    %v2377 = vsub.s32 %v2374, %v2376
    %v2378 = vrot.slane %v2345, %v2377
    %v2380 = vunpack.c.l.s4 269488144
    %v2381 = vunpack.c.0.s8 %v2380
    %v2382 = vlaneseq
    %v2383 = vshrl.u32 %v2382, 7
    %v2384 = vsub.s32 %v2381, %v2383
    %v2385 = vrot.slane %v2348, %v2384
    %v2387 = vunpack.c.l.s4 842150450
    %v2388 = vunpack.c.0.s8 %v2387
    %v2389 = vlaneseq
    %v2390 = vshrl.u32 %v2389, 7
    %v2391 = vsub.s32 %v2388, %v2390
    %v2392 = vrot.slane %v2348, %v2391
    %v2394 = vunpack.c.l.s4 1414812756
    %v2395 = vunpack.c.0.s8 %v2394
    %v2396 = vlaneseq
    %v2397 = vshrl.u32 %v2396, 7
    %v2398 = vsub.s32 %v2395, %v2397
    %v2399 = vrot.slane %v2348, %v2398
    %v2401 = vunpack.c.l.s4 1987475062
    %v2402 = vunpack.c.0.s8 %v2401
    %v2403 = vlaneseq
    %v2404 = vshrl.u32 %v2403, 7
    %v2405 = vsub.s32 %v2402, %v2404
    %v2406 = vrot.slane %v2348, %v2405
    %v2415 = vmax.f32 %v2357, %v2385
    %v2416 = vmax.f32 %v2364, %v2392
    %v2417 = vmax.f32 %v2371, %v2399
    %v2418 = vmax.f32 %v2378, %v2406
    %v2419 = vmax.f32 %v2415, %v2416
    %v2420 = vmax.f32 %v2417, %v2418
    %v2421 = vmax.f32 %v2419, %v2420
    %v2422 = vsub.f32 %v2357, %v2421
    %v2423 = vsub.f32 %v2364, %v2421
    %v2424 = vsub.f32 %v2371, %v2421
    %v2425 = vsub.f32 %v2378, %v2421
    %v2426 = vsub.f32 %v2385, %v2421
    %v2427 = vsub.f32 %v2392, %v2421
    %v2428 = vsub.f32 %v2399, %v2421
    %v2429 = vsub.f32 %v2406, %v2421
    %v2430 = vmul.f32 %v2422, 1.442695
    %v2431 = vpow.pop %v2430
    %v2432 = vmul.f32 %v2423, 1.442695
    %v2433 = vpow.pop %v2432
    %v2434 = vmul.f32 %v2424, 1.442695
    %v2435 = vpow.pop %v2434
    %v2436 = vmul.f32 %v2425, 1.442695
    %v2437 = vpow.pop %v2436
    %v2438 = vmul.f32 %v2426, 1.442695
    %v2439 = vpow.pop %v2438
    %v2440 = vmul.f32 %v2427, 1.442695
    %v2441 = vpow.pop %v2440
    %v2442 = vmul.f32 %v2428, 1.442695
    %v2443 = vpow.pop %v2442
    %v2444 = vmul.f32 %v2429, 1.442695
    %v2445 = vpow.pop %v2444
    %vm2446 = vcmask 1041408
    %v2447 = vsel %vm2446, %v2431, 0.0
    %v2448 = vsel %vm2446, %v2433, 0.0
    %v2449 = vadd.f32 %v2447, %v2448
    %v2450 = vsel %vm2446, %v2435, 0.0
    %v2451 = vadd.f32 %v2449, %v2450
    %v2452 = vsel %vm2446, %v2437, 0.0
    %v2453 = vadd.f32 %v2451, %v2452
    %v2454 = vsel %vm2446, %v2439, 0.0
    %v2455 = vadd.f32 %v2453, %v2454
    %v2456 = vsel %vm2446, %v2441, 0.0
    %v2457 = vadd.f32 %v2455, %v2456
    %v2458 = vsel %vm2446, %v2443, 0.0
    %v2459 = vadd.f32 %v2457, %v2458
    %v2460 = vsel %vm2446, %v2445, 0.0
    %v2461 = vadd.f32 %v2459, %v2460
    %v2462 = vrcp.pop %v2461
    %v2463 = vmul.f32 %v2431, %v2462
    %v2464 = vmul.f32 %v2433, %v2462
    %v2465 = vmul.f32 %v2435, %v2462
    %v2466 = vmul.f32 %v2437, %v2462
    %v2467 = vmul.f32 %v2439, %v2462
    %v2468 = vmul.f32 %v2441, %v2462
    %v2469 = vmul.f32 %v2443, %v2462
    %v2470 = vmul.f32 %v2445, %v2462
    %v2471 = vadd.f32 %v2463, 0.0
    %v2472 = vadd.f32 %v2464, 0.0
    %v2473 = vadd.f32 %v2465, 0.0
    %v2474 = vadd.f32 %v2466, 0.0
    %v2475 = vadd.f32 %v2467, 0.0
    %v2476 = vadd.f32 %v2468, 0.0
    %v2477 = vadd.f32 %v2469, 0.0
    %v2478 = vadd.f32 %v2470, 0.0
    %s2479 = scalar_lea.vmem [#allocation21], 8
    %v2480 = vld [vmem:[%s2479] sm:$0xf]
    %v2481 = vld [vmem:[%s2479 + $0x4] sm:$0xf]
    %s2482 = scalar_lea.vmem [#allocation23], 8
    %v2483 = vld [vmem:[%s2482] sm:$0xf]
    %v2484 = vld [vmem:[%s2482 + $0x4] sm:$0xf]
    %v2487 = vunpack.c.l.b16 %v2483
    %v2488 = vunpack.c.l.b16 %v2484
    %v2489 = vpack.c.b16 %v2488, %v2487
    %2491 = vmatprep.subr.bf16.mxu0 0
    %2492 = vmatpush1.bf16.msra.mxu0 %v2489
    %2493 = vmatprep.subr.bf16.mxu0 0
    %2494 = vmatpush1.bf16.msra.mxu0 0
    %2495 = vmatprep.subr.bf16.mxu0 0
    %2496 = vmatpush1.bf16.msra.mxu0 0
    %2497 = vmatprep.subr.bf16.mxu0 0
    %2498 = vmatpush1.bf16.msra.mxu0 0
    %2499 = vmatprep.subr.bf16.mxu0 0
    %2500 = vmatpush1.bf16.msra.mxu0 0
    %2501 = vmatprep.subr.bf16.mxu0 0
    %2502 = vmatpush1.bf16.msra.mxu0 0
    %2503 = vmatprep.subr.bf16.mxu0 0
    %2504 = vmatpush1.bf16.msra.mxu0 0
    %2505 = vmatprep.subr.bf16.mxu0 0
    %2506 = vmatpush1.bf16.msra.mxu0 0
    %2507 = vmatprep.subr.bf16.mxu0 0
    %2508 = vmatpush1.bf16.msra.mxu0 0
    %2509 = vmatprep.subr.bf16.mxu0 0
    %2510 = vmatpush1.bf16.msra.mxu0 0
    %2511 = vmatprep.subr.bf16.mxu0 0
    %2512 = vmatpush1.bf16.msra.mxu0 0
    %2513 = vmatprep.subr.bf16.mxu0 0
    %2514 = vmatpush1.bf16.msra.mxu0 0
    %2515 = vmatprep.subr.bf16.mxu0 0
    %2516 = vmatpush1.bf16.msra.mxu0 0
    %2517 = vmatprep.subr.bf16.mxu0 0
    %2518 = vmatpush1.bf16.msra.mxu0 0
    %2519 = vmatprep.subr.bf16.mxu0 0
    %2520 = vmatpush1.bf16.msra.mxu0 0
    %2521 = vmatprep.subr.bf16.mxu0 0
    %2522 = vmatpush1.bf16.msra.mxu0 0
    %2523 = vmatprep.mubr.bf16.mxu0 0
    %2524 = vmatmul.mubr.bf16.gmra.mrb[0].mxu0 %v2173
    %v2525 = vpop.f32.mrb[0].mxu0
    %v2526 = vadd.f32 0.0, %v2525
    %v2527 = vpop.f32.mrb[0].mxu0
    %v2528 = vpop.f32.mrb[0].mxu0
    %v2529 = vadd.f32 0.0, %v2528
    %v2530 = vpop.f32.mrb[0].mxu0
    %2531 = vdwg.mxu0
    %v2534 = vunpack.c.l.b16 %v2480
    %v2535 = vunpack.c.l.b16 %v2481
    %v2536 = vpack.c.b16 %v2535, %v2534
    %2538 = vmatprep.subr.bf16.mxu0 0
    %2539 = vmatpush1.bf16.msra.mxu0 %v2536
    %2540 = vmatprep.subr.bf16.mxu0 0
    %2541 = vmatpush1.bf16.msra.mxu0 0
    %2542 = vmatprep.subr.bf16.mxu0 0
    %2543 = vmatpush1.bf16.msra.mxu0 0
    %2544 = vmatprep.subr.bf16.mxu0 0
    %2545 = vmatpush1.bf16.msra.mxu0 0
    %2546 = vmatprep.subr.bf16.mxu0 0
    %2547 = vmatpush1.bf16.msra.mxu0 0
    %2548 = vmatprep.subr.bf16.mxu0 0
    %2549 = vmatpush1.bf16.msra.mxu0 0
    %2550 = vmatprep.subr.bf16.mxu0 0
    %2551 = vmatpush1.bf16.msra.mxu0 0
    %2552 = vmatprep.subr.bf16.mxu0 0
    %2553 = vmatpush1.bf16.msra.mxu0 0
    %2554 = vmatprep.subr.bf16.mxu0 0
    %2555 = vmatpush1.bf16.msra.mxu0 0
    %2556 = vmatprep.subr.bf16.mxu0 0
    %2557 = vmatpush1.bf16.msra.mxu0 0
    %2558 = vmatprep.subr.bf16.mxu0 0
    %2559 = vmatpush1.bf16.msra.mxu0 0
    %2560 = vmatprep.subr.bf16.mxu0 0
    %2561 = vmatpush1.bf16.msra.mxu0 0
    %2562 = vmatprep.subr.bf16.mxu0 0
    %2563 = vmatpush1.bf16.msra.mxu0 0
    %2564 = vmatprep.subr.bf16.mxu0 0
    %2565 = vmatpush1.bf16.msra.mxu0 0
    %2566 = vmatprep.subr.bf16.mxu0 0
    %2567 = vmatpush1.bf16.msra.mxu0 0
    %2568 = vmatprep.subr.bf16.mxu0 0
    %2569 = vmatpush1.bf16.msra.mxu0 0
    %2570 = vmatprep.mubr.bf16.mxu0 0
    %2571 = vmatmul.mubr.bf16.gmra.mrb[0].mxu0 %v2280
    %v2572 = vpop.f32.mrb[0].mxu0
    %v2573 = vadd.f32 %v2526, %v2572
    %v2574 = vpop.f32.mrb[0].mxu0
    %v2575 = vpop.f32.mrb[0].mxu0
    %v2576 = vadd.f32 %v2529, %v2575
    %v2577 = vpop.f32.mrb[0].mxu0
    %2578 = vdwg.mxu0
    %s2579 = scalar_lea.vmem [#allocation24], 1
    %v2580 = vld [vmem:[%s2579] sm:$0x1]
    %v2582 = vlaneseq
    %v2583 = vshrl.u32 %v2582, 7
    %v2584 = vsub.s32 0, %v2583
    %v2585 = vrot.slane %v2580, %v2584
    %v2587 = vadd.f32 %v2573, %v2585
    %v2588 = vadd.f32 %v2576, %v2585
    %v2589 = vtanh.pop %v2587
    %v2590 = vtanh.pop %v2588
    %s2591 = scalar_lea.vmem [#allocation26], 1
    %v2592 = vld [vmem:[%s2591] sm:$0x1]
    %v2594 = vlaneseq
    %v2595 = vshrl.u32 %v2594, 7
    %v2596 = vsub.s32 0, %v2595
    %v2597 = vrot.slane %v2592, %v2596
    %v2599 = vmul.f32 %v2589, %v2597
    %v2600 = vmul.f32 %v2590, %v2597
    %v2601 = vsel %vm350, %v2599, 0.0
    %2602 = vadd.xlane.f32.xlu0 %v2601
    %v2603 = vpop.xlane.xlu0 %2602
    %v2604 = vsel %vm350, %v2600, 0.0
    %2605 = vadd.xlane.f32.xlu0 %v2604
    %v2606 = vpop.xlane.xlu0 %2605
    %v2610 = vunpack.c.l.s4 269488144
    %v2611 = vunpack.c.0.s8 %v2610
    %v2612 = vlaneseq
    %v2613 = vshrl.u32 %v2612, 7
    %v2614 = vsub.s32 %v2611, %v2613
    %v2615 = vrot.slane %v2603, %v2614
    %v2617 = vunpack.c.l.s4 842150450
    %v2618 = vunpack.c.0.s8 %v2617
    %v2619 = vlaneseq
    %v2620 = vshrl.u32 %v2619, 7
    %v2621 = vsub.s32 %v2618, %v2620
    %v2622 = vrot.slane %v2603, %v2621
    %v2624 = vunpack.c.l.s4 1414812756
    %v2625 = vunpack.c.0.s8 %v2624
    %v2626 = vlaneseq
    %v2627 = vshrl.u32 %v2626, 7
    %v2628 = vsub.s32 %v2625, %v2627
    %v2629 = vrot.slane %v2603, %v2628
    %v2631 = vunpack.c.l.s4 1987475062
    %v2632 = vunpack.c.0.s8 %v2631
    %v2633 = vlaneseq
    %v2634 = vshrl.u32 %v2633, 7
    %v2635 = vsub.s32 %v2632, %v2634
    %v2636 = vrot.slane %v2603, %v2635
    %v2638 = vunpack.c.l.s4 269488144
    %v2639 = vunpack.c.0.s8 %v2638
    %v2640 = vlaneseq
    %v2641 = vshrl.u32 %v2640, 7
    %v2642 = vsub.s32 %v2639, %v2641
    %v2643 = vrot.slane %v2606, %v2642
    %v2645 = vunpack.c.l.s4 842150450
    %v2646 = vunpack.c.0.s8 %v2645
    %v2647 = vlaneseq
    %v2648 = vshrl.u32 %v2647, 7
    %v2649 = vsub.s32 %v2646, %v2648
    %v2650 = vrot.slane %v2606, %v2649
    %v2652 = vunpack.c.l.s4 1414812756
    %v2653 = vunpack.c.0.s8 %v2652
    %v2654 = vlaneseq
    %v2655 = vshrl.u32 %v2654, 7
    %v2656 = vsub.s32 %v2653, %v2655
    %v2657 = vrot.slane %v2606, %v2656
    %v2659 = vunpack.c.l.s4 1987475062
    %v2660 = vunpack.c.0.s8 %v2659
    %v2661 = vlaneseq
    %v2662 = vshrl.u32 %v2661, 7
    %v2663 = vsub.s32 %v2660, %v2662
    %v2664 = vrot.slane %v2606, %v2663
    %v2673 = vmax.f32 %v2615, %v2643
    %v2674 = vmax.f32 %v2622, %v2650
    %v2675 = vmax.f32 %v2629, %v2657
    %v2676 = vmax.f32 %v2636, %v2664
    %v2677 = vmax.f32 %v2673, %v2674
    %v2678 = vmax.f32 %v2675, %v2676
    %v2679 = vmax.f32 %v2677, %v2678
    %v2680 = vsub.f32 %v2615, %v2679
    %v2681 = vsub.f32 %v2622, %v2679
    %v2682 = vsub.f32 %v2629, %v2679
    %v2683 = vsub.f32 %v2636, %v2679
    %v2684 = vsub.f32 %v2643, %v2679
    %v2685 = vsub.f32 %v2650, %v2679
    %v2686 = vsub.f32 %v2657, %v2679
    %v2687 = vsub.f32 %v2664, %v2679
    %v2688 = vmul.f32 %v2680, 1.442695
    %v2689 = vpow.pop %v2688
    %v2690 = vmul.f32 %v2681, 1.442695
    %v2691 = vpow.pop %v2690
    %v2692 = vmul.f32 %v2682, 1.442695
    %v2693 = vpow.pop %v2692
    %v2694 = vmul.f32 %v2683, 1.442695
    %v2695 = vpow.pop %v2694
    %v2696 = vmul.f32 %v2684, 1.442695
    %v2697 = vpow.pop %v2696
    %v2698 = vmul.f32 %v2685, 1.442695
    %v2699 = vpow.pop %v2698
    %v2700 = vmul.f32 %v2686, 1.442695
    %v2701 = vpow.pop %v2700
    %v2702 = vmul.f32 %v2687, 1.442695
    %v2703 = vpow.pop %v2702
    %v2704 = vsel %vm2446, %v2689, 0.0
    %v2705 = vsel %vm2446, %v2691, 0.0
    %v2706 = vadd.f32 %v2704, %v2705
    %v2707 = vsel %vm2446, %v2693, 0.0
    %v2708 = vadd.f32 %v2706, %v2707
    %v2709 = vsel %vm2446, %v2695, 0.0
    %v2710 = vadd.f32 %v2708, %v2709
    %v2711 = vsel %vm2446, %v2697, 0.0
    %v2712 = vadd.f32 %v2710, %v2711
    %v2713 = vsel %vm2446, %v2699, 0.0
    %v2714 = vadd.f32 %v2712, %v2713
    %v2715 = vsel %vm2446, %v2701, 0.0
    %v2716 = vadd.f32 %v2714, %v2715
    %v2717 = vsel %vm2446, %v2703, 0.0
    %v2718 = vadd.f32 %v2716, %v2717
    %v2719 = vrcp.pop %v2718
    %v2720 = vmul.f32 %v2689, %v2719
    %v2721 = vmul.f32 %v2691, %v2719
    %v2722 = vmul.f32 %v2693, %v2719
    %v2723 = vmul.f32 %v2695, %v2719
    %v2724 = vmul.f32 %v2697, %v2719
    %v2725 = vmul.f32 %v2699, %v2719
    %v2726 = vmul.f32 %v2701, %v2719
    %v2727 = vmul.f32 %v2703, %v2719
    %v2728 = vadd.f32 %v2471, %v2720
    %v2729 = vadd.f32 %v2472, %v2721
    %v2730 = vadd.f32 %v2473, %v2722
    %v2731 = vadd.f32 %v2474, %v2723
    %v2732 = vadd.f32 %v2475, %v2724
    %v2733 = vadd.f32 %v2476, %v2725
    %v2734 = vadd.f32 %v2477, %v2726
    %v2735 = vadd.f32 %v2478, %v2727
    %s2736 = scalar_lea.vmem [#allocation21], 16
    %v2737 = vld [vmem:[%s2736] sm:$0xf]
    %v2738 = vld [vmem:[%s2736 + $0x4] sm:$0xf]
    %s2739 = scalar_lea.vmem [#allocation23], 16
    %v2740 = vld [vmem:[%s2739] sm:$0xf]
    %v2741 = vld [vmem:[%s2739 + $0x4] sm:$0xf]
    %v2744 = vunpack.c.l.b16 %v2740
    %v2745 = vunpack.c.l.b16 %v2741
    %v2746 = vpack.c.b16 %v2745, %v2744
    %2748 = vmatprep.subr.bf16.mxu0 0
    %2749 = vmatpush1.bf16.msra.mxu0 %v2746
    %2750 = vmatprep.subr.bf16.mxu0 0
    %2751 = vmatpush1.bf16.msra.mxu0 0
    %2752 = vmatprep.subr.bf16.mxu0 0
    %2753 = vmatpush1.bf16.msra.mxu0 0
    %2754 = vmatprep.subr.bf16.mxu0 0
    %2755 = vmatpush1.bf16.msra.mxu0 0
    %2756 = vmatprep.subr.bf16.mxu0 0
    %2757 = vmatpush1.bf16.msra.mxu0 0
    %2758 = vmatprep.subr.bf16.mxu0 0
    %2759 = vmatpush1.bf16.msra.mxu0 0
    %2760 = vmatprep.subr.bf16.mxu0 0
    %2761 = vmatpush1.bf16.msra.mxu0 0
    %2762 = vmatprep.subr.bf16.mxu0 0
    %2763 = vmatpush1.bf16.msra.mxu0 0
    %2764 = vmatprep.subr.bf16.mxu0 0
    %2765 = vmatpush1.bf16.msra.mxu0 0
    %2766 = vmatprep.subr.bf16.mxu0 0
    %2767 = vmatpush1.bf16.msra.mxu0 0
    %2768 = vmatprep.subr.bf16.mxu0 0
    %2769 = vmatpush1.bf16.msra.mxu0 0
    %2770 = vmatprep.subr.bf16.mxu0 0
    %2771 = vmatpush1.bf16.msra.mxu0 0
    %2772 = vmatprep.subr.bf16.mxu0 0
    %2773 = vmatpush1.bf16.msra.mxu0 0
    %2774 = vmatprep.subr.bf16.mxu0 0
    %2775 = vmatpush1.bf16.msra.mxu0 0
    %2776 = vmatprep.subr.bf16.mxu0 0
    %2777 = vmatpush1.bf16.msra.mxu0 0
    %2778 = vmatprep.subr.bf16.mxu0 0
    %2779 = vmatpush1.bf16.msra.mxu0 0
    %2780 = vmatprep.mubr.bf16.mxu0 0
    %2781 = vmatmul.mubr.bf16.gmra.mrb[0].mxu0 %v2173
    %v2782 = vpop.f32.mrb[0].mxu0
    %v2783 = vadd.f32 0.0, %v2782
    %v2784 = vpop.f32.mrb[0].mxu0
    %v2785 = vpop.f32.mrb[0].mxu0
    %v2786 = vadd.f32 0.0, %v2785
    %v2787 = vpop.f32.mrb[0].mxu0
    %2788 = vdwg.mxu0
    %v2791 = vunpack.c.l.b16 %v2737
    %v2792 = vunpack.c.l.b16 %v2738
    %v2793 = vpack.c.b16 %v2792, %v2791
    %2795 = vmatprep.subr.bf16.mxu0 0
    %2796 = vmatpush1.bf16.msra.mxu0 %v2793
    %2797 = vmatprep.subr.bf16.mxu0 0
    %2798 = vmatpush1.bf16.msra.mxu0 0
    %2799 = vmatprep.subr.bf16.mxu0 0
    %2800 = vmatpush1.bf16.msra.mxu0 0
    %2801 = vmatprep.subr.bf16.mxu0 0
    %2802 = vmatpush1.bf16.msra.mxu0 0
    %2803 = vmatprep.subr.bf16.mxu0 0
    %2804 = vmatpush1.bf16.msra.mxu0 0
    %2805 = vmatprep.subr.bf16.mxu0 0
    %2806 = vmatpush1.bf16.msra.mxu0 0
    %2807 = vmatprep.subr.bf16.mxu0 0
    %2808 = vmatpush1.bf16.msra.mxu0 0
    %2809 = vmatprep.subr.bf16.mxu0 0
    %2810 = vmatpush1.bf16.msra.mxu0 0
    %2811 = vmatprep.subr.bf16.mxu0 0
    %2812 = vmatpush1.bf16.msra.mxu0 0
    %2813 = vmatprep.subr.bf16.mxu0 0
    %2814 = vmatpush1.bf16.msra.mxu0 0
    %2815 = vmatprep.subr.bf16.mxu0 0
    %2816 = vmatpush1.bf16.msra.mxu0 0
    %2817 = vmatprep.subr.bf16.mxu0 0
    %2818 = vmatpush1.bf16.msra.mxu0 0
    %2819 = vmatprep.subr.bf16.mxu0 0
    %2820 = vmatpush1.bf16.msra.mxu0 0
    %2821 = vmatprep.subr.bf16.mxu0 0
    %2822 = vmatpush1.bf16.msra.mxu0 0
    %2823 = vmatprep.subr.bf16.mxu0 0
    %2824 = vmatpush1.bf16.msra.mxu0 0
    %2825 = vmatprep.subr.bf16.mxu0 0
    %2826 = vmatpush1.bf16.msra.mxu0 0
    %2827 = vmatprep.mubr.bf16.mxu0 0
    %2828 = vmatmul.mubr.bf16.gmra.mrb[0].mxu0 %v2280
    %v2829 = vpop.f32.mrb[0].mxu0
    %v2830 = vadd.f32 %v2783, %v2829
    %v2831 = vpop.f32.mrb[0].mxu0
    %v2832 = vpop.f32.mrb[0].mxu0
    %v2833 = vadd.f32 %v2786, %v2832
    %v2834 = vpop.f32.mrb[0].mxu0
    %2835 = vdwg.mxu0
    %s2836 = scalar_lea.vmem [#allocation24], 2
    %v2837 = vld [vmem:[%s2836] sm:$0x1]
    %v2839 = vlaneseq
    %v2840 = vshrl.u32 %v2839, 7
    %v2841 = vsub.s32 0, %v2840
    %v2842 = vrot.slane %v2837, %v2841
    %v2844 = vadd.f32 %v2830, %v2842
    %v2845 = vadd.f32 %v2833, %v2842
    %v2846 = vtanh.pop %v2844
    %v2847 = vtanh.pop %v2845
    %s2848 = scalar_lea.vmem [#allocation26], 2
    %v2849 = vld [vmem:[%s2848] sm:$0x1]
    %v2851 = vlaneseq
    %v2852 = vshrl.u32 %v2851, 7
    %v2853 = vsub.s32 0, %v2852
    %v2854 = vrot.slane %v2849, %v2853
    %v2856 = vmul.f32 %v2846, %v2854
    %v2857 = vmul.f32 %v2847, %v2854
    %v2858 = vsel %vm350, %v2856, 0.0
    %2859 = vadd.xlane.f32.xlu0 %v2858
    %v2860 = vpop.xlane.xlu0 %2859
    %v2861 = vsel %vm350, %v2857, 0.0
    %2862 = vadd.xlane.f32.xlu0 %v2861
    %v2863 = vpop.xlane.xlu0 %2862
    %v2867 = vunpack.c.l.s4 269488144
    %v2868 = vunpack.c.0.s8 %v2867
    %v2869 = vlaneseq
    %v2870 = vshrl.u32 %v2869, 7
    %v2871 = vsub.s32 %v2868, %v2870
    %v2872 = vrot.slane %v2860, %v2871
    %v2874 = vunpack.c.l.s4 842150450
    %v2875 = vunpack.c.0.s8 %v2874
    %v2876 = vlaneseq
    %v2877 = vshrl.u32 %v2876, 7
    %v2878 = vsub.s32 %v2875, %v2877
    %v2879 = vrot.slane %v2860, %v2878
    %v2881 = vunpack.c.l.s4 1414812756
    %v2882 = vunpack.c.0.s8 %v2881
    %v2883 = vlaneseq
    %v2884 = vshrl.u32 %v2883, 7
    %v2885 = vsub.s32 %v2882, %v2884
    %v2886 = vrot.slane %v2860, %v2885
    %v2888 = vunpack.c.l.s4 1987475062
    %v2889 = vunpack.c.0.s8 %v2888
    %v2890 = vlaneseq
    %v2891 = vshrl.u32 %v2890, 7
    %v2892 = vsub.s32 %v2889, %v2891
    %v2893 = vrot.slane %v2860, %v2892
    %v2895 = vunpack.c.l.s4 269488144
    %v2896 = vunpack.c.0.s8 %v2895
    %v2897 = vlaneseq
    %v2898 = vshrl.u32 %v2897, 7
    %v2899 = vsub.s32 %v2896, %v2898
    %v2900 = vrot.slane %v2863, %v2899
    %v2902 = vunpack.c.l.s4 842150450
    %v2903 = vunpack.c.0.s8 %v2902
    %v2904 = vlaneseq
    %v2905 = vshrl.u32 %v2904, 7
    %v2906 = vsub.s32 %v2903, %v2905
    %v2907 = vrot.slane %v2863, %v2906
    %v2909 = vunpack.c.l.s4 1414812756
    %v2910 = vunpack.c.0.s8 %v2909
    %v2911 = vlaneseq
    %v2912 = vshrl.u32 %v2911, 7
    %v2913 = vsub.s32 %v2910, %v2912
    %v2914 = vrot.slane %v2863, %v2913
    %v2916 = vunpack.c.l.s4 1987475062
    %v2917 = vunpack.c.0.s8 %v2916
    %v2918 = vlaneseq
    %v2919 = vshrl.u32 %v2918, 7
    %v2920 = vsub.s32 %v2917, %v2919
    %v2921 = vrot.slane %v2863, %v2920
    %v2930 = vmax.f32 %v2872, %v2900
    %v2931 = vmax.f32 %v2879, %v2907
    %v2932 = vmax.f32 %v2886, %v2914
    %v2933 = vmax.f32 %v2893, %v2921
    %v2934 = vmax.f32 %v2930, %v2931
    %v2935 = vmax.f32 %v2932, %v2933
    %v2936 = vmax.f32 %v2934, %v2935
    %v2937 = vsub.f32 %v2872, %v2936
    %v2938 = vsub.f32 %v2879, %v2936
    %v2939 = vsub.f32 %v2886, %v2936
    %v2940 = vsub.f32 %v2893, %v2936
    %v2941 = vsub.f32 %v2900, %v2936
    %v2942 = vsub.f32 %v2907, %v2936
    %v2943 = vsub.f32 %v2914, %v2936
    %v2944 = vsub.f32 %v2921, %v2936
    %v2945 = vmul.f32 %v2937, 1.442695
    %v2946 = vpow.pop %v2945
    %v2947 = vmul.f32 %v2938, 1.442695
    %v2948 = vpow.pop %v2947
    %v2949 = vmul.f32 %v2939, 1.442695
    %v2950 = vpow.pop %v2949
    %v2951 = vmul.f32 %v2940, 1.442695
    %v2952 = vpow.pop %v2951
    %v2953 = vmul.f32 %v2941, 1.442695
    %v2954 = vpow.pop %v2953
    %v2955 = vmul.f32 %v2942, 1.442695
    %v2956 = vpow.pop %v2955
    %v2957 = vmul.f32 %v2943, 1.442695
    %v2958 = vpow.pop %v2957
    %v2959 = vmul.f32 %v2944, 1.442695
    %v2960 = vpow.pop %v2959
    %v2961 = vsel %vm2446, %v2946, 0.0
    %v2962 = vsel %vm2446, %v2948, 0.0
    %v2963 = vadd.f32 %v2961, %v2962
    %v2964 = vsel %vm2446, %v2950, 0.0
    %v2965 = vadd.f32 %v2963, %v2964
    %v2966 = vsel %vm2446, %v2952, 0.0
    %v2967 = vadd.f32 %v2965, %v2966
    %v2968 = vsel %vm2446, %v2954, 0.0
    %v2969 = vadd.f32 %v2967, %v2968
    %v2970 = vsel %vm2446, %v2956, 0.0
    %v2971 = vadd.f32 %v2969, %v2970
    %v2972 = vsel %vm2446, %v2958, 0.0
    %v2973 = vadd.f32 %v2971, %v2972
    %v2974 = vsel %vm2446, %v2960, 0.0
    %v2975 = vadd.f32 %v2973, %v2974
    %v2976 = vrcp.pop %v2975
    %v2977 = vmul.f32 %v2946, %v2976
    %v2978 = vmul.f32 %v2948, %v2976
    %v2979 = vmul.f32 %v2950, %v2976
    %v2980 = vmul.f32 %v2952, %v2976
    %v2981 = vmul.f32 %v2954, %v2976
    %v2982 = vmul.f32 %v2956, %v2976
    %v2983 = vmul.f32 %v2958, %v2976
    %v2984 = vmul.f32 %v2960, %v2976
    %v2985 = vadd.f32 %v2728, %v2977
    %v2986 = vadd.f32 %v2729, %v2978
    %v2987 = vadd.f32 %v2730, %v2979
    %v2988 = vadd.f32 %v2731, %v2980
    %v2989 = vadd.f32 %v2732, %v2981
    %v2990 = vadd.f32 %v2733, %v2982
    %v2991 = vadd.f32 %v2734, %v2983
    %v2992 = vadd.f32 %v2735, %v2984
    %s2993 = scalar_lea.vmem [#allocation21], 24
    %v2994 = vld [vmem:[%s2993] sm:$0xf]
    %v2995 = vld [vmem:[%s2993 + $0x4] sm:$0xf]
    %s2996 = scalar_lea.vmem [#allocation23], 24
    %v2997 = vld [vmem:[%s2996] sm:$0xf]
    %v2998 = vld [vmem:[%s2996 + $0x4] sm:$0xf]
    %v3001 = vunpack.c.l.b16 %v2997
    %v3002 = vunpack.c.l.b16 %v2998
    %v3003 = vpack.c.b16 %v3002, %v3001
    %3005 = vmatprep.subr.bf16.mxu0 0
    %3006 = vmatpush1.bf16.msra.mxu0 %v3003
    %3007 = vmatprep.subr.bf16.mxu0 0
    %3008 = vmatpush1.bf16.msra.mxu0 0
    %3009 = vmatprep.subr.bf16.mxu0 0
    %3010 = vmatpush1.bf16.msra.mxu0 0
    %3011 = vmatprep.subr.bf16.mxu0 0
    %3012 = vmatpush1.bf16.msra.mxu0 0
    %3013 = vmatprep.subr.bf16.mxu0 0
    %3014 = vmatpush1.bf16.msra.mxu0 0
    %3015 = vmatprep.subr.bf16.mxu0 0
    %3016 = vmatpush1.bf16.msra.mxu0 0
    %3017 = vmatprep.subr.bf16.mxu0 0
    %3018 = vmatpush1.bf16.msra.mxu0 0
    %3019 = vmatprep.subr.bf16.mxu0 0
    %3020 = vmatpush1.bf16.msra.mxu0 0
    %3021 = vmatprep.subr.bf16.mxu0 0
    %3022 = vmatpush1.bf16.msra.mxu0 0
    %3023 = vmatprep.subr.bf16.mxu0 0
    %3024 = vmatpush1.bf16.msra.mxu0 0
    %3025 = vmatprep.subr.bf16.mxu0 0
    %3026 = vmatpush1.bf16.msra.mxu0 0
    %3027 = vmatprep.subr.bf16.mxu0 0
    %3028 = vmatpush1.bf16.msra.mxu0 0
    %3029 = vmatprep.subr.bf16.mxu0 0
    %3030 = vmatpush1.bf16.msra.mxu0 0
    %3031 = vmatprep.subr.bf16.mxu0 0
    %3032 = vmatpush1.bf16.msra.mxu0 0
    %3033 = vmatprep.subr.bf16.mxu0 0
    %3034 = vmatpush1.bf16.msra.mxu0 0
    %3035 = vmatprep.subr.bf16.mxu0 0
    %3036 = vmatpush1.bf16.msra.mxu0 0
    %3037 = vmatprep.mubr.bf16.mxu0 0
    %3038 = vmatmul.mubr.bf16.gmra.mrb[0].mxu0 %v2173
    %v3039 = vpop.f32.mrb[0].mxu0
    %v3040 = vadd.f32 0.0, %v3039
    %v3041 = vpop.f32.mrb[0].mxu0
    %v3042 = vpop.f32.mrb[0].mxu0
    %v3043 = vadd.f32 0.0, %v3042
    %v3044 = vpop.f32.mrb[0].mxu0
    %3045 = vdwg.mxu0
    %v3048 = vunpack.c.l.b16 %v2994
    %v3049 = vunpack.c.l.b16 %v2995
    %v3050 = vpack.c.b16 %v3049, %v3048
    %3052 = vmatprep.subr.bf16.mxu0 0
    %3053 = vmatpush1.bf16.msra.mxu0 %v3050
    %3054 = vmatprep.subr.bf16.mxu0 0
    %3055 = vmatpush1.bf16.msra.mxu0 0
    %3056 = vmatprep.subr.bf16.mxu0 0
    %3057 = vmatpush1.bf16.msra.mxu0 0
    %3058 = vmatprep.subr.bf16.mxu0 0
    %3059 = vmatpush1.bf16.msra.mxu0 0
    %3060 = vmatprep.subr.bf16.mxu0 0
    %3061 = vmatpush1.bf16.msra.mxu0 0
    %3062 = vmatprep.subr.bf16.mxu0 0
    %3063 = vmatpush1.bf16.msra.mxu0 0
    %3064 = vmatprep.subr.bf16.mxu0 0
    %3065 = vmatpush1.bf16.msra.mxu0 0
    %3066 = vmatprep.subr.bf16.mxu0 0
    %3067 = vmatpush1.bf16.msra.mxu0 0
    %3068 = vmatprep.subr.bf16.mxu0 0
    %3069 = vmatpush1.bf16.msra.mxu0 0
    %3070 = vmatprep.subr.bf16.mxu0 0
    %3071 = vmatpush1.bf16.msra.mxu0 0
    %3072 = vmatprep.subr.bf16.mxu0 0
    %3073 = vmatpush1.bf16.msra.mxu0 0
    %3074 = vmatprep.subr.bf16.mxu0 0
    %3075 = vmatpush1.bf16.msra.mxu0 0
    %3076 = vmatprep.subr.bf16.mxu0 0
    %3077 = vmatpush1.bf16.msra.mxu0 0
    %3078 = vmatprep.subr.bf16.mxu0 0
    %3079 = vmatpush1.bf16.msra.mxu0 0
    %3080 = vmatprep.subr.bf16.mxu0 0
    %3081 = vmatpush1.bf16.msra.mxu0 0
    %3082 = vmatprep.subr.bf16.mxu0 0
    %3083 = vmatpush1.bf16.msra.mxu0 0
    %3084 = vmatprep.mubr.bf16.mxu0 0
    %3085 = vmatmul.mubr.bf16.gmra.mrb[0].mxu0 %v2280
    %v3086 = vpop.f32.mrb[0].mxu0
    %v3087 = vadd.f32 %v3040, %v3086
    %v3088 = vpop.f32.mrb[0].mxu0
    %v3089 = vpop.f32.mrb[0].mxu0
    %v3090 = vadd.f32 %v3043, %v3089
    %v3091 = vpop.f32.mrb[0].mxu0
    %3092 = vdwg.mxu0
    %s3093 = scalar_lea.vmem [#allocation24], 3
    %v3094 = vld [vmem:[%s3093] sm:$0x1]
    %v3096 = vlaneseq
    %v3097 = vshrl.u32 %v3096, 7
    %v3098 = vsub.s32 0, %v3097
    %v3099 = vrot.slane %v3094, %v3098
    %v3101 = vadd.f32 %v3087, %v3099
    %v3102 = vadd.f32 %v3090, %v3099
    %v3103 = vtanh.pop %v3101
    %v3104 = vtanh.pop %v3102
    %s3105 = scalar_lea.vmem [#allocation26], 3
    %v3106 = vld [vmem:[%s3105] sm:$0x1]
    %v3108 = vlaneseq
    %v3109 = vshrl.u32 %v3108, 7
    %v3110 = vsub.s32 0, %v3109
    %v3111 = vrot.slane %v3106, %v3110
    %v3113 = vmul.f32 %v3103, %v3111
    %v3114 = vmul.f32 %v3104, %v3111
    %v3115 = vsel %vm350, %v3113, 0.0
    %3116 = vadd.xlane.f32.xlu0 %v3115
    %v3117 = vpop.xlane.xlu0 %3116
    %v3118 = vsel %vm350, %v3114, 0.0
    %3119 = vadd.xlane.f32.xlu0 %v3118
    %v3120 = vpop.xlane.xlu0 %3119
    %v3124 = vunpack.c.l.s4 269488144
    %v3125 = vunpack.c.0.s8 %v3124
    %v3126 = vlaneseq
    %v3127 = vshrl.u32 %v3126, 7
    %v3128 = vsub.s32 %v3125, %v3127
    %v3129 = vrot.slane %v3117, %v3128
    %v3131 = vunpack.c.l.s4 842150450
    %v3132 = vunpack.c.0.s8 %v3131
    %v3133 = vlaneseq
    %v3134 = vshrl.u32 %v3133, 7
    %v3135 = vsub.s32 %v3132, %v3134
    %v3136 = vrot.slane %v3117, %v3135
    %v3138 = vunpack.c.l.s4 1414812756
    %v3139 = vunpack.c.0.s8 %v3138
    %v3140 = vlaneseq
    %v3141 = vshrl.u32 %v3140, 7
    %v3142 = vsub.s32 %v3139, %v3141
    %v3143 = vrot.slane %v3117, %v3142
    %v3145 = vunpack.c.l.s4 1987475062
    %v3146 = vunpack.c.0.s8 %v3145
    %v3147 = vlaneseq
    %v3148 = vshrl.u32 %v3147, 7
    %v3149 = vsub.s32 %v3146, %v3148
    %v3150 = vrot.slane %v3117, %v3149
    %v3152 = vunpack.c.l.s4 269488144
    %v3153 = vunpack.c.0.s8 %v3152
    %v3154 = vlaneseq
    %v3155 = vshrl.u32 %v3154, 7
    %v3156 = vsub.s32 %v3153, %v3155
    %v3157 = vrot.slane %v3120, %v3156
    %v3159 = vunpack.c.l.s4 842150450
    %v3160 = vunpack.c.0.s8 %v3159
    %v3161 = vlaneseq
    %v3162 = vshrl.u32 %v3161, 7
    %v3163 = vsub.s32 %v3160, %v3162
    %v3164 = vrot.slane %v3120, %v3163
    %v3166 = vunpack.c.l.s4 1414812756
    %v3167 = vunpack.c.0.s8 %v3166
    %v3168 = vlaneseq
    %v3169 = vshrl.u32 %v3168, 7
    %v3170 = vsub.s32 %v3167, %v3169
    %v3171 = vrot.slane %v3120, %v3170
    %v3173 = vunpack.c.l.s4 1987475062
    %v3174 = vunpack.c.0.s8 %v3173
    %v3175 = vlaneseq
    %v3176 = vshrl.u32 %v3175, 7
    %v3177 = vsub.s32 %v3174, %v3176
    %v3178 = vrot.slane %v3120, %v3177
    %v3187 = vmax.f32 %v3129, %v3157
    %v3188 = vmax.f32 %v3136, %v3164
    %v3189 = vmax.f32 %v3143, %v3171
    %v3190 = vmax.f32 %v3150, %v3178
    %v3191 = vmax.f32 %v3187, %v3188
    %v3192 = vmax.f32 %v3189, %v3190
    %v3193 = vmax.f32 %v3191, %v3192
    %v3194 = vsub.f32 %v3129, %v3193
    %v3195 = vsub.f32 %v3136, %v3193
    %v3196 = vsub.f32 %v3143, %v3193
    %v3197 = vsub.f32 %v3150, %v3193
    %v3198 = vsub.f32 %v3157, %v3193
    %v3199 = vsub.f32 %v3164, %v3193
    %v3200 = vsub.f32 %v3171, %v3193
    %v3201 = vsub.f32 %v3178, %v3193
    %v3202 = vmul.f32 %v3194, 1.442695
    %v3203 = vpow.pop %v3202
    %v3204 = vmul.f32 %v3195, 1.442695
    %v3205 = vpow.pop %v3204
    %v3206 = vmul.f32 %v3196, 1.442695
    %v3207 = vpow.pop %v3206
    %v3208 = vmul.f32 %v3197, 1.442695
    %v3209 = vpow.pop %v3208
    %v3210 = vmul.f32 %v3198, 1.442695
    %v3211 = vpow.pop %v3210
    %v3212 = vmul.f32 %v3199, 1.442695
    %v3213 = vpow.pop %v3212
    %v3214 = vmul.f32 %v3200, 1.442695
    %v3215 = vpow.pop %v3214
    %v3216 = vmul.f32 %v3201, 1.442695
    %v3217 = vpow.pop %v3216
    %v3218 = vsel %vm2446, %v3203, 0.0
    %v3219 = vsel %vm2446, %v3205, 0.0
    %v3220 = vadd.f32 %v3218, %v3219
    %v3221 = vsel %vm2446, %v3207, 0.0
    %v3222 = vadd.f32 %v3220, %v3221
    %v3223 = vsel %vm2446, %v3209, 0.0
    %v3224 = vadd.f32 %v3222, %v3223
    %v3225 = vsel %vm2446, %v3211, 0.0
    %v3226 = vadd.f32 %v3224, %v3225
    %v3227 = vsel %vm2446, %v3213, 0.0
    %v3228 = vadd.f32 %v3226, %v3227
    %v3229 = vsel %vm2446, %v3215, 0.0
    %v3230 = vadd.f32 %v3228, %v3229
    %v3231 = vsel %vm2446, %v3217, 0.0
    %v3232 = vadd.f32 %v3230, %v3231
    %v3233 = vrcp.pop %v3232
    %v3234 = vmul.f32 %v3203, %v3233
    %v3235 = vmul.f32 %v3205, %v3233
    %v3236 = vmul.f32 %v3207, %v3233
    %v3237 = vmul.f32 %v3209, %v3233
    %v3238 = vmul.f32 %v3211, %v3233
    %v3239 = vmul.f32 %v3213, %v3233
    %v3240 = vmul.f32 %v3215, %v3233
    %v3241 = vmul.f32 %v3217, %v3233
    %v3242 = vadd.f32 %v2985, %v3234
    %v3243 = vadd.f32 %v2986, %v3235
    %v3244 = vadd.f32 %v2987, %v3236
    %v3245 = vadd.f32 %v2988, %v3237
    %v3246 = vadd.f32 %v2989, %v3238
    %v3247 = vadd.f32 %v2990, %v3239
    %v3248 = vadd.f32 %v2991, %v3240
    %v3249 = vadd.f32 %v2992, %v3241
    %s3250 = scalar_lea.vmem [#allocation21], 32
    %v3251 = vld [vmem:[%s3250] sm:$0xf]
    %v3252 = vld [vmem:[%s3250 + $0x4] sm:$0xf]
    %s3253 = scalar_lea.vmem [#allocation23], 32
    %v3254 = vld [vmem:[%s3253] sm:$0xf]
    %v3255 = vld [vmem:[%s3253 + $0x4] sm:$0xf]
    %v3258 = vunpack.c.l.b16 %v3254
    %v3259 = vunpack.c.l.b16 %v3255
    %v3260 = vpack.c.b16 %v3259, %v3258
    %3262 = vmatprep.subr.bf16.mxu0 0
    %3263 = vmatpush1.bf16.msra.mxu0 %v3260
    %3264 = vmatprep.subr.bf16.mxu0 0
    %3265 = vmatpush1.bf16.msra.mxu0 0
    %3266 = vmatprep.subr.bf16.mxu0 0
    %3267 = vmatpush1.bf16.msra.mxu0 0
    %3268 = vmatprep.subr.bf16.mxu0 0
    %3269 = vmatpush1.bf16.msra.mxu0 0
    %3270 = vmatprep.subr.bf16.mxu0 0
    %3271 = vmatpush1.bf16.msra.mxu0 0
    %3272 = vmatprep.subr.bf16.mxu0 0
    %3273 = vmatpush1.bf16.msra.mxu0 0
    %3274 = vmatprep.subr.bf16.mxu0 0
    %3275 = vmatpush1.bf16.msra.mxu0 0
    %3276 = vmatprep.subr.bf16.mxu0 0
    %3277 = vmatpush1.bf16.msra.mxu0 0
    %3278 = vmatprep.subr.bf16.mxu0 0
    %3279 = vmatpush1.bf16.msra.mxu0 0
    %3280 = vmatprep.subr.bf16.mxu0 0
    %3281 = vmatpush1.bf16.msra.mxu0 0
    %3282 = vmatprep.subr.bf16.mxu0 0
    %3283 = vmatpush1.bf16.msra.mxu0 0
    %3284 = vmatprep.subr.bf16.mxu0 0
    %3285 = vmatpush1.bf16.msra.mxu0 0
    %3286 = vmatprep.subr.bf16.mxu0 0
    %3287 = vmatpush1.bf16.msra.mxu0 0
    %3288 = vmatprep.subr.bf16.mxu0 0
    %3289 = vmatpush1.bf16.msra.mxu0 0
    %3290 = vmatprep.subr.bf16.mxu0 0
    %3291 = vmatpush1.bf16.msra.mxu0 0
    %3292 = vmatprep.subr.bf16.mxu0 0
    %3293 = vmatpush1.bf16.msra.mxu0 0
    %3294 = vmatprep.mubr.bf16.mxu0 0
    %3295 = vmatmul.mubr.bf16.gmra.mrb[0].mxu0 %v2173
    %v3296 = vpop.f32.mrb[0].mxu0
    %v3297 = vadd.f32 0.0, %v3296
    %v3298 = vpop.f32.mrb[0].mxu0
    %v3299 = vpop.f32.mrb[0].mxu0
    %v3300 = vadd.f32 0.0, %v3299
    %v3301 = vpop.f32.mrb[0].mxu0
    %3302 = vdwg.mxu0
    %v3305 = vunpack.c.l.b16 %v3251
    %v3306 = vunpack.c.l.b16 %v3252
    %v3307 = vpack.c.b16 %v3306, %v3305
    %3309 = vmatprep.subr.bf16.mxu0 0
    %3310 = vmatpush1.bf16.msra.mxu0 %v3307
    %3311 = vmatprep.subr.bf16.mxu0 0
    %3312 = vmatpush1.bf16.msra.mxu0 0
    %3313 = vmatprep.subr.bf16.mxu0 0
    %3314 = vmatpush1.bf16.msra.mxu0 0
    %3315 = vmatprep.subr.bf16.mxu0 0
    %3316 = vmatpush1.bf16.msra.mxu0 0
    %3317 = vmatprep.subr.bf16.mxu0 0
    %3318 = vmatpush1.bf16.msra.mxu0 0
    %3319 = vmatprep.subr.bf16.mxu0 0
    %3320 = vmatpush1.bf16.msra.mxu0 0
    %3321 = vmatprep.subr.bf16.mxu0 0
    %3322 = vmatpush1.bf16.msra.mxu0 0
    %3323 = vmatprep.subr.bf16.mxu0 0
    %3324 = vmatpush1.bf16.msra.mxu0 0
    %3325 = vmatprep.subr.bf16.mxu0 0
    %3326 = vmatpush1.bf16.msra.mxu0 0
    %3327 = vmatprep.subr.bf16.mxu0 0
    %3328 = vmatpush1.bf16.msra.mxu0 0
    %3329 = vmatprep.subr.bf16.mxu0 0
    %3330 = vmatpush1.bf16.msra.mxu0 0
    %3331 = vmatprep.subr.bf16.mxu0 0
    %3332 = vmatpush1.bf16.msra.mxu0 0
    %3333 = vmatprep.subr.bf16.mxu0 0
    %3334 = vmatpush1.bf16.msra.mxu0 0
    %3335 = vmatprep.subr.bf16.mxu0 0
    %3336 = vmatpush1.bf16.msra.mxu0 0
    %3337 = vmatprep.subr.bf16.mxu0 0
    %3338 = vmatpush1.bf16.msra.mxu0 0
    %3339 = vmatprep.subr.bf16.mxu0 0
    %3340 = vmatpush1.bf16.msra.mxu0 0
    %3341 = vmatprep.mubr.bf16.mxu0 0
    %3342 = vmatmul.mubr.bf16.gmra.mrb[0].mxu0 %v2280
    %v3343 = vpop.f32.mrb[0].mxu0
    %v3344 = vadd.f32 %v3297, %v3343
    %v3345 = vpop.f32.mrb[0].mxu0
    %v3346 = vpop.f32.mrb[0].mxu0
    %v3347 = vadd.f32 %v3300, %v3346
    %v3348 = vpop.f32.mrb[0].mxu0
    %3349 = vdwg.mxu0
    %s3350 = scalar_lea.vmem [#allocation24], 4
    %v3351 = vld [vmem:[%s3350] sm:$0x1]
    %v3353 = vlaneseq
    %v3354 = vshrl.u32 %v3353, 7
    %v3355 = vsub.s32 0, %v3354
    %v3356 = vrot.slane %v3351, %v3355
    %v3358 = vadd.f32 %v3344, %v3356
    %v3359 = vadd.f32 %v3347, %v3356
    %v3360 = vtanh.pop %v3358
    %v3361 = vtanh.pop %v3359
    %s3362 = scalar_lea.vmem [#allocation26], 4
    %v3363 = vld [vmem:[%s3362] sm:$0x1]
    %v3365 = vlaneseq
    %v3366 = vshrl.u32 %v3365, 7
    %v3367 = vsub.s32 0, %v3366
    %v3368 = vrot.slane %v3363, %v3367
    %v3370 = vmul.f32 %v3360, %v3368
    %v3371 = vmul.f32 %v3361, %v3368
    %v3372 = vsel %vm350, %v3370, 0.0
    %3373 = vadd.xlane.f32.xlu0 %v3372
    %v3374 = vpop.xlane.xlu0 %3373
    %v3375 = vsel %vm350, %v3371, 0.0
    %3376 = vadd.xlane.f32.xlu0 %v3375
    %v3377 = vpop.xlane.xlu0 %3376
    %v3381 = vunpack.c.l.s4 269488144
    %v3382 = vunpack.c.0.s8 %v3381
    %v3383 = vlaneseq
    %v3384 = vshrl.u32 %v3383, 7
    %v3385 = vsub.s32 %v3382, %v3384
    %v3386 = vrot.slane %v3374, %v3385
    %v3388 = vunpack.c.l.s4 842150450
    %v3389 = vunpack.c.0.s8 %v3388
    %v3390 = vlaneseq
    %v3391 = vshrl.u32 %v3390, 7
    %v3392 = vsub.s32 %v3389, %v3391
    %v3393 = vrot.slane %v3374, %v3392
    %v3395 = vunpack.c.l.s4 1414812756
    %v3396 = vunpack.c.0.s8 %v3395
    %v3397 = vlaneseq
    %v3398 = vshrl.u32 %v3397, 7
    %v3399 = vsub.s32 %v3396, %v3398
    %v3400 = vrot.slane %v3374, %v3399
    %v3402 = vunpack.c.l.s4 1987475062
    %v3403 = vunpack.c.0.s8 %v3402
    %v3404 = vlaneseq
    %v3405 = vshrl.u32 %v3404, 7
    %v3406 = vsub.s32 %v3403, %v3405
    %v3407 = vrot.slane %v3374, %v3406
    %v3409 = vunpack.c.l.s4 269488144
    %v3410 = vunpack.c.0.s8 %v3409
    %v3411 = vlaneseq
    %v3412 = vshrl.u32 %v3411, 7
    %v3413 = vsub.s32 %v3410, %v3412
    %v3414 = vrot.slane %v3377, %v3413
    %v3416 = vunpack.c.l.s4 842150450
    %v3417 = vunpack.c.0.s8 %v3416
    %v3418 = vlaneseq
    %v3419 = vshrl.u32 %v3418, 7
    %v3420 = vsub.s32 %v3417, %v3419
    %v3421 = vrot.slane %v3377, %v3420
    %v3423 = vunpack.c.l.s4 1414812756
    %v3424 = vunpack.c.0.s8 %v3423
    %v3425 = vlaneseq
    %v3426 = vshrl.u32 %v3425, 7
    %v3427 = vsub.s32 %v3424, %v3426
    %v3428 = vrot.slane %v3377, %v3427
    %v3430 = vunpack.c.l.s4 1987475062
    %v3431 = vunpack.c.0.s8 %v3430
    %v3432 = vlaneseq
    %v3433 = vshrl.u32 %v3432, 7
    %v3434 = vsub.s32 %v3431, %v3433
    %v3435 = vrot.slane %v3377, %v3434
    %v3444 = vmax.f32 %v3386, %v3414
    %v3445 = vmax.f32 %v3393, %v3421
    %v3446 = vmax.f32 %v3400, %v3428
    %v3447 = vmax.f32 %v3407, %v3435
    %v3448 = vmax.f32 %v3444, %v3445
    %v3449 = vmax.f32 %v3446, %v3447
    %v3450 = vmax.f32 %v3448, %v3449
    %v3451 = vsub.f32 %v3386, %v3450
    %v3452 = vsub.f32 %v3393, %v3450
    %v3453 = vsub.f32 %v3400, %v3450
    %v3454 = vsub.f32 %v3407, %v3450
    %v3455 = vsub.f32 %v3414, %v3450
    %v3456 = vsub.f32 %v3421, %v3450
    %v3457 = vsub.f32 %v3428, %v3450
    %v3458 = vsub.f32 %v3435, %v3450
    %v3459 = vmul.f32 %v3451, 1.442695
    %v3460 = vpow.pop %v3459
    %v3461 = vmul.f32 %v3452, 1.442695
    %v3462 = vpow.pop %v3461
    %v3463 = vmul.f32 %v3453, 1.442695
    %v3464 = vpow.pop %v3463
    %v3465 = vmul.f32 %v3454, 1.442695
    %v3466 = vpow.pop %v3465
    %v3467 = vmul.f32 %v3455, 1.442695
    %v3468 = vpow.pop %v3467
    %v3469 = vmul.f32 %v3456, 1.442695
    %v3470 = vpow.pop %v3469
    %v3471 = vmul.f32 %v3457, 1.442695
    %v3472 = vpow.pop %v3471
    %v3473 = vmul.f32 %v3458, 1.442695
    %v3474 = vpow.pop %v3473
    %v3475 = vsel %vm2446, %v3460, 0.0
    %v3476 = vsel %vm2446, %v3462, 0.0
    %v3477 = vadd.f32 %v3475, %v3476
    %v3478 = vsel %vm2446, %v3464, 0.0
    %v3479 = vadd.f32 %v3477, %v3478
    %v3480 = vsel %vm2446, %v3466, 0.0
    %v3481 = vadd.f32 %v3479, %v3480
    %v3482 = vsel %vm2446, %v3468, 0.0
    %v3483 = vadd.f32 %v3481, %v3482
    %v3484 = vsel %vm2446, %v3470, 0.0
    %v3485 = vadd.f32 %v3483, %v3484
    %v3486 = vsel %vm2446, %v3472, 0.0
    %v3487 = vadd.f32 %v3485, %v3486
    %v3488 = vsel %vm2446, %v3474, 0.0
    %v3489 = vadd.f32 %v3487, %v3488
    %v3490 = vrcp.pop %v3489
    %v3491 = vmul.f32 %v3460, %v3490
    %v3492 = vmul.f32 %v3462, %v3490
    %v3493 = vmul.f32 %v3464, %v3490
    %v3494 = vmul.f32 %v3466, %v3490
    %v3495 = vmul.f32 %v3468, %v3490
    %v3496 = vmul.f32 %v3470, %v3490
    %v3497 = vmul.f32 %v3472, %v3490
    %v3498 = vmul.f32 %v3474, %v3490
    %v3499 = vadd.f32 %v3242, %v3491
    %v3500 = vadd.f32 %v3243, %v3492
    %v3501 = vadd.f32 %v3244, %v3493
    %v3502 = vadd.f32 %v3245, %v3494
    %v3503 = vadd.f32 %v3246, %v3495
    %v3504 = vadd.f32 %v3247, %v3496
    %v3505 = vadd.f32 %v3248, %v3497
    %v3506 = vadd.f32 %v3249, %v3498
    %s3507 = scalar_lea.vmem [#allocation21], 40
    %v3508 = vld [vmem:[%s3507] sm:$0xf]
    %v3509 = vld [vmem:[%s3507 + $0x4] sm:$0xf]
    %s3510 = scalar_lea.vmem [#allocation23], 40
    %v3511 = vld [vmem:[%s3510] sm:$0xf]
    %v3512 = vld [vmem:[%s3510 + $0x4] sm:$0xf]
    %v3515 = vunpack.c.l.b16 %v3511
    %v3516 = vunpack.c.l.b16 %v3512
    %v3517 = vpack.c.b16 %v3516, %v3515
    %3519 = vmatprep.subr.bf16.mxu0 0
    %3520 = vmatpush1.bf16.msra.mxu0 %v3517
    %3521 = vmatprep.subr.bf16.mxu0 0
    %3522 = vmatpush1.bf16.msra.mxu0 0
    %3523 = vmatprep.subr.bf16.mxu0 0
    %3524 = vmatpush1.bf16.msra.mxu0 0
    %3525 = vmatprep.subr.bf16.mxu0 0
    %3526 = vmatpush1.bf16.msra.mxu0 0
    %3527 = vmatprep.subr.bf16.mxu0 0
    %3528 = vmatpush1.bf16.msra.mxu0 0
    %3529 = vmatprep.subr.bf16.mxu0 0
    %3530 = vmatpush1.bf16.msra.mxu0 0
    %3531 = vmatprep.subr.bf16.mxu0 0
    %3532 = vmatpush1.bf16.msra.mxu0 0
    %3533 = vmatprep.subr.bf16.mxu0 0
    %3534 = vmatpush1.bf16.msra.mxu0 0
    %3535 = vmatprep.subr.bf16.mxu0 0
    %3536 = vmatpush1.bf16.msra.mxu0 0
    %3537 = vmatprep.subr.bf16.mxu0 0
    %3538 = vmatpush1.bf16.msra.mxu0 0
    %3539 = vmatprep.subr.bf16.mxu0 0
    %3540 = vmatpush1.bf16.msra.mxu0 0
    %3541 = vmatprep.subr.bf16.mxu0 0
    %3542 = vmatpush1.bf16.msra.mxu0 0
    %3543 = vmatprep.subr.bf16.mxu0 0
    %3544 = vmatpush1.bf16.msra.mxu0 0
    %3545 = vmatprep.subr.bf16.mxu0 0
    %3546 = vmatpush1.bf16.msra.mxu0 0
    %3547 = vmatprep.subr.bf16.mxu0 0
    %3548 = vmatpush1.bf16.msra.mxu0 0
    %3549 = vmatprep.subr.bf16.mxu0 0
    %3550 = vmatpush1.bf16.msra.mxu0 0
    %3551 = vmatprep.mubr.bf16.mxu0 0
    %3552 = vmatmul.mubr.bf16.gmra.mrb[0].mxu0 %v2173
    %v3553 = vpop.f32.mrb[0].mxu0
    %v3554 = vadd.f32 0.0, %v3553
    %v3555 = vpop.f32.mrb[0].mxu0
    %v3556 = vpop.f32.mrb[0].mxu0
    %v3557 = vadd.f32 0.0, %v3556
    %v3558 = vpop.f32.mrb[0].mxu0
    %3559 = vdwg.mxu0
    %v3562 = vunpack.c.l.b16 %v3508
    %v3563 = vunpack.c.l.b16 %v3509
    %v3564 = vpack.c.b16 %v3563, %v3562
    %3566 = vmatprep.subr.bf16.mxu0 0
    %3567 = vmatpush1.bf16.msra.mxu0 %v3564
    %3568 = vmatprep.subr.bf16.mxu0 0
    %3569 = vmatpush1.bf16.msra.mxu0 0
    %3570 = vmatprep.subr.bf16.mxu0 0
    %3571 = vmatpush1.bf16.msra.mxu0 0
    %3572 = vmatprep.subr.bf16.mxu0 0
    %3573 = vmatpush1.bf16.msra.mxu0 0
    %3574 = vmatprep.subr.bf16.mxu0 0
    %3575 = vmatpush1.bf16.msra.mxu0 0
    %3576 = vmatprep.subr.bf16.mxu0 0
    %3577 = vmatpush1.bf16.msra.mxu0 0
    %3578 = vmatprep.subr.bf16.mxu0 0
    %3579 = vmatpush1.bf16.msra.mxu0 0
    %3580 = vmatprep.subr.bf16.mxu0 0
    %3581 = vmatpush1.bf16.msra.mxu0 0
    %3582 = vmatprep.subr.bf16.mxu0 0
    %3583 = vmatpush1.bf16.msra.mxu0 0
    %3584 = vmatprep.subr.bf16.mxu0 0
    %3585 = vmatpush1.bf16.msra.mxu0 0
    %3586 = vmatprep.subr.bf16.mxu0 0
    %3587 = vmatpush1.bf16.msra.mxu0 0
    %3588 = vmatprep.subr.bf16.mxu0 0
    %3589 = vmatpush1.bf16.msra.mxu0 0
    %3590 = vmatprep.subr.bf16.mxu0 0
    %3591 = vmatpush1.bf16.msra.mxu0 0
    %3592 = vmatprep.subr.bf16.mxu0 0
    %3593 = vmatpush1.bf16.msra.mxu0 0
    %3594 = vmatprep.subr.bf16.mxu0 0
    %3595 = vmatpush1.bf16.msra.mxu0 0
    %3596 = vmatprep.subr.bf16.mxu0 0
    %3597 = vmatpush1.bf16.msra.mxu0 0
    %3598 = vmatprep.mubr.bf16.mxu0 0
    %3599 = vmatmul.mubr.bf16.gmra.mrb[0].mxu0 %v2280
    %v3600 = vpop.f32.mrb[0].mxu0
    %v3601 = vadd.f32 %v3554, %v3600
    %v3602 = vpop.f32.mrb[0].mxu0
    %v3603 = vpop.f32.mrb[0].mxu0
    %v3604 = vadd.f32 %v3557, %v3603
    %v3605 = vpop.f32.mrb[0].mxu0
    %3606 = vdwg.mxu0
    %s3607 = scalar_lea.vmem [#allocation24], 5
    %v3608 = vld [vmem:[%s3607] sm:$0x1]
    %v3610 = vlaneseq
    %v3611 = vshrl.u32 %v3610, 7
    %v3612 = vsub.s32 0, %v3611
    %v3613 = vrot.slane %v3608, %v3612
    %v3615 = vadd.f32 %v3601, %v3613
    %v3616 = vadd.f32 %v3604, %v3613
    %v3617 = vtanh.pop %v3615
    %v3618 = vtanh.pop %v3616
    %s3619 = scalar_lea.vmem [#allocation26], 5
    %v3620 = vld [vmem:[%s3619] sm:$0x1]
    %v3622 = vlaneseq
    %v3623 = vshrl.u32 %v3622, 7
    %v3624 = vsub.s32 0, %v3623
    %v3625 = vrot.slane %v3620, %v3624
    %v3627 = vmul.f32 %v3617, %v3625
    %v3628 = vmul.f32 %v3618, %v3625
    %v3629 = vsel %vm350, %v3627, 0.0
    %3630 = vadd.xlane.f32.xlu0 %v3629
    %v3631 = vpop.xlane.xlu0 %3630
    %v3632 = vsel %vm350, %v3628, 0.0
    %3633 = vadd.xlane.f32.xlu0 %v3632
    %v3634 = vpop.xlane.xlu0 %3633
    %v3638 = vunpack.c.l.s4 269488144
    %v3639 = vunpack.c.0.s8 %v3638
    %v3640 = vlaneseq
    %v3641 = vshrl.u32 %v3640, 7
    %v3642 = vsub.s32 %v3639, %v3641
    %v3643 = vrot.slane %v3631, %v3642
    %v3645 = vunpack.c.l.s4 842150450
    %v3646 = vunpack.c.0.s8 %v3645
    %v3647 = vlaneseq
    %v3648 = vshrl.u32 %v3647, 7
    %v3649 = vsub.s32 %v3646, %v3648
    %v3650 = vrot.slane %v3631, %v3649
    %v3652 = vunpack.c.l.s4 1414812756
    %v3653 = vunpack.c.0.s8 %v3652
    %v3654 = vlaneseq
    %v3655 = vshrl.u32 %v3654, 7
    %v3656 = vsub.s32 %v3653, %v3655
    %v3657 = vrot.slane %v3631, %v3656
    %v3659 = vunpack.c.l.s4 1987475062
    %v3660 = vunpack.c.0.s8 %v3659
    %v3661 = vlaneseq
    %v3662 = vshrl.u32 %v3661, 7
    %v3663 = vsub.s32 %v3660, %v3662
    %v3664 = vrot.slane %v3631, %v3663
    %v3666 = vunpack.c.l.s4 269488144
    %v3667 = vunpack.c.0.s8 %v3666
    %v3668 = vlaneseq
    %v3669 = vshrl.u32 %v3668, 7
    %v3670 = vsub.s32 %v3667, %v3669
    %v3671 = vrot.slane %v3634, %v3670
    %v3673 = vunpack.c.l.s4 842150450
    %v3674 = vunpack.c.0.s8 %v3673
    %v3675 = vlaneseq
    %v3676 = vshrl.u32 %v3675, 7
    %v3677 = vsub.s32 %v3674, %v3676
    %v3678 = vrot.slane %v3634, %v3677
    %v3680 = vunpack.c.l.s4 1414812756
    %v3681 = vunpack.c.0.s8 %v3680
    %v3682 = vlaneseq
    %v3683 = vshrl.u32 %v3682, 7
    %v3684 = vsub.s32 %v3681, %v3683
    %v3685 = vrot.slane %v3634, %v3684
    %v3687 = vunpack.c.l.s4 1987475062
    %v3688 = vunpack.c.0.s8 %v3687
    %v3689 = vlaneseq
    %v3690 = vshrl.u32 %v3689, 7
    %v3691 = vsub.s32 %v3688, %v3690
    %v3692 = vrot.slane %v3634, %v3691
    %v3701 = vmax.f32 %v3643, %v3671
    %v3702 = vmax.f32 %v3650, %v3678
    %v3703 = vmax.f32 %v3657, %v3685
    %v3704 = vmax.f32 %v3664, %v3692
    %v3705 = vmax.f32 %v3701, %v3702
    %v3706 = vmax.f32 %v3703, %v3704
    %v3707 = vmax.f32 %v3705, %v3706
    %v3708 = vsub.f32 %v3643, %v3707
    %v3709 = vsub.f32 %v3650, %v3707
    %v3710 = vsub.f32 %v3657, %v3707
    %v3711 = vsub.f32 %v3664, %v3707
    %v3712 = vsub.f32 %v3671, %v3707
    %v3713 = vsub.f32 %v3678, %v3707
    %v3714 = vsub.f32 %v3685, %v3707
    %v3715 = vsub.f32 %v3692, %v3707
    %v3716 = vmul.f32 %v3708, 1.442695
    %v3717 = vpow.pop %v3716
    %v3718 = vmul.f32 %v3709, 1.442695
    %v3719 = vpow.pop %v3718
    %v3720 = vmul.f32 %v3710, 1.442695
    %v3721 = vpow.pop %v3720
    %v3722 = vmul.f32 %v3711, 1.442695
    %v3723 = vpow.pop %v3722
    %v3724 = vmul.f32 %v3712, 1.442695
    %v3725 = vpow.pop %v3724
    %v3726 = vmul.f32 %v3713, 1.442695
    %v3727 = vpow.pop %v3726
    %v3728 = vmul.f32 %v3714, 1.442695
    %v3729 = vpow.pop %v3728
    %v3730 = vmul.f32 %v3715, 1.442695
    %v3731 = vpow.pop %v3730
    %v3732 = vsel %vm2446, %v3717, 0.0
    %v3733 = vsel %vm2446, %v3719, 0.0
    %v3734 = vadd.f32 %v3732, %v3733
    %v3735 = vsel %vm2446, %v3721, 0.0
    %v3736 = vadd.f32 %v3734, %v3735
    %v3737 = vsel %vm2446, %v3723, 0.0
    %v3738 = vadd.f32 %v3736, %v3737
    %v3739 = vsel %vm2446, %v3725, 0.0
    %v3740 = vadd.f32 %v3738, %v3739
    %v3741 = vsel %vm2446, %v3727, 0.0
    %v3742 = vadd.f32 %v3740, %v3741
    %v3743 = vsel %vm2446, %v3729, 0.0
    %v3744 = vadd.f32 %v3742, %v3743
    %v3745 = vsel %vm2446, %v3731, 0.0
    %v3746 = vadd.f32 %v3744, %v3745
    %v3747 = vrcp.pop %v3746
    %v3748 = vmul.f32 %v3717, %v3747
    %v3749 = vmul.f32 %v3719, %v3747
    %v3750 = vmul.f32 %v3721, %v3747
    %v3751 = vmul.f32 %v3723, %v3747
    %v3752 = vmul.f32 %v3725, %v3747
    %v3753 = vmul.f32 %v3727, %v3747
    %v3754 = vmul.f32 %v3729, %v3747
    %v3755 = vmul.f32 %v3731, %v3747
    %v3756 = vadd.f32 %v3499, %v3748
    %v3757 = vadd.f32 %v3500, %v3749
    %v3758 = vadd.f32 %v3501, %v3750
    %v3759 = vadd.f32 %v3502, %v3751
    %v3760 = vadd.f32 %v3503, %v3752
    %v3761 = vadd.f32 %v3504, %v3753
    %v3762 = vadd.f32 %v3505, %v3754
    %v3763 = vadd.f32 %v3506, %v3755
    %v3764 = vmul.f32 %v3756, 0.16666667
    %v3765 = vmul.f32 %v3757, 0.16666667
    %v3766 = vmul.f32 %v3758, 0.16666667
    %v3767 = vmul.f32 %v3759, 0.16666667
    %v3768 = vmul.f32 %v3760, 0.16666667
    %v3769 = vmul.f32 %v3761, 0.16666667
    %v3770 = vmul.f32 %v3762, 0.16666667
    %v3771 = vmul.f32 %v3763, 0.16666667
    %v3772 = vunpack.c.l.bf16 %v2089
    %v3773 = vunpack.c.l.bf16 %v2090
    %v3774 = vunpack.c.l.bf16 %v2091
    %v3775 = vunpack.c.l.bf16 %v2092
    %v3776 = vunpack.c.l.bf16 %v2093
    %v3777 = vunpack.c.l.bf16 %v2094
    %v3778 = vunpack.c.l.bf16 %v2095
    %v3779 = vunpack.c.l.bf16 %v2096
    %3781 = vset.pattern.permute.xlu0 0
    %3782 = vperm.xlu0 %3781, %v3764
    %v3783 = vpop.permute.xlu0 %3782
    %v3786 = vunpack.c.l.s4 269488144
    %v3787 = vunpack.c.0.s8 %v3786
    %v3788 = vlaneseq
    %v3789 = vshrl.u32 %v3788, 7
    %v3790 = vsub.s32 %v3787, %v3789
    %v3791 = vrot.slane %v3783, %v3790
    %3793 = vset.pattern.permute.xlu0 0
    %3794 = vperm.xlu0 %3793, %v3765
    %v3795 = vpop.permute.xlu0 %3794
    %v3798 = vunpack.c.l.s4 269488144
    %v3799 = vunpack.c.0.s8 %v3798
    %v3800 = vlaneseq
    %v3801 = vshrl.u32 %v3800, 7
    %v3802 = vsub.s32 %v3799, %v3801
    %v3803 = vrot.slane %v3795, %v3802
    %3805 = vset.pattern.permute.xlu0 0
    %3806 = vperm.xlu0 %3805, %v3766
    %v3807 = vpop.permute.xlu0 %3806
    %v3810 = vunpack.c.l.s4 269488144
    %v3811 = vunpack.c.0.s8 %v3810
    %v3812 = vlaneseq
    %v3813 = vshrl.u32 %v3812, 7
    %v3814 = vsub.s32 %v3811, %v3813
    %v3815 = vrot.slane %v3807, %v3814
    %3817 = vset.pattern.permute.xlu0 0
    %3818 = vperm.xlu0 %3817, %v3767
    %v3819 = vpop.permute.xlu0 %3818
    %v3822 = vunpack.c.l.s4 269488144
    %v3823 = vunpack.c.0.s8 %v3822
    %v3824 = vlaneseq
    %v3825 = vshrl.u32 %v3824, 7
    %v3826 = vsub.s32 %v3823, %v3825
    %v3827 = vrot.slane %v3819, %v3826
    %3829 = vset.pattern.permute.xlu0 0
    %3830 = vperm.xlu0 %3829, %v3768
    %v3831 = vpop.permute.xlu0 %3830
    %v3834 = vunpack.c.l.s4 269488144
    %v3835 = vunpack.c.0.s8 %v3834
    %v3836 = vlaneseq
    %v3837 = vshrl.u32 %v3836, 7
    %v3838 = vsub.s32 %v3835, %v3837
    %v3839 = vrot.slane %v3831, %v3838
    %3841 = vset.pattern.permute.xlu0 0
    %3842 = vperm.xlu0 %3841, %v3769
    %v3843 = vpop.permute.xlu0 %3842
    %v3846 = vunpack.c.l.s4 269488144
    %v3847 = vunpack.c.0.s8 %v3846
    %v3848 = vlaneseq
    %v3849 = vshrl.u32 %v3848, 7
    %v3850 = vsub.s32 %v3847, %v3849
    %v3851 = vrot.slane %v3843, %v3850
    %3853 = vset.pattern.permute.xlu0 0
    %3854 = vperm.xlu0 %3853, %v3770
    %v3855 = vpop.permute.xlu0 %3854
    %v3858 = vunpack.c.l.s4 269488144
    %v3859 = vunpack.c.0.s8 %v3858
    %v3860 = vlaneseq
    %v3861 = vshrl.u32 %v3860, 7
    %v3862 = vsub.s32 %v3859, %v3861
    %v3863 = vrot.slane %v3855, %v3862
    %3865 = vset.pattern.permute.xlu0 0
    %3866 = vperm.xlu0 %3865, %v3771
    %v3867 = vpop.permute.xlu0 %3866
    %v3870 = vunpack.c.l.s4 269488144
    %v3871 = vunpack.c.0.s8 %v3870
    %v3872 = vlaneseq
    %v3873 = vshrl.u32 %v3872, 7
    %v3874 = vsub.s32 %v3871, %v3873
    %v3875 = vrot.slane %v3867, %v3874
    %v3876 = vmul.f32 %v3791, %v3772
    %v3877 = vmul.f32 %v3803, %v3773
    %v3878 = vmul.f32 %v3815, %v3774
    %v3879 = vmul.f32 %v3827, %v3775
    %v3880 = vmul.f32 %v3839, %v3776
    %v3881 = vmul.f32 %v3851, %v3777
    %v3882 = vmul.f32 %v3863, %v3778
    %v3883 = vmul.f32 %v3875, %v3779
    %vm3884 = vcmask 123904
    %v3885 = vsel %vm3884, %v3876, 0.0
    %v3886 = vsel %vm3884, %v3877, 0.0
    %v3887 = vadd.f32 %v3885, %v3886
    %v3888 = vsel %vm3884, %v3878, 0.0
    %v3889 = vadd.f32 %v3887, %v3888
    %v3890 = vsel %vm3884, %v3879, 0.0
    %v3891 = vadd.f32 %v3889, %v3890
    %v3892 = vsel %vm3884, %v3880, 0.0
    %v3893 = vadd.f32 %v3891, %v3892
    %v3894 = vsel %vm3884, %v3881, 0.0
    %v3895 = vadd.f32 %v3893, %v3894
    %v3896 = vsel %vm3884, %v3882, 0.0
    %v3897 = vadd.f32 %v3895, %v3896
    %v3898 = vsel %vm3884, %v3883, 0.0
    %v3899 = vadd.f32 %v3897, %v3898
    %v3900 = vunpack.c.l.bf16 %v2097
    %v3901 = vunpack.c.l.bf16 %v2098
    %v3902 = vunpack.c.l.bf16 %v2099
    %v3903 = vunpack.c.l.bf16 %v2100
    %v3904 = vunpack.c.l.bf16 %v2101
    %v3905 = vunpack.c.l.bf16 %v2102
    %v3906 = vunpack.c.l.bf16 %v2103
    %v3907 = vunpack.c.l.bf16 %v2104
    %v3908 = vmul.f32 %v3791, %v3900
    %v3909 = vmul.f32 %v3803, %v3901
    %v3910 = vmul.f32 %v3815, %v3902
    %v3911 = vmul.f32 %v3827, %v3903
    %v3912 = vmul.f32 %v3839, %v3904
    %v3913 = vmul.f32 %v3851, %v3905
    %v3914 = vmul.f32 %v3863, %v3906
    %v3915 = vmul.f32 %v3875, %v3907
    %v3916 = vsel %vm3884, %v3908, 0.0
    %v3917 = vsel %vm3884, %v3909, 0.0
    %v3918 = vadd.f32 %v3916, %v3917
    %v3919 = vsel %vm3884, %v3910, 0.0
    %v3920 = vadd.f32 %v3918, %v3919
    %v3921 = vsel %vm3884, %v3911, 0.0
    %v3922 = vadd.f32 %v3920, %v3921
    %v3923 = vsel %vm3884, %v3912, 0.0
    %v3924 = vadd.f32 %v3922, %v3923
    %v3925 = vsel %vm3884, %v3913, 0.0
    %v3926 = vadd.f32 %v3924, %v3925
    %v3927 = vsel %vm3884, %v3914, 0.0
    %v3928 = vadd.f32 %v3926, %v3927
    %v3929 = vsel %vm3884, %v3915, 0.0
    %v3930 = vadd.f32 %v3928, %v3929
    %v3931 = vpack.c.bf16 %v3899, %v3899
    %v3932 = vld [vmem:[#allocation27] sm:$0xf]
    %v3933 = vld [vmem:[#allocation27 + $0x4] sm:$0xf]
    %v3934 = vpack.c.bf16 %v3930, %v3930
    %v3935 = vld [vmem:[#allocation29] sm:$0xf]
    %v3936 = vld [vmem:[#allocation29 + $0x4] sm:$0xf]
    %v3939 = vunpack.c.l.b16 %v3935
    %v3940 = vunpack.c.l.b16 %v3936
    %v3941 = vpack.c.b16 %v3940, %v3939
    %v3944 = vsel %vm582, %v3934, 0
    %3946 = vmatprep.subr.bf16.mxu0 0
    %3947 = vmatpush1.bf16.msra.mxu0 %v3941
    %3948 = vmatprep.subr.bf16.mxu0 0
    %3949 = vmatpush1.bf16.msra.mxu0 0
    %3950 = vmatprep.subr.bf16.mxu0 0
    %3951 = vmatpush1.bf16.msra.mxu0 0
    %3952 = vmatprep.subr.bf16.mxu0 0
    %3953 = vmatpush1.bf16.msra.mxu0 0
    %3954 = vmatprep.subr.bf16.mxu0 0
    %3955 = vmatpush1.bf16.msra.mxu0 0
    %3956 = vmatprep.subr.bf16.mxu0 0
    %3957 = vmatpush1.bf16.msra.mxu0 0
    %3958 = vmatprep.subr.bf16.mxu0 0
    %3959 = vmatpush1.bf16.msra.mxu0 0
    %3960 = vmatprep.subr.bf16.mxu0 0
    %3961 = vmatpush1.bf16.msra.mxu0 0
    %3962 = vmatprep.subr.bf16.mxu0 0
    %3963 = vmatpush1.bf16.msra.mxu0 0
    %3964 = vmatprep.subr.bf16.mxu0 0
    %3965 = vmatpush1.bf16.msra.mxu0 0
    %3966 = vmatprep.subr.bf16.mxu0 0
    %3967 = vmatpush1.bf16.msra.mxu0 0
    %3968 = vmatprep.subr.bf16.mxu0 0
    %3969 = vmatpush1.bf16.msra.mxu0 0
    %3970 = vmatprep.subr.bf16.mxu0 0
    %3971 = vmatpush1.bf16.msra.mxu0 0
    %3972 = vmatprep.subr.bf16.mxu0 0
    %3973 = vmatpush1.bf16.msra.mxu0 0
    %3974 = vmatprep.subr.bf16.mxu0 0
    %3975 = vmatpush1.bf16.msra.mxu0 0
    %3976 = vmatprep.subr.bf16.mxu0 0
    %3977 = vmatpush1.bf16.msra.mxu0 0
    %3978 = vmatprep.mubr.bf16.mxu0 0
    %3979 = vmatmul.mubr.bf16.gmra.mrb[0].mxu0 %v3944
    %v3980 = vpop.f32.mrb[0].mxu0
    %v3981 = vadd.f32 0.0, %v3980
    %v3982 = vpop.f32.mrb[0].mxu0
    %v3983 = vpop.f32.mrb[0].mxu0
    %v3984 = vpop.f32.mrb[0].mxu0
    %3985 = vdwg.mxu0
    %v3988 = vunpack.c.l.b16 %v3932
    %v3989 = vunpack.c.l.b16 %v3933
    %v3990 = vpack.c.b16 %v3989, %v3988
    %v3993 = vsel %vm582, %v3931, 0
    %3995 = vmatprep.subr.bf16.mxu0 0
    %3996 = vmatpush1.bf16.msra.mxu0 %v3990
    %3997 = vmatprep.subr.bf16.mxu0 0
    %3998 = vmatpush1.bf16.msra.mxu0 0
    %3999 = vmatprep.subr.bf16.mxu0 0
    %4000 = vmatpush1.bf16.msra.mxu0 0
    %4001 = vmatprep.subr.bf16.mxu0 0
    %4002 = vmatpush1.bf16.msra.mxu0 0
    %4003 = vmatprep.subr.bf16.mxu0 0
    %4004 = vmatpush1.bf16.msra.mxu0 0
    %4005 = vmatprep.subr.bf16.mxu0 0
    %4006 = vmatpush1.bf16.msra.mxu0 0
    %4007 = vmatprep.subr.bf16.mxu0 0
    %4008 = vmatpush1.bf16.msra.mxu0 0
    %4009 = vmatprep.subr.bf16.mxu0 0
    %4010 = vmatpush1.bf16.msra.mxu0 0
    %4011 = vmatprep.subr.bf16.mxu0 0
    %4012 = vmatpush1.bf16.msra.mxu0 0
    %4013 = vmatprep.subr.bf16.mxu0 0
    %4014 = vmatpush1.bf16.msra.mxu0 0
    %4015 = vmatprep.subr.bf16.mxu0 0
    %4016 = vmatpush1.bf16.msra.mxu0 0
    %4017 = vmatprep.subr.bf16.mxu0 0
    %4018 = vmatpush1.bf16.msra.mxu0 0
    %4019 = vmatprep.subr.bf16.mxu0 0
    %4020 = vmatpush1.bf16.msra.mxu0 0
    %4021 = vmatprep.subr.bf16.mxu0 0
    %4022 = vmatpush1.bf16.msra.mxu0 0
    %4023 = vmatprep.subr.bf16.mxu0 0
    %4024 = vmatpush1.bf16.msra.mxu0 0
    %4025 = vmatprep.subr.bf16.mxu0 0
    %4026 = vmatpush1.bf16.msra.mxu0 0
    %4027 = vmatprep.mubr.bf16.mxu0 0
    %4028 = vmatmul.mubr.bf16.gmra.mrb[0].mxu0 %v3993
    %v4029 = vpop.f32.mrb[0].mxu0
    %v4030 = vadd.f32 %v3981, %v4029
    %v4031 = vpop.f32.mrb[0].mxu0
    %v4032 = vpop.f32.mrb[0].mxu0
    %v4033 = vpop.f32.mrb[0].mxu0
    %4034 = vdwg.mxu0
    %v4035 = vld [vmem:[#allocation30] sm:$0x1]
    %v4037 = vlaneseq
    %v4038 = vshrl.u32 %v4037, 7
    %v4039 = vsub.s32 0, %v4038
    %v4040 = vrot.slane %v4035, %v4039
    %v4042 = vadd.f32 %v4030, %v4040
    %vm4043 = vcmask 25600
    %4044 = vst.msk [vmem:[#allocation32] sm:$0x3] %vm4043, %v4042
    // Predicated region
    $region130: #{tpu_custom_call.1} parent=1 // pred_check
      _
    $region131: #{tpu_custom_call.1} parent=1 // pred_check_branch
      %4046 = sbr.rel (0) target = $region133
    $region132: #{tpu_custom_call.1} parent=1 // pred_region
      %s4048 = ssub.s32 32, 32
      %4049 = vsyncadd [#allocation8], %s4048
      %s4051 = sshll.u32 [#allocation32], 4
      %s4052 = int_to_ptr.vmem [resolvable:$true] %s4051
      %4054 = dma.vmem_to_hbm [thread:$0]  %s4052, 32, %s16, [#allocation8]
    $region133: #{tpu_custom_call.1} parent=1 // pred_fallthru
      _
    // Predicated region
    $region134: #{tpu_custom_call.1} parent=1 // pred_check
      _
    $region135: #{tpu_custom_call.1} parent=1 // pred_check_branch
      %4056 = sbr.rel (0) target = $region137
    $region136: #{tpu_custom_call.1} parent=1 // pred_region
      %4057 = dma.done [#allocation8], 32
    $region137: #{tpu_custom_call.1} parent=1 // pred_fallthru
      _
    %4058 = vsyncpa [#allocation7], 1
    %4059 = vsyncpa [#allocation10], 1
    %4060 = vsyncpa [#allocation13], 1
    %4061 = vsyncpa [#allocation16], 1
    %4062 = vsyncpa [#allocation19], 1
    %4063 = vsyncpa [#allocation22], 1
    %4064 = vsyncpa [#allocation25], 1
    %4065 = vsyncpa [#allocation28], 1
    %4066 = vsyncpa [#allocation31], 1
    %4067 = vsyncpa [#allocation8], 1

</llo_original>
